<compile_context>
chip_gen: v7x
topology: tpu7x:2x2x1
jax: 0.10.0
libtpu: 0.0.40
codegen_flags: <defaults>
</compile_context>

<pallas_src>
import functools

import jax
import jax.numpy as jnp
from jax import lax
from jax.experimental import pallas as pl
from jax.experimental.pallas import tpu as pltpu


def _round_up(x, m):
    return (x + m - 1) // m * m


# ----------------------------------------------------------------------------
# Fused Pallas kernel: n_layer LSTM layers + classifier, single invocation
# ----------------------------------------------------------------------------
def _fused_lstm_kernel(n_layer, T, B, H, x_ref, *refs):
    """refs = [wih_0, whh_0, b_0, ..., wih_{L-1}, whh_{L-1}, b_{L-1},
               wcls, bcls, out_ref, gx_scr, seq_scr].
    B = padded batch block, H = padded hidden (multiple of 128)."""
    layer_refs = refs[:3 * n_layer]
    wcls_ref, bcls_ref, out_ref, gx_scr, seq_scr = refs[3 * n_layer:]

    h_last = None
    for l in range(n_layer):
        wih_ref, whh_ref, b_ref = layer_refs[3 * l: 3 * l + 3]
        is_last = (l == n_layer - 1)

        # ---- parallel part: input projection for ALL timesteps in ONE MXU matmul.
        # (T, B, K) -> (T*B, K) reshape is layout-preserving for f32 because B is a
        # multiple of 8 sublanes; operands are cast to bf16 only for the MXU,
        # accumulation stays f32.
        layer_in = x_ref[...] if l == 0 else seq_scr[...]              # (T, B, K) f32
        k_in = layer_in.shape[-1]
        proj = jnp.dot(layer_in.reshape(T * B, k_in).astype(jnp.bfloat16),
                       wih_ref[...],
                       preferred_element_type=jnp.float32)              # (T*B, 4H) f32
        gx_scr[...] = (proj + b_ref[...]).reshape(T, B, 4 * H)

        # ---- serial part: only h @ W_hh + elementwise gate math per step ----------
        def step(t, carry, whh_ref=whh_ref, write_seq=not is_last):
            h_prev, c_prev = carry
            gates = gx_scr[t] + jnp.dot(
                h_prev.astype(jnp.bfloat16), whh_ref[...],
                preferred_element_type=jnp.float32)                     # (B, 4H) f32
            # PyTorch gate order [i | f | g | o]; H is a multiple of 128 so every
            # slice below is lane-aligned (no masked/XLU shuffles).
            i_g = jax.nn.sigmoid(gates[:, 0 * H:1 * H])
            f_g = jax.nn.sigmoid(gates[:, 1 * H:2 * H])
            g_g = jnp.tanh(gates[:, 2 * H:3 * H])
            o_g = jax.nn.sigmoid(gates[:, 3 * H:4 * H])
            c_new = f_g * c_prev + i_g * g_g
            h_new = o_g * jnp.tanh(c_new)
            if write_seq:                      # becomes next layer's input sequence
                seq_scr[t] = h_new
            return (h_new, c_new)

        init = (jnp.zeros((B, H), jnp.float32), jnp.zeros((B, H), jnp.float32))
        h_last, _ = lax.fori_loop(0, T, step, init, unroll=min(T, 8))

    # ---- classifier on h at t = T-1 of the last layer, fused in (f32, tiny) -------
    out_ref[...] = (jnp.dot(h_last, wcls_ref[...],
                            preferred_element_type=jnp.float32) + bcls_ref[...])


# ----------------------------------------------------------------------------
# One-time parameter prep (hoisted out of the per-forward path)
# ----------------------------------------------------------------------------
def _pad_gate_dim(w, H, Hp):
    """Pad the trailing 4H gate axis to 4*Hp keeping the [i|f|g|o] blocks aligned."""
    lead = w.shape[:-1]
    w4 = w.reshape(lead + (4, H))
    w4 = jnp.pad(w4, [(0, 0)] * len(lead) + [(0, 0), (0, Hp - H)])
    return w4.reshape(lead + (4 * Hp,))


def prepare_params_for_pallas(params):
    """Transpose, zero-pad to lane/sublane-aligned shapes, and cast MXU operands
    to bf16. Called once per model, not per forward."""
    layers = params["layers"]
    H = layers[0][1].shape[1]                        # w_hh: (4H, H)
    Hp = _round_up(H, 128)
    prep_layers = []
    for (w_ih, w_hh, b_ih, b_hh) in layers:
        d_in = w_ih.shape[1]
        Kp = _round_up(d_in, 128)                    # == Hp for layers >= 1
        wih_t = _pad_gate_dim(w_ih.T, H, Hp)         # (d_in, 4Hp)
        wih_t = jnp.pad(wih_t, ((0, Kp - d_in), (0, 0))).astype(jnp.bfloat16)
        whh_t = _pad_gate_dim(w_hh.T, H, Hp)         # (H, 4Hp)
        whh_t = jnp.pad(whh_t, ((0, Hp - H), (0, 0))).astype(jnp.bfloat16)
        bias = _pad_gate_dim((b_ih + b_hh)[None, :], H, Hp)   # (1, 4Hp) f32
        prep_layers.append((wih_t, whh_t, bias))

    cls_w, cls_b = params["cls_w"], params["cls_b"]
    C = cls_w.shape[0]
    Cp = _round_up(C, 128)
    cls_w_t = jnp.pad(cls_w.T, ((0, Hp - H), (0, Cp - C)))    # (Hp, Cp) f32
    cls_b_p = jnp.pad(cls_b, ((0, Cp - C),))[None, :]         # (1, Cp)  f32
    return {"layers": prep_layers, "cls_w_t": cls_w_t, "cls_b": cls_b_p}


# ----------------------------------------------------------------------------
# Wrapper
# ----------------------------------------------------------------------------
def lstm_forward_pallas(x, prep):
    """x: (B, T, D_in) batch_first f32. prep: output of prepare_params_for_pallas.
    Returns padded logits (Bp, Cp); slice outside."""
    B, T, D_in = x.shape
    layers = prep["layers"]
    n_layer = len(layers)
    wcls, bcls = prep["cls_w_t"], prep["cls_b"]
    Kp = layers[0][0].shape[0]
    Hp = layers[0][1].shape[0]
    Cp = wcls.shape[1]

    # Batch padding / blocking: blocks of >=8 sublanes; multiple blocks -> grid axis
    # marked "parallel" (spreads across the 2 TensorCores on v7x for big batches).
    Bp8 = _round_up(B, 8)
    B_BLK = Bp8 if Bp8 <= 128 else 128
    Bp = _round_up(Bp8, B_BLK)
    n_b_blocks = Bp // B_BLK

    # Time-major, zero-padded. Kept f32 so the in-kernel (T,B,K)->(T*B,K) reshape is
    # layout-preserving; cast to bf16 happens inside the kernel right at the matmul.
    x_tm = jnp.transpose(x, (1, 0, 2))                               # (T, B, D_in)
    x_pad = jnp.zeros((T, Bp, Kp), jnp.float32).at[:, :B, :D_in].set(x_tm)

    inputs = [x_pad]
    in_specs = [pl.BlockSpec((T, B_BLK, Kp), lambda b: (0, b, 0))]
    for (wih_t, whh_t, bias) in layers:
        inputs += [wih_t, whh_t, bias]
        in_specs += [pl.BlockSpec(wih_t.shape, lambda b: (0, 0)),
                     pl.BlockSpec(whh_t.shape, lambda b: (0, 0)),
                     pl.BlockSpec(bias.shape, lambda b: (0, 0))]
    inputs += [wcls, bcls]
    in_specs += [pl.BlockSpec(wcls.shape, lambda b: (0, 0)),
                 pl.BlockSpec(bcls.shape, lambda b: (0, 0))]

    # Explicit scoped-VMEM budget: double-buffered I/O blocks + resident scratch.
    weight_bytes = sum(a.size * a.dtype.itemsize for a in inputs[1:])
    x_block_bytes = T * B_BLK * Kp * 4
    out_block_bytes = B_BLK * Cp * 4
    scratch_bytes = T * B_BLK * (4 * Hp) * 4 + T * B_BLK * Hp * 4
    vmem_need = 2 * (x_block_bytes + weight_bytes + out_block_bytes) + scratch_bytes
    vmem_limit = int(min(max(vmem_need + (2 << 20), 16 << 20), 112 << 20))

    kernel = functools.partial(_fused_lstm_kernel, n_layer, T, B_BLK, Hp)
    return pl.pallas_call(
        kernel,
        out_shape=jax.ShapeDtypeStruct((Bp, Cp), jnp.float32),
        grid=(n_b_blocks,),
        in_specs=in_specs,
        out_specs=pl.BlockSpec((B_BLK, Cp), lambda b: (b, 0)),
        scratch_shapes=[
            pltpu.VMEM((T, B_BLK, 4 * Hp), jnp.float32),   # precomputed input gates
            pltpu.VMEM((T, B_BLK, Hp), jnp.float32),       # inter-layer hidden seq
        ],
        compiler_params=pltpu.CompilerParams(
            dimension_semantics=("parallel",),
            vmem_limit_bytes=vmem_limit),
    )(*inputs)


@functools.partial(jax.jit, static_argnames=("n_class",))
def lstm_model_forward(x, prep, *, n_class):
    """Equivalent to: out, _ = lstm(x); out = out[:, -1, :]; return classifier(out)."""
    out_pad = lstm_forward_pallas(x, prep)
    return out_pad[: x.shape[0], :n_class]


# ----------------------------------------------------------------------------
# Parameter init (PyTorch-shaped) and pure-JAX reference
# ----------------------------------------------------------------------------
def init_params(key, in_dim, hidden_dim, n_layer, n_class):
    k = 1.0 / jnp.sqrt(jnp.float32(hidden_dim))
    params = {"layers": []}
    for l in range(n_layer):
        d_in = in_dim if l == 0 else hidden_dim
        key, k1, k2, k3, k4 = jax.random.split(key, 5)
        w_ih = jax.random.uniform(k1, (4 * hidden_dim, d_in), jnp.float32, -k, k)
        w_hh = jax.random.uniform(k2, (4 * hidden_dim, hidden_dim), jnp.float32, -k, k)
        b_ih = jax.random.uniform(k3, (4 * hidden_dim,), jnp.float32, -k, k)
        b_hh = jax.random.uniform(k4, (4 * hidden_dim,), jnp.float32, -k, k)
        params["layers"].append((w_ih, w_hh, b_ih, b_hh))
    key, k1, k2 = jax.random.split(key, 3)
    params["cls_w"] = jax.random.uniform(k1, (n_class, hidden_dim), jnp.float32, -k, k)
    params["cls_b"] = jax.random.uniform(k2, (n_class,), jnp.float32, -k, k)
    return params


def lstm_model_ref(x, params):
    B = x.shape[0]
    xs = jnp.transpose(x, (1, 0, 2))                     # (T, B, D)
    for (w_ih, w_hh, b_ih, b_hh) in params["layers"]:
        H = w_hh.shape[1]

        def step(carry, x_t):
            h, c = carry
            gates = x_t @ w_ih.T + h @ w_hh.T + b_ih + b_hh
            i = jax.nn.sigmoid(gates[:, 0 * H:1 * H])
            f = jax.nn.sigmoid(gates[:, 1 * H:2 * H])
            g = jnp.tanh(gates[:, 2 * H:3 * H])
            o = jax.nn.sigmoid(gates[:, 3 * H:4 * H])
            c_new = f * c + i * g
            h_new = o * jnp.tanh(c_new)
            return (h_new, c_new), h_new

        init = (jnp.zeros((B, H), jnp.float32), jnp.zeros((B, H), jnp.float32))
        _, hs = lax.scan(step, init, xs)
        xs = hs
    return xs[-1] @ params["cls_w"].T + params["cls_b"]


# ----------------------------------------------------------------------------
if __name__ == "__main__":
    B, T, IN_DIM, HIDDEN, N_LAYER, N_CLASS = 2, 8, 16, 32, 2, 10

    key = jax.random.PRNGKey(0)
    key, kx, kp = jax.random.split(key, 3)
    x = jax.random.normal(kx, (B, T, IN_DIM), jnp.float32)
    params = init_params(kp, IN_DIM, HIDDEN, N_LAYER, N_CLASS)

    prep = prepare_params_for_pallas(params)          # one-time weight prep
    out = lstm_model_forward(x, prep, n_class=N_CLASS)
    out = jax.block_until_ready(out)

    ref = lstm_model_ref(x, params)
    assert out.shape == (B, N_CLASS), out.shape
    # bf16 MXU operands (f32 accumulation/state) -> deliberately relaxed tolerance.
    err = jnp.max(jnp.abs(out - ref))
    assert jnp.allclose(out, ref, atol=5e-2, rtol=5e-2), f"max abs err: {err}"

    print("KERNEL_OK")
</pallas_src>

<mosaic_0001>
module attributes {stable_mosaic.version = 11 : i64} {
  func.func @_fused_lstm_kernel(%arg0: i32, %arg1: memref<8x8x128xf32, #tpu.memory_space<vmem>>, %arg2: memref<128x512xbf16, #tpu.memory_space<vmem>>, %arg3: memref<128x512xbf16, #tpu.memory_space<vmem>>, %arg4: memref<1x512xf32, #tpu.memory_space<vmem>>, %arg5: memref<128x512xbf16, #tpu.memory_space<vmem>>, %arg6: memref<128x512xbf16, #tpu.memory_space<vmem>>, %arg7: memref<1x512xf32, #tpu.memory_space<vmem>>, %arg8: memref<128x128xf32, #tpu.memory_space<vmem>>, %arg9: memref<1x128xf32, #tpu.memory_space<vmem>>, %arg10: memref<8x128xf32, #tpu.memory_space<vmem>>, %arg11: memref<8x8x512xf32, #tpu.memory_space<vmem>>, %arg12: memref<8x8x128xf32, #tpu.memory_space<vmem>>) attributes {dimension_semantics = [#tpu.dimension_semantics<parallel>], iteration_bounds = array<i64: 1>, scalar_prefetch = 0 : i64, scratch_operands = 2 : i64, tpu.core_type = #tpu.core_type<tc>, window_params = [{transform_indices = @transform_0, window_bounds = array<i64: 8, 8, 128>}, {pipeline_mode = #tpu.pipeline_mode<synchronous>, transform_indices = @transform_1, window_bounds = array<i64: 128, 512>}, {pipeline_mode = #tpu.pipeline_mode<synchronous>, transform_indices = @transform_2, window_bounds = array<i64: 128, 512>}, {pipeline_mode = #tpu.pipeline_mode<synchronous>, transform_indices = @transform_3, window_bounds = array<i64: 1, 512>}, {pipeline_mode = #tpu.pipeline_mode<synchronous>, transform_indices = @transform_4, window_bounds = array<i64: 128, 512>}, {pipeline_mode = #tpu.pipeline_mode<synchronous>, transform_indices = @transform_5, window_bounds = array<i64: 128, 512>}, {pipeline_mode = #tpu.pipeline_mode<synchronous>, transform_indices = @transform_6, window_bounds = array<i64: 1, 512>}, {pipeline_mode = #tpu.pipeline_mode<synchronous>, transform_indices = @transform_7, window_bounds = array<i64: 128, 128>}, {pipeline_mode = #tpu.pipeline_mode<synchronous>, transform_indices = @transform_8, window_bounds = array<i64: 1, 128>}, {transform_indices = @transform_9, window_bounds = array<i64: 8, 128>}]} {
    %c0 = arith.constant 0 : index
    %c0_0 = arith.constant 0 : index
    %c0_1 = arith.constant 0 : index
    %0 = vector.load %arg1[%c0, %c0_0, %c0_1] : memref<8x8x128xf32, #tpu.memory_space<vmem>>, vector<8x8x128xf32>
    %1 = vector.shape_cast %0 : vector<8x8x128xf32> to vector<64x128xf32>
    %2 = arith.truncf %1 : vector<64x128xf32> to vector<64x128xbf16>
    %c0_2 = arith.constant 0 : index
    %c0_3 = arith.constant 0 : index
    %3 = vector.load %arg2[%c0_2, %c0_3] : memref<128x512xbf16, #tpu.memory_space<vmem>>, vector<128x512xbf16>
    %cst = arith.constant dense<0.000000e+00> : vector<64x512xf32>
    %4 = tpu.matmul %2, %3, %cst {dimension_numbers = #tpu.dot_dimension_numbers<[1], [0], [0], [1], [0, 0, 1, 1], [], []>} : vector<64x128xbf16>, vector<128x512xbf16>, vector<64x512xf32> -> vector<64x512xf32>
    %c0_4 = arith.constant 0 : index
    %c0_5 = arith.constant 0 : index
    %5 = vector.load %arg4[%c0_4, %c0_5] : memref<1x512xf32, #tpu.memory_space<vmem>>, vector<1x512xf32>
    %6 = vector.broadcast %5 : vector<1x512xf32> to vector<64x512xf32>
    %7 = arith.addf %4, %6 : vector<64x512xf32>
    %8 = vector.shape_cast %7 : vector<64x512xf32> to vector<8x8x512xf32>
    %c0_6 = arith.constant 0 : index
    %c0_7 = arith.constant 0 : index
    %c0_8 = arith.constant 0 : index
    %9 = vector.load %arg11[%c0_6, %c0_7, %c0_8] : memref<8x8x512xf32, #tpu.memory_space<vmem>>, vector<8x8x512xf32>
    tpu.vector_store %arg11[%c0_6, %c0_7, %c0_8], %8 {strides = array<i32>} : memref<8x8x512xf32, #tpu.memory_space<vmem>>, vector<8x8x512xf32>,
    %cst_9 = arith.constant 0.000000e+00 : f32
    %10 = vector.broadcast %cst_9 : f32 to vector<8x128xf32>
    %cst_10 = arith.constant 0.000000e+00 : f32
    %11 = vector.broadcast %cst_10 : f32 to vector<8x128xf32>
    %c0_i32 = arith.constant 0 : i32
    %12 = arith.index_cast %c0_i32 : i32 to index
    %c0_11 = arith.constant 0 : index
    %c0_12 = arith.constant 0 : index
    %13 = vector.load %arg11[%12, %c0_11, %c0_12] : memref<8x8x512xf32, #tpu.memory_space<vmem>>, vector<1x8x512xf32>
    %14 = vector.shape_cast %13 : vector<1x8x512xf32> to vector<8x512xf32>
    %15 = arith.truncf %10 : vector<8x128xf32> to vector<8x128xbf16>
    %c0_13 = arith.constant 0 : index
    %c0_14 = arith.constant 0 : index
    %16 = vector.load %arg3[%c0_13, %c0_14] : memref<128x512xbf16, #tpu.memory_space<vmem>>, vector<128x512xbf16>
    %cst_15 = arith.constant dense<0.000000e+00> : vector<8x512xf32>
    %17 = tpu.matmul %15, %16, %cst_15 {dimension_numbers = #tpu.dot_dimension_numbers<[1], [0], [0], [1], [0, 0, 1, 1], [], []>} : vector<8x128xbf16>, vector<128x512xbf16>, vector<8x512xf32> -> vector<8x512xf32>
    %18 = arith.addf %14, %17 : vector<8x512xf32>
    %19 = vector.extract_strided_slice %18 {offsets = [0, 0], sizes = [8, 128], strides = [1, 1]} : vector<8x512xf32> to vector<8x128xf32>
    %20 = arith.negf %19 : vector<8x128xf32>
    %21 = math.exp %20 : vector<8x128xf32>
    %cst_16 = arith.constant 1.000000e+00 : f32
    %22 = vector.broadcast %cst_16 : f32 to vector<8x128xf32>
    %23 = arith.addf %22, %21 : vector<8x128xf32>
    %24 = arith.divf %22, %23 : vector<8x128xf32>
    %25 = vector.extract_strided_slice %18 {offsets = [0, 128], sizes = [8, 128], strides = [1, 1]} : vector<8x512xf32> to vector<8x128xf32>
    %26 = arith.negf %25 : vector<8x128xf32>
    %27 = math.exp %26 : vector<8x128xf32>
    %cst_17 = arith.constant 1.000000e+00 : f32
    %28 = vector.broadcast %cst_17 : f32 to vector<8x128xf32>
    %29 = arith.addf %28, %27 : vector<8x128xf32>
    %30 = arith.divf %28, %29 : vector<8x128xf32>
    %31 = vector.extract_strided_slice %18 {offsets = [0, 256], sizes = [8, 128], strides = [1, 1]} : vector<8x512xf32> to vector<8x128xf32>
    %32 = math.tanh %31 : vector<8x128xf32>
    %33 = vector.extract_strided_slice %18 {offsets = [0, 384], sizes = [8, 128], strides = [1, 1]} : vector<8x512xf32> to vector<8x128xf32>
    %34 = arith.negf %33 : vector<8x128xf32>
    %35 = math.exp %34 : vector<8x128xf32>
    %cst_18 = arith.constant 1.000000e+00 : f32
    %36 = vector.broadcast %cst_18 : f32 to vector<8x128xf32>
    %37 = arith.addf %36, %35 : vector<8x128xf32>
    %38 = arith.divf %36, %37 : vector<8x128xf32>
    %39 = arith.mulf %30, %11 : vector<8x128xf32>
    %40 = arith.mulf %24, %32 : vector<8x128xf32>
    %41 = arith.addf %39, %40 : vector<8x128xf32>
    %42 = math.tanh %41 : vector<8x128xf32>
    %43 = arith.mulf %38, %42 : vector<8x128xf32>
    %44 = arith.index_cast %c0_i32 : i32 to index
    %c0_19 = arith.constant 0 : index
    %c0_20 = arith.constant 0 : index
    %45 = vector.load %arg12[%44, %c0_19, %c0_20] : memref<8x8x128xf32, #tpu.memory_space<vmem>>, vector<1x8x128xf32>
    %46 = vector.shape_cast %45 : vector<1x8x128xf32> to vector<8x128xf32>
    %47 = vector.shape_cast %43 : vector<8x128xf32> to vector<1x8x128xf32>
    tpu.vector_store %arg12[%44, %c0_19, %c0_20], %47 {strides = array<i32>} : memref<8x8x128xf32, #tpu.memory_space<vmem>>, vector<1x8x128xf32>,
    %c1_i32 = arith.constant 1 : i32
    %48 = arith.index_cast %c1_i32 : i32 to index
    %c0_21 = arith.constant 0 : index
    %c0_22 = arith.constant 0 : index
    %49 = vector.load %arg11[%48, %c0_21, %c0_22] : memref<8x8x512xf32, #tpu.memory_space<vmem>>, vector<1x8x512xf32>
    %50 = vector.shape_cast %49 : vector<1x8x512xf32> to vector<8x512xf32>
    %51 = arith.truncf %43 : vector<8x128xf32> to vector<8x128xbf16>
    %c0_23 = arith.constant 0 : index
    %c0_24 = arith.constant 0 : index
    %52 = vector.load %arg3[%c0_23, %c0_24] : memref<128x512xbf16, #tpu.memory_space<vmem>>, vector<128x512xbf16>
    %cst_25 = arith.constant dense<0.000000e+00> : vector<8x512xf32>
    %53 = tpu.matmul %51, %52, %cst_25 {dimension_numbers = #tpu.dot_dimension_numbers<[1], [0], [0], [1], [0, 0, 1, 1], [], []>} : vector<8x128xbf16>, vector<128x512xbf16>, vector<8x512xf32> -> vector<8x512xf32>
    %54 = arith.addf %50, %53 : vector<8x512xf32>
    %55 = vector.extract_strided_slice %54 {offsets = [0, 0], sizes = [8, 128], strides = [1, 1]} : vector<8x512xf32> to vector<8x128xf32>
    %56 = arith.negf %55 : vector<8x128xf32>
    %57 = math.exp %56 : vector<8x128xf32>
    %cst_26 = arith.constant 1.000000e+00 : f32
    %58 = vector.broadcast %cst_26 : f32 to vector<8x128xf32>
    %59 = arith.addf %58, %57 : vector<8x128xf32>
    %60 = arith.divf %58, %59 : vector<8x128xf32>
    %61 = vector.extract_strided_slice %54 {offsets = [0, 128], sizes = [8, 128], strides = [1, 1]} : vector<8x512xf32> to vector<8x128xf32>
    %62 = arith.negf %61 : vector<8x128xf32>
    %63 = math.exp %62 : vector<8x128xf32>
    %cst_27 = arith.constant 1.000000e+00 : f32
    %64 = vector.broadcast %cst_27 : f32 to vector<8x128xf32>
    %65 = arith.addf %64, %63 : vector<8x128xf32>
    %66 = arith.divf %64, %65 : vector<8x128xf32>
    %67 = vector.extract_strided_slice %54 {offsets = [0, 256], sizes = [8, 128], strides = [1, 1]} : vector<8x512xf32> to vector<8x128xf32>
    %68 = math.tanh %67 : vector<8x128xf32>
    %69 = vector.extract_strided_slice %54 {offsets = [0, 384], sizes = [8, 128], strides = [1, 1]} : vector<8x512xf32> to vector<8x128xf32>
    %70 = arith.negf %69 : vector<8x128xf32>
    %71 = math.exp %70 : vector<8x128xf32>
    %cst_28 = arith.constant 1.000000e+00 : f32
    %72 = vector.broadcast %cst_28 : f32 to vector<8x128xf32>
    %73 = arith.addf %72, %71 : vector<8x128xf32>
    %74 = arith.divf %72, %73 : vector<8x128xf32>
    %75 = arith.mulf %66, %41 : vector<8x128xf32>
    %76 = arith.mulf %60, %68 : vector<8x128xf32>
    %77 = arith.addf %75, %76 : vector<8x128xf32>
    %78 = math.tanh %77 : vector<8x128xf32>
    %79 = arith.mulf %74, %78 : vector<8x128xf32>
    %80 = arith.index_cast %c1_i32 : i32 to index
    %c0_29 = arith.constant 0 : index
    %c0_30 = arith.constant 0 : index
    %81 = vector.load %arg12[%80, %c0_29, %c0_30] : memref<8x8x128xf32, #tpu.memory_space<vmem>>, vector<1x8x128xf32>
    %82 = vector.shape_cast %81 : vector<1x8x128xf32> to vector<8x128xf32>
    %83 = vector.shape_cast %79 : vector<8x128xf32> to vector<1x8x128xf32>
    tpu.vector_store %arg12[%80, %c0_29, %c0_30], %83 {strides = array<i32>} : memref<8x8x128xf32, #tpu.memory_space<vmem>>, vector<1x8x128xf32>,
    %c2_i32 = arith.constant 2 : i32
    %84 = arith.index_cast %c2_i32 : i32 to index
    %c0_31 = arith.constant 0 : index
    %c0_32 = arith.constant 0 : index
    %85 = vector.load %arg11[%84, %c0_31, %c0_32] : memref<8x8x512xf32, #tpu.memory_space<vmem>>, vector<1x8x512xf32>
    %86 = vector.shape_cast %85 : vector<1x8x512xf32> to vector<8x512xf32>
    %87 = arith.truncf %79 : vector<8x128xf32> to vector<8x128xbf16>
    %c0_33 = arith.constant 0 : index
    %c0_34 = arith.constant 0 : index
    %88 = vector.load %arg3[%c0_33, %c0_34] : memref<128x512xbf16, #tpu.memory_space<vmem>>, vector<128x512xbf16>
    %cst_35 = arith.constant dense<0.000000e+00> : vector<8x512xf32>
    %89 = tpu.matmul %87, %88, %cst_35 {dimension_numbers = #tpu.dot_dimension_numbers<[1], [0], [0], [1], [0, 0, 1, 1], [], []>} : vector<8x128xbf16>, vector<128x512xbf16>, vector<8x512xf32> -> vector<8x512xf32>
    %90 = arith.addf %86, %89 : vector<8x512xf32>
    %91 = vector.extract_strided_slice %90 {offsets = [0, 0], sizes = [8, 128], strides = [1, 1]} : vector<8x512xf32> to vector<8x128xf32>
    %92 = arith.negf %91 : vector<8x128xf32>
    %93 = math.exp %92 : vector<8x128xf32>
    %cst_36 = arith.constant 1.000000e+00 : f32
    %94 = vector.broadcast %cst_36 : f32 to vector<8x128xf32>
    %95 = arith.addf %94, %93 : vector<8x128xf32>
    %96 = arith.divf %94, %95 : vector<8x128xf32>
    %97 = vector.extract_strided_slice %90 {offsets = [0, 128], sizes = [8, 128], strides = [1, 1]} : vector<8x512xf32> to vector<8x128xf32>
    %98 = arith.negf %97 : vector<8x128xf32>
    %99 = math.exp %98 : vector<8x128xf32>
    %cst_37 = arith.constant 1.000000e+00 : f32
    %100 = vector.broadcast %cst_37 : f32 to vector<8x128xf32>
    %101 = arith.addf %100, %99 : vector<8x128xf32>
    %102 = arith.divf %100, %101 : vector<8x128xf32>
    %103 = vector.extract_strided_slice %90 {offsets = [0, 256], sizes = [8, 128], strides = [1, 1]} : vector<8x512xf32> to vector<8x128xf32>
    %104 = math.tanh %103 : vector<8x128xf32>
    %105 = vector.extract_strided_slice %90 {offsets = [0, 384], sizes = [8, 128], strides = [1, 1]} : vector<8x512xf32> to vector<8x128xf32>
    %106 = arith.negf %105 : vector<8x128xf32>
    %107 = math.exp %106 : vector<8x128xf32>
    %cst_38 = arith.constant 1.000000e+00 : f32
    %108 = vector.broadcast %cst_38 : f32 to vector<8x128xf32>
    %109 = arith.addf %108, %107 : vector<8x128xf32>
    %110 = arith.divf %108, %109 : vector<8x128xf32>
    %111 = arith.mulf %102, %77 : vector<8x128xf32>
    %112 = arith.mulf %96, %104 : vector<8x128xf32>
    %113 = arith.addf %111, %112 : vector<8x128xf32>
    %114 = math.tanh %113 : vector<8x128xf32>
    %115 = arith.mulf %110, %114 : vector<8x128xf32>
    %116 = arith.index_cast %c2_i32 : i32 to index
    %c0_39 = arith.constant 0 : index
    %c0_40 = arith.constant 0 : index
    %117 = vector.load %arg12[%116, %c0_39, %c0_40] : memref<8x8x128xf32, #tpu.memory_space<vmem>>, vector<1x8x128xf32>
    %118 = vector.shape_cast %117 : vector<1x8x128xf32> to vector<8x128xf32>
    %119 = vector.shape_cast %115 : vector<8x128xf32> to vector<1x8x128xf32>
    tpu.vector_store %arg12[%116, %c0_39, %c0_40], %119 {strides = array<i32>} : memref<8x8x128xf32, #tpu.memory_space<vmem>>, vector<1x8x128xf32>,
    %c3_i32 = arith.constant 3 : i32
    %120 = arith.index_cast %c3_i32 : i32 to index
    %c0_41 = arith.constant 0 : index
    %c0_42 = arith.constant 0 : index
    %121 = vector.load %arg11[%120, %c0_41, %c0_42] : memref<8x8x512xf32, #tpu.memory_space<vmem>>, vector<1x8x512xf32>
    %122 = vector.shape_cast %121 : vector<1x8x512xf32> to vector<8x512xf32>
    %123 = arith.truncf %115 : vector<8x128xf32> to vector<8x128xbf16>
    %c0_43 = arith.constant 0 : index
    %c0_44 = arith.constant 0 : index
    %124 = vector.load %arg3[%c0_43, %c0_44] : memref<128x512xbf16, #tpu.memory_space<vmem>>, vector<128x512xbf16>
    %cst_45 = arith.constant dense<0.000000e+00> : vector<8x512xf32>
    %125 = tpu.matmul %123, %124, %cst_45 {dimension_numbers = #tpu.dot_dimension_numbers<[1], [0], [0], [1], [0, 0, 1, 1], [], []>} : vector<8x128xbf16>, vector<128x512xbf16>, vector<8x512xf32> -> vector<8x512xf32>
    %126 = arith.addf %122, %125 : vector<8x512xf32>
    %127 = vector.extract_strided_slice %126 {offsets = [0, 0], sizes = [8, 128], strides = [1, 1]} : vector<8x512xf32> to vector<8x128xf32>
    %128 = arith.negf %127 : vector<8x128xf32>
    %129 = math.exp %128 : vector<8x128xf32>
    %cst_46 = arith.constant 1.000000e+00 : f32
    %130 = vector.broadcast %cst_46 : f32 to vector<8x128xf32>
    %131 = arith.addf %130, %129 : vector<8x128xf32>
    %132 = arith.divf %130, %131 : vector<8x128xf32>
    %133 = vector.extract_strided_slice %126 {offsets = [0, 128], sizes = [8, 128], strides = [1, 1]} : vector<8x512xf32> to vector<8x128xf32>
    %134 = arith.negf %133 : vector<8x128xf32>
    %135 = math.exp %134 : vector<8x128xf32>
    %cst_47 = arith.constant 1.000000e+00 : f32
    %136 = vector.broadcast %cst_47 : f32 to vector<8x128xf32>
    %137 = arith.addf %136, %135 : vector<8x128xf32>
    %138 = arith.divf %136, %137 : vector<8x128xf32>
    %139 = vector.extract_strided_slice %126 {offsets = [0, 256], sizes = [8, 128], strides = [1, 1]} : vector<8x512xf32> to vector<8x128xf32>
    %140 = math.tanh %139 : vector<8x128xf32>
    %141 = vector.extract_strided_slice %126 {offsets = [0, 384], sizes = [8, 128], strides = [1, 1]} : vector<8x512xf32> to vector<8x128xf32>
    %142 = arith.negf %141 : vector<8x128xf32>
    %143 = math.exp %142 : vector<8x128xf32>
    %cst_48 = arith.constant 1.000000e+00 : f32
    %144 = vector.broadcast %cst_48 : f32 to vector<8x128xf32>
    %145 = arith.addf %144, %143 : vector<8x128xf32>
    %146 = arith.divf %144, %145 : vector<8x128xf32>
    %147 = arith.mulf %138, %113 : vector<8x128xf32>
    %148 = arith.mulf %132, %140 : vector<8x128xf32>
    %149 = arith.addf %147, %148 : vector<8x128xf32>
    %150 = math.tanh %149 : vector<8x128xf32>
    %151 = arith.mulf %146, %150 : vector<8x128xf32>
    %152 = arith.index_cast %c3_i32 : i32 to index
    %c0_49 = arith.constant 0 : index
    %c0_50 = arith.constant 0 : index
    %153 = vector.load %arg12[%152, %c0_49, %c0_50] : memref<8x8x128xf32, #tpu.memory_space<vmem>>, vector<1x8x128xf32>
    %154 = vector.shape_cast %153 : vector<1x8x128xf32> to vector<8x128xf32>
    %155 = vector.shape_cast %151 : vector<8x128xf32> to vector<1x8x128xf32>
    tpu.vector_store %arg12[%152, %c0_49, %c0_50], %155 {strides = array<i32>} : memref<8x8x128xf32, #tpu.memory_space<vmem>>, vector<1x8x128xf32>,
    %c4_i32 = arith.constant 4 : i32
    %156 = arith.index_cast %c4_i32 : i32 to index
    %c0_51 = arith.constant 0 : index
    %c0_52 = arith.constant 0 : index
    %157 = vector.load %arg11[%156, %c0_51, %c0_52] : memref<8x8x512xf32, #tpu.memory_space<vmem>>, vector<1x8x512xf32>
    %158 = vector.shape_cast %157 : vector<1x8x512xf32> to vector<8x512xf32>
    %159 = arith.truncf %151 : vector<8x128xf32> to vector<8x128xbf16>
    %c0_53 = arith.constant 0 : index
    %c0_54 = arith.constant 0 : index
    %160 = vector.load %arg3[%c0_53, %c0_54] : memref<128x512xbf16, #tpu.memory_space<vmem>>, vector<128x512xbf16>
    %cst_55 = arith.constant dense<0.000000e+00> : vector<8x512xf32>
    %161 = tpu.matmul %159, %160, %cst_55 {dimension_numbers = #tpu.dot_dimension_numbers<[1], [0], [0], [1], [0, 0, 1, 1], [], []>} : vector<8x128xbf16>, vector<128x512xbf16>, vector<8x512xf32> -> vector<8x512xf32>
    %162 = arith.addf %158, %161 : vector<8x512xf32>
    %163 = vector.extract_strided_slice %162 {offsets = [0, 0], sizes = [8, 128], strides = [1, 1]} : vector<8x512xf32> to vector<8x128xf32>
    %164 = arith.negf %163 : vector<8x128xf32>
    %165 = math.exp %164 : vector<8x128xf32>
    %cst_56 = arith.constant 1.000000e+00 : f32
    %166 = vector.broadcast %cst_56 : f32 to vector<8x128xf32>
    %167 = arith.addf %166, %165 : vector<8x128xf32>
    %168 = arith.divf %166, %167 : vector<8x128xf32>
    %169 = vector.extract_strided_slice %162 {offsets = [0, 128], sizes = [8, 128], strides = [1, 1]} : vector<8x512xf32> to vector<8x128xf32>
    %170 = arith.negf %169 : vector<8x128xf32>
    %171 = math.exp %170 : vector<8x128xf32>
    %cst_57 = arith.constant 1.000000e+00 : f32
    %172 = vector.broadcast %cst_57 : f32 to vector<8x128xf32>
    %173 = arith.addf %172, %171 : vector<8x128xf32>
    %174 = arith.divf %172, %173 : vector<8x128xf32>
    %175 = vector.extract_strided_slice %162 {offsets = [0, 256], sizes = [8, 128], strides = [1, 1]} : vector<8x512xf32> to vector<8x128xf32>
    %176 = math.tanh %175 : vector<8x128xf32>
    %177 = vector.extract_strided_slice %162 {offsets = [0, 384], sizes = [8, 128], strides = [1, 1]} : vector<8x512xf32> to vector<8x128xf32>
    %178 = arith.negf %177 : vector<8x128xf32>
    %179 = math.exp %178 : vector<8x128xf32>
    %cst_58 = arith.constant 1.000000e+00 : f32
    %180 = vector.broadcast %cst_58 : f32 to vector<8x128xf32>
    %181 = arith.addf %180, %179 : vector<8x128xf32>
    %182 = arith.divf %180, %181 : vector<8x128xf32>
    %183 = arith.mulf %174, %149 : vector<8x128xf32>
    %184 = arith.mulf %168, %176 : vector<8x128xf32>
    %185 = arith.addf %183, %184 : vector<8x128xf32>
    %186 = math.tanh %185 : vector<8x128xf32>
    %187 = arith.mulf %182, %186 : vector<8x128xf32>
    %188 = arith.index_cast %c4_i32 : i32 to index
    %c0_59 = arith.constant 0 : index
    %c0_60 = arith.constant 0 : index
    %189 = vector.load %arg12[%188, %c0_59, %c0_60] : memref<8x8x128xf32, #tpu.memory_space<vmem>>, vector<1x8x128xf32>
    %190 = vector.shape_cast %189 : vector<1x8x128xf32> to vector<8x128xf32>
    %191 = vector.shape_cast %187 : vector<8x128xf32> to vector<1x8x128xf32>
    tpu.vector_store %arg12[%188, %c0_59, %c0_60], %191 {strides = array<i32>} : memref<8x8x128xf32, #tpu.memory_space<vmem>>, vector<1x8x128xf32>,
    %c5_i32 = arith.constant 5 : i32
    %192 = arith.index_cast %c5_i32 : i32 to index
    %c0_61 = arith.constant 0 : index
    %c0_62 = arith.constant 0 : index
    %193 = vector.load %arg11[%192, %c0_61, %c0_62] : memref<8x8x512xf32, #tpu.memory_space<vmem>>, vector<1x8x512xf32>
    %194 = vector.shape_cast %193 : vector<1x8x512xf32> to vector<8x512xf32>
    %195 = arith.truncf %187 : vector<8x128xf32> to vector<8x128xbf16>
    %c0_63 = arith.constant 0 : index
    %c0_64 = arith.constant 0 : index
    %196 = vector.load %arg3[%c0_63, %c0_64] : memref<128x512xbf16, #tpu.memory_space<vmem>>, vector<128x512xbf16>
    %cst_65 = arith.constant dense<0.000000e+00> : vector<8x512xf32>
    %197 = tpu.matmul %195, %196, %cst_65 {dimension_numbers = #tpu.dot_dimension_numbers<[1], [0], [0], [1], [0, 0, 1, 1], [], []>} : vector<8x128xbf16>, vector<128x512xbf16>, vector<8x512xf32> -> vector<8x512xf32>
    %198 = arith.addf %194, %197 : vector<8x512xf32>
    %199 = vector.extract_strided_slice %198 {offsets = [0, 0], sizes = [8, 128], strides = [1, 1]} : vector<8x512xf32> to vector<8x128xf32>
    %200 = arith.negf %199 : vector<8x128xf32>
    %201 = math.exp %200 : vector<8x128xf32>
    %cst_66 = arith.constant 1.000000e+00 : f32
    %202 = vector.broadcast %cst_66 : f32 to vector<8x128xf32>
    %203 = arith.addf %202, %201 : vector<8x128xf32>
    %204 = arith.divf %202, %203 : vector<8x128xf32>
    %205 = vector.extract_strided_slice %198 {offsets = [0, 128], sizes = [8, 128], strides = [1, 1]} : vector<8x512xf32> to vector<8x128xf32>
    %206 = arith.negf %205 : vector<8x128xf32>
    %207 = math.exp %206 : vector<8x128xf32>
    %cst_67 = arith.constant 1.000000e+00 : f32
    %208 = vector.broadcast %cst_67 : f32 to vector<8x128xf32>
    %209 = arith.addf %208, %207 : vector<8x128xf32>
    %210 = arith.divf %208, %209 : vector<8x128xf32>
    %211 = vector.extract_strided_slice %198 {offsets = [0, 256], sizes = [8, 128], strides = [1, 1]} : vector<8x512xf32> to vector<8x128xf32>
    %212 = math.tanh %211 : vector<8x128xf32>
    %213 = vector.extract_strided_slice %198 {offsets = [0, 384], sizes = [8, 128], strides = [1, 1]} : vector<8x512xf32> to vector<8x128xf32>
    %214 = arith.negf %213 : vector<8x128xf32>
    %215 = math.exp %214 : vector<8x128xf32>
    %cst_68 = arith.constant 1.000000e+00 : f32
    %216 = vector.broadcast %cst_68 : f32 to vector<8x128xf32>
    %217 = arith.addf %216, %215 : vector<8x128xf32>
    %218 = arith.divf %216, %217 : vector<8x128xf32>
    %219 = arith.mulf %210, %185 : vector<8x128xf32>
    %220 = arith.mulf %204, %212 : vector<8x128xf32>
    %221 = arith.addf %219, %220 : vector<8x128xf32>
    %222 = math.tanh %221 : vector<8x128xf32>
    %223 = arith.mulf %218, %222 : vector<8x128xf32>
    %224 = arith.index_cast %c5_i32 : i32 to index
    %c0_69 = arith.constant 0 : index
    %c0_70 = arith.constant 0 : index
    %225 = vector.load %arg12[%224, %c0_69, %c0_70] : memref<8x8x128xf32, #tpu.memory_space<vmem>>, vector<1x8x128xf32>
    %226 = vector.shape_cast %225 : vector<1x8x128xf32> to vector<8x128xf32>
    %227 = vector.shape_cast %223 : vector<8x128xf32> to vector<1x8x128xf32>
    tpu.vector_store %arg12[%224, %c0_69, %c0_70], %227 {strides = array<i32>} : memref<8x8x128xf32, #tpu.memory_space<vmem>>, vector<1x8x128xf32>,
    %c6_i32 = arith.constant 6 : i32
    %228 = arith.index_cast %c6_i32 : i32 to index
    %c0_71 = arith.constant 0 : index
    %c0_72 = arith.constant 0 : index
    %229 = vector.load %arg11[%228, %c0_71, %c0_72] : memref<8x8x512xf32, #tpu.memory_space<vmem>>, vector<1x8x512xf32>
    %230 = vector.shape_cast %229 : vector<1x8x512xf32> to vector<8x512xf32>
    %231 = arith.truncf %223 : vector<8x128xf32> to vector<8x128xbf16>
    %c0_73 = arith.constant 0 : index
    %c0_74 = arith.constant 0 : index
    %232 = vector.load %arg3[%c0_73, %c0_74] : memref<128x512xbf16, #tpu.memory_space<vmem>>, vector<128x512xbf16>
    %cst_75 = arith.constant dense<0.000000e+00> : vector<8x512xf32>
    %233 = tpu.matmul %231, %232, %cst_75 {dimension_numbers = #tpu.dot_dimension_numbers<[1], [0], [0], [1], [0, 0, 1, 1], [], []>} : vector<8x128xbf16>, vector<128x512xbf16>, vector<8x512xf32> -> vector<8x512xf32>
    %234 = arith.addf %230, %233 : vector<8x512xf32>
    %235 = vector.extract_strided_slice %234 {offsets = [0, 0], sizes = [8, 128], strides = [1, 1]} : vector<8x512xf32> to vector<8x128xf32>
    %236 = arith.negf %235 : vector<8x128xf32>
    %237 = math.exp %236 : vector<8x128xf32>
    %cst_76 = arith.constant 1.000000e+00 : f32
    %238 = vector.broadcast %cst_76 : f32 to vector<8x128xf32>
    %239 = arith.addf %238, %237 : vector<8x128xf32>
    %240 = arith.divf %238, %239 : vector<8x128xf32>
    %241 = vector.extract_strided_slice %234 {offsets = [0, 128], sizes = [8, 128], strides = [1, 1]} : vector<8x512xf32> to vector<8x128xf32>
    %242 = arith.negf %241 : vector<8x128xf32>
    %243 = math.exp %242 : vector<8x128xf32>
    %cst_77 = arith.constant 1.000000e+00 : f32
    %244 = vector.broadcast %cst_77 : f32 to vector<8x128xf32>
    %245 = arith.addf %244, %243 : vector<8x128xf32>
    %246 = arith.divf %244, %245 : vector<8x128xf32>
    %247 = vector.extract_strided_slice %234 {offsets = [0, 256], sizes = [8, 128], strides = [1, 1]} : vector<8x512xf32> to vector<8x128xf32>
    %248 = math.tanh %247 : vector<8x128xf32>
    %249 = vector.extract_strided_slice %234 {offsets = [0, 384], sizes = [8, 128], strides = [1, 1]} : vector<8x512xf32> to vector<8x128xf32>
    %250 = arith.negf %249 : vector<8x128xf32>
    %251 = math.exp %250 : vector<8x128xf32>
    %cst_78 = arith.constant 1.000000e+00 : f32
    %252 = vector.broadcast %cst_78 : f32 to vector<8x128xf32>
    %253 = arith.addf %252, %251 : vector<8x128xf32>
    %254 = arith.divf %252, %253 : vector<8x128xf32>
    %255 = arith.mulf %246, %221 : vector<8x128xf32>
    %256 = arith.mulf %240, %248 : vector<8x128xf32>
    %257 = arith.addf %255, %256 : vector<8x128xf32>
    %258 = math.tanh %257 : vector<8x128xf32>
    %259 = arith.mulf %254, %258 : vector<8x128xf32>
    %260 = arith.index_cast %c6_i32 : i32 to index
    %c0_79 = arith.constant 0 : index
    %c0_80 = arith.constant 0 : index
    %261 = vector.load %arg12[%260, %c0_79, %c0_80] : memref<8x8x128xf32, #tpu.memory_space<vmem>>, vector<1x8x128xf32>
    %262 = vector.shape_cast %261 : vector<1x8x128xf32> to vector<8x128xf32>
    %263 = vector.shape_cast %259 : vector<8x128xf32> to vector<1x8x128xf32>
    tpu.vector_store %arg12[%260, %c0_79, %c0_80], %263 {strides = array<i32>} : memref<8x8x128xf32, #tpu.memory_space<vmem>>, vector<1x8x128xf32>,
    %c7_i32 = arith.constant 7 : i32
    %264 = arith.index_cast %c7_i32 : i32 to index
    %c0_81 = arith.constant 0 : index
    %c0_82 = arith.constant 0 : index
    %265 = vector.load %arg11[%264, %c0_81, %c0_82] : memref<8x8x512xf32, #tpu.memory_space<vmem>>, vector<1x8x512xf32>
    %266 = vector.shape_cast %265 : vector<1x8x512xf32> to vector<8x512xf32>
    %267 = arith.truncf %259 : vector<8x128xf32> to vector<8x128xbf16>
    %c0_83 = arith.constant 0 : index
    %c0_84 = arith.constant 0 : index
    %268 = vector.load %arg3[%c0_83, %c0_84] : memref<128x512xbf16, #tpu.memory_space<vmem>>, vector<128x512xbf16>
    %cst_85 = arith.constant dense<0.000000e+00> : vector<8x512xf32>
    %269 = tpu.matmul %267, %268, %cst_85 {dimension_numbers = #tpu.dot_dimension_numbers<[1], [0], [0], [1], [0, 0, 1, 1], [], []>} : vector<8x128xbf16>, vector<128x512xbf16>, vector<8x512xf32> -> vector<8x512xf32>
    %270 = arith.addf %266, %269 : vector<8x512xf32>
    %271 = vector.extract_strided_slice %270 {offsets = [0, 0], sizes = [8, 128], strides = [1, 1]} : vector<8x512xf32> to vector<8x128xf32>
    %272 = arith.negf %271 : vector<8x128xf32>
    %273 = math.exp %272 : vector<8x128xf32>
    %cst_86 = arith.constant 1.000000e+00 : f32
    %274 = vector.broadcast %cst_86 : f32 to vector<8x128xf32>
    %275 = arith.addf %274, %273 : vector<8x128xf32>
    %276 = arith.divf %274, %275 : vector<8x128xf32>
    %277 = vector.extract_strided_slice %270 {offsets = [0, 128], sizes = [8, 128], strides = [1, 1]} : vector<8x512xf32> to vector<8x128xf32>
    %278 = arith.negf %277 : vector<8x128xf32>
    %279 = math.exp %278 : vector<8x128xf32>
    %cst_87 = arith.constant 1.000000e+00 : f32
    %280 = vector.broadcast %cst_87 : f32 to vector<8x128xf32>
    %281 = arith.addf %280, %279 : vector<8x128xf32>
    %282 = arith.divf %280, %281 : vector<8x128xf32>
    %283 = vector.extract_strided_slice %270 {offsets = [0, 256], sizes = [8, 128], strides = [1, 1]} : vector<8x512xf32> to vector<8x128xf32>
    %284 = math.tanh %283 : vector<8x128xf32>
    %285 = vector.extract_strided_slice %270 {offsets = [0, 384], sizes = [8, 128], strides = [1, 1]} : vector<8x512xf32> to vector<8x128xf32>
    %286 = arith.negf %285 : vector<8x128xf32>
    %287 = math.exp %286 : vector<8x128xf32>
    %cst_88 = arith.constant 1.000000e+00 : f32
    %288 = vector.broadcast %cst_88 : f32 to vector<8x128xf32>
    %289 = arith.addf %288, %287 : vector<8x128xf32>
    %290 = arith.divf %288, %289 : vector<8x128xf32>
    %291 = arith.mulf %282, %257 : vector<8x128xf32>
    %292 = arith.mulf %276, %284 : vector<8x128xf32>
    %293 = arith.addf %291, %292 : vector<8x128xf32>
    %294 = math.tanh %293 : vector<8x128xf32>
    %295 = arith.mulf %290, %294 : vector<8x128xf32>
    %296 = arith.index_cast %c7_i32 : i32 to index
    %c0_89 = arith.constant 0 : index
    %c0_90 = arith.constant 0 : index
    %297 = vector.load %arg12[%296, %c0_89, %c0_90] : memref<8x8x128xf32, #tpu.memory_space<vmem>>, vector<1x8x128xf32>
    %298 = vector.shape_cast %297 : vector<1x8x128xf32> to vector<8x128xf32>
    %299 = vector.shape_cast %295 : vector<8x128xf32> to vector<1x8x128xf32>
    tpu.vector_store %arg12[%296, %c0_89, %c0_90], %299 {strides = array<i32>} : memref<8x8x128xf32, #tpu.memory_space<vmem>>, vector<1x8x128xf32>,
    %c8_i32 = arith.constant 8 : i32
    %c0_91 = arith.constant 0 : index
    %c0_92 = arith.constant 0 : index
    %c0_93 = arith.constant 0 : index
    %300 = vector.load %arg12[%c0_91, %c0_92, %c0_93] : memref<8x8x128xf32, #tpu.memory_space<vmem>>, vector<8x8x128xf32>
    %301 = vector.shape_cast %300 : vector<8x8x128xf32> to vector<64x128xf32>
    %302 = arith.truncf %301 : vector<64x128xf32> to vector<64x128xbf16>
    %c0_94 = arith.constant 0 : index
    %c0_95 = arith.constant 0 : index
    %303 = vector.load %arg5[%c0_94, %c0_95] : memref<128x512xbf16, #tpu.memory_space<vmem>>, vector<128x512xbf16>
    %cst_96 = arith.constant dense<0.000000e+00> : vector<64x512xf32>
    %304 = tpu.matmul %302, %303, %cst_96 {dimension_numbers = #tpu.dot_dimension_numbers<[1], [0], [0], [1], [0, 0, 1, 1], [], []>} : vector<64x128xbf16>, vector<128x512xbf16>, vector<64x512xf32> -> vector<64x512xf32>
    %c0_97 = arith.constant 0 : index
    %c0_98 = arith.constant 0 : index
    %305 = vector.load %arg7[%c0_97, %c0_98] : memref<1x512xf32, #tpu.memory_space<vmem>>, vector<1x512xf32>
    %306 = vector.broadcast %305 : vector<1x512xf32> to vector<64x512xf32>
    %307 = arith.addf %304, %306 : vector<64x512xf32>
    %308 = vector.shape_cast %307 : vector<64x512xf32> to vector<8x8x512xf32>
    %c0_99 = arith.constant 0 : index
    %c0_100 = arith.constant 0 : index
    %c0_101 = arith.constant 0 : index
    %309 = vector.load %arg11[%c0_99, %c0_100, %c0_101] : memref<8x8x512xf32, #tpu.memory_space<vmem>>, vector<8x8x512xf32>
    tpu.vector_store %arg11[%c0_99, %c0_100, %c0_101], %308 {strides = array<i32>} : memref<8x8x512xf32, #tpu.memory_space<vmem>>, vector<8x8x512xf32>,
    %cst_102 = arith.constant 0.000000e+00 : f32
    %310 = vector.broadcast %cst_102 : f32 to vector<8x128xf32>
    %cst_103 = arith.constant 0.000000e+00 : f32
    %311 = vector.broadcast %cst_103 : f32 to vector<8x128xf32>
    %c0_i32_104 = arith.constant 0 : i32
    %312 = arith.index_cast %c0_i32_104 : i32 to index
    %c0_105 = arith.constant 0 : index
    %c0_106 = arith.constant 0 : index
    %313 = vector.load %arg11[%312, %c0_105, %c0_106] : memref<8x8x512xf32, #tpu.memory_space<vmem>>, vector<1x8x512xf32>
    %314 = vector.shape_cast %313 : vector<1x8x512xf32> to vector<8x512xf32>
    %315 = arith.truncf %310 : vector<8x128xf32> to vector<8x128xbf16>
    %c0_107 = arith.constant 0 : index
    %c0_108 = arith.constant 0 : index
    %316 = vector.load %arg6[%c0_107, %c0_108] : memref<128x512xbf16, #tpu.memory_space<vmem>>, vector<128x512xbf16>
    %cst_109 = arith.constant dense<0.000000e+00> : vector<8x512xf32>
    %317 = tpu.matmul %315, %316, %cst_109 {dimension_numbers = #tpu.dot_dimension_numbers<[1], [0], [0], [1], [0, 0, 1, 1], [], []>} : vector<8x128xbf16>, vector<128x512xbf16>, vector<8x512xf32> -> vector<8x512xf32>
    %318 = arith.addf %314, %317 : vector<8x512xf32>
    %319 = vector.extract_strided_slice %318 {offsets = [0, 0], sizes = [8, 128], strides = [1, 1]} : vector<8x512xf32> to vector<8x128xf32>
    %320 = arith.negf %319 : vector<8x128xf32>
    %321 = math.exp %320 : vector<8x128xf32>
    %cst_110 = arith.constant 1.000000e+00 : f32
    %322 = vector.broadcast %cst_110 : f32 to vector<8x128xf32>
    %323 = arith.addf %322, %321 : vector<8x128xf32>
    %324 = arith.divf %322, %323 : vector<8x128xf32>
    %325 = vector.extract_strided_slice %318 {offsets = [0, 128], sizes = [8, 128], strides = [1, 1]} : vector<8x512xf32> to vector<8x128xf32>
    %326 = arith.negf %325 : vector<8x128xf32>
    %327 = math.exp %326 : vector<8x128xf32>
    %cst_111 = arith.constant 1.000000e+00 : f32
    %328 = vector.broadcast %cst_111 : f32 to vector<8x128xf32>
    %329 = arith.addf %328, %327 : vector<8x128xf32>
    %330 = arith.divf %328, %329 : vector<8x128xf32>
    %331 = vector.extract_strided_slice %318 {offsets = [0, 256], sizes = [8, 128], strides = [1, 1]} : vector<8x512xf32> to vector<8x128xf32>
    %332 = math.tanh %331 : vector<8x128xf32>
    %333 = vector.extract_strided_slice %318 {offsets = [0, 384], sizes = [8, 128], strides = [1, 1]} : vector<8x512xf32> to vector<8x128xf32>
    %334 = arith.negf %333 : vector<8x128xf32>
    %335 = math.exp %334 : vector<8x128xf32>
    %cst_112 = arith.constant 1.000000e+00 : f32
    %336 = vector.broadcast %cst_112 : f32 to vector<8x128xf32>
    %337 = arith.addf %336, %335 : vector<8x128xf32>
    %338 = arith.divf %336, %337 : vector<8x128xf32>
    %339 = arith.mulf %330, %311 : vector<8x128xf32>
    %340 = arith.mulf %324, %332 : vector<8x128xf32>
    %341 = arith.addf %339, %340 : vector<8x128xf32>
    %342 = math.tanh %341 : vector<8x128xf32>
    %343 = arith.mulf %338, %342 : vector<8x128xf32>
    %c1_i32_113 = arith.constant 1 : i32
    %344 = arith.index_cast %c1_i32_113 : i32 to index
    %c0_114 = arith.constant 0 : index
    %c0_115 = arith.constant 0 : index
    %345 = vector.load %arg11[%344, %c0_114, %c0_115] : memref<8x8x512xf32, #tpu.memory_space<vmem>>, vector<1x8x512xf32>
    %346 = vector.shape_cast %345 : vector<1x8x512xf32> to vector<8x512xf32>
    %347 = arith.truncf %343 : vector<8x128xf32> to vector<8x128xbf16>
    %c0_116 = arith.constant 0 : index
    %c0_117 = arith.constant 0 : index
    %348 = vector.load %arg6[%c0_116, %c0_117] : memref<128x512xbf16, #tpu.memory_space<vmem>>, vector<128x512xbf16>
    %cst_118 = arith.constant dense<0.000000e+00> : vector<8x512xf32>
    %349 = tpu.matmul %347, %348, %cst_118 {dimension_numbers = #tpu.dot_dimension_numbers<[1], [0], [0], [1], [0, 0, 1, 1], [], []>} : vector<8x128xbf16>, vector<128x512xbf16>, vector<8x512xf32> -> vector<8x512xf32>
    %350 = arith.addf %346, %349 : vector<8x512xf32>
    %351 = vector.extract_strided_slice %350 {offsets = [0, 0], sizes = [8, 128], strides = [1, 1]} : vector<8x512xf32> to vector<8x128xf32>
    %352 = arith.negf %351 : vector<8x128xf32>
    %353 = math.exp %352 : vector<8x128xf32>
    %cst_119 = arith.constant 1.000000e+00 : f32
    %354 = vector.broadcast %cst_119 : f32 to vector<8x128xf32>
    %355 = arith.addf %354, %353 : vector<8x128xf32>
    %356 = arith.divf %354, %355 : vector<8x128xf32>
    %357 = vector.extract_strided_slice %350 {offsets = [0, 128], sizes = [8, 128], strides = [1, 1]} : vector<8x512xf32> to vector<8x128xf32>
    %358 = arith.negf %357 : vector<8x128xf32>
    %359 = math.exp %358 : vector<8x128xf32>
    %cst_120 = arith.constant 1.000000e+00 : f32
    %360 = vector.broadcast %cst_120 : f32 to vector<8x128xf32>
    %361 = arith.addf %360, %359 : vector<8x128xf32>
    %362 = arith.divf %360, %361 : vector<8x128xf32>
    %363 = vector.extract_strided_slice %350 {offsets = [0, 256], sizes = [8, 128], strides = [1, 1]} : vector<8x512xf32> to vector<8x128xf32>
    %364 = math.tanh %363 : vector<8x128xf32>
    %365 = vector.extract_strided_slice %350 {offsets = [0, 384], sizes = [8, 128], strides = [1, 1]} : vector<8x512xf32> to vector<8x128xf32>
    %366 = arith.negf %365 : vector<8x128xf32>
    %367 = math.exp %366 : vector<8x128xf32>
    %cst_121 = arith.constant 1.000000e+00 : f32
    %368 = vector.broadcast %cst_121 : f32 to vector<8x128xf32>
    %369 = arith.addf %368, %367 : vector<8x128xf32>
    %370 = arith.divf %368, %369 : vector<8x128xf32>
    %371 = arith.mulf %362, %341 : vector<8x128xf32>
    %372 = arith.mulf %356, %364 : vector<8x128xf32>
    %373 = arith.addf %371, %372 : vector<8x128xf32>
    %374 = math.tanh %373 : vector<8x128xf32>
    %375 = arith.mulf %370, %374 : vector<8x128xf32>
    %c2_i32_122 = arith.constant 2 : i32
    %376 = arith.index_cast %c2_i32_122 : i32 to index
    %c0_123 = arith.constant 0 : index
    %c0_124 = arith.constant 0 : index
    %377 = vector.load %arg11[%376, %c0_123, %c0_124] : memref<8x8x512xf32, #tpu.memory_space<vmem>>, vector<1x8x512xf32>
    %378 = vector.shape_cast %377 : vector<1x8x512xf32> to vector<8x512xf32>
    %379 = arith.truncf %375 : vector<8x128xf32> to vector<8x128xbf16>
    %c0_125 = arith.constant 0 : index
    %c0_126 = arith.constant 0 : index
    %380 = vector.load %arg6[%c0_125, %c0_126] : memref<128x512xbf16, #tpu.memory_space<vmem>>, vector<128x512xbf16>
    %cst_127 = arith.constant dense<0.000000e+00> : vector<8x512xf32>
    %381 = tpu.matmul %379, %380, %cst_127 {dimension_numbers = #tpu.dot_dimension_numbers<[1], [0], [0], [1], [0, 0, 1, 1], [], []>} : vector<8x128xbf16>, vector<128x512xbf16>, vector<8x512xf32> -> vector<8x512xf32>
    %382 = arith.addf %378, %381 : vector<8x512xf32>
    %383 = vector.extract_strided_slice %382 {offsets = [0, 0], sizes = [8, 128], strides = [1, 1]} : vector<8x512xf32> to vector<8x128xf32>
    %384 = arith.negf %383 : vector<8x128xf32>
    %385 = math.exp %384 : vector<8x128xf32>
    %cst_128 = arith.constant 1.000000e+00 : f32
    %386 = vector.broadcast %cst_128 : f32 to vector<8x128xf32>
    %387 = arith.addf %386, %385 : vector<8x128xf32>
    %388 = arith.divf %386, %387 : vector<8x128xf32>
    %389 = vector.extract_strided_slice %382 {offsets = [0, 128], sizes = [8, 128], strides = [1, 1]} : vector<8x512xf32> to vector<8x128xf32>
    %390 = arith.negf %389 : vector<8x128xf32>
    %391 = math.exp %390 : vector<8x128xf32>
    %cst_129 = arith.constant 1.000000e+00 : f32
    %392 = vector.broadcast %cst_129 : f32 to vector<8x128xf32>
    %393 = arith.addf %392, %391 : vector<8x128xf32>
    %394 = arith.divf %392, %393 : vector<8x128xf32>
    %395 = vector.extract_strided_slice %382 {offsets = [0, 256], sizes = [8, 128], strides = [1, 1]} : vector<8x512xf32> to vector<8x128xf32>
    %396 = math.tanh %395 : vector<8x128xf32>
    %397 = vector.extract_strided_slice %382 {offsets = [0, 384], sizes = [8, 128], strides = [1, 1]} : vector<8x512xf32> to vector<8x128xf32>
    %398 = arith.negf %397 : vector<8x128xf32>
    %399 = math.exp %398 : vector<8x128xf32>
    %cst_130 = arith.constant 1.000000e+00 : f32
    %400 = vector.broadcast %cst_130 : f32 to vector<8x128xf32>
    %401 = arith.addf %400, %399 : vector<8x128xf32>
    %402 = arith.divf %400, %401 : vector<8x128xf32>
    %403 = arith.mulf %394, %373 : vector<8x128xf32>
    %404 = arith.mulf %388, %396 : vector<8x128xf32>
    %405 = arith.addf %403, %404 : vector<8x128xf32>
    %406 = math.tanh %405 : vector<8x128xf32>
    %407 = arith.mulf %402, %406 : vector<8x128xf32>
    %c3_i32_131 = arith.constant 3 : i32
    %408 = arith.index_cast %c3_i32_131 : i32 to index
    %c0_132 = arith.constant 0 : index
    %c0_133 = arith.constant 0 : index
    %409 = vector.load %arg11[%408, %c0_132, %c0_133] : memref<8x8x512xf32, #tpu.memory_space<vmem>>, vector<1x8x512xf32>
    %410 = vector.shape_cast %409 : vector<1x8x512xf32> to vector<8x512xf32>
    %411 = arith.truncf %407 : vector<8x128xf32> to vector<8x128xbf16>
    %c0_134 = arith.constant 0 : index
    %c0_135 = arith.constant 0 : index
    %412 = vector.load %arg6[%c0_134, %c0_135] : memref<128x512xbf16, #tpu.memory_space<vmem>>, vector<128x512xbf16>
    %cst_136 = arith.constant dense<0.000000e+00> : vector<8x512xf32>
    %413 = tpu.matmul %411, %412, %cst_136 {dimension_numbers = #tpu.dot_dimension_numbers<[1], [0], [0], [1], [0, 0, 1, 1], [], []>} : vector<8x128xbf16>, vector<128x512xbf16>, vector<8x512xf32> -> vector<8x512xf32>
    %414 = arith.addf %410, %413 : vector<8x512xf32>
    %415 = vector.extract_strided_slice %414 {offsets = [0, 0], sizes = [8, 128], strides = [1, 1]} : vector<8x512xf32> to vector<8x128xf32>
    %416 = arith.negf %415 : vector<8x128xf32>
    %417 = math.exp %416 : vector<8x128xf32>
    %cst_137 = arith.constant 1.000000e+00 : f32
    %418 = vector.broadcast %cst_137 : f32 to vector<8x128xf32>
    %419 = arith.addf %418, %417 : vector<8x128xf32>
    %420 = arith.divf %418, %419 : vector<8x128xf32>
    %421 = vector.extract_strided_slice %414 {offsets = [0, 128], sizes = [8, 128], strides = [1, 1]} : vector<8x512xf32> to vector<8x128xf32>
    %422 = arith.negf %421 : vector<8x128xf32>
    %423 = math.exp %422 : vector<8x128xf32>
    %cst_138 = arith.constant 1.000000e+00 : f32
    %424 = vector.broadcast %cst_138 : f32 to vector<8x128xf32>
    %425 = arith.addf %424, %423 : vector<8x128xf32>
    %426 = arith.divf %424, %425 : vector<8x128xf32>
    %427 = vector.extract_strided_slice %414 {offsets = [0, 256], sizes = [8, 128], strides = [1, 1]} : vector<8x512xf32> to vector<8x128xf32>
    %428 = math.tanh %427 : vector<8x128xf32>
    %429 = vector.extract_strided_slice %414 {offsets = [0, 384], sizes = [8, 128], strides = [1, 1]} : vector<8x512xf32> to vector<8x128xf32>
    %430 = arith.negf %429 : vector<8x128xf32>
    %431 = math.exp %430 : vector<8x128xf32>
    %cst_139 = arith.constant 1.000000e+00 : f32
    %432 = vector.broadcast %cst_139 : f32 to vector<8x128xf32>
    %433 = arith.addf %432, %431 : vector<8x128xf32>
    %434 = arith.divf %432, %433 : vector<8x128xf32>
    %435 = arith.mulf %426, %405 : vector<8x128xf32>
    %436 = arith.mulf %420, %428 : vector<8x128xf32>
    %437 = arith.addf %435, %436 : vector<8x128xf32>
    %438 = math.tanh %437 : vector<8x128xf32>
    %439 = arith.mulf %434, %438 : vector<8x128xf32>
    %c4_i32_140 = arith.constant 4 : i32
    %440 = arith.index_cast %c4_i32_140 : i32 to index
    %c0_141 = arith.constant 0 : index
    %c0_142 = arith.constant 0 : index
    %441 = vector.load %arg11[%440, %c0_141, %c0_142] : memref<8x8x512xf32, #tpu.memory_space<vmem>>, vector<1x8x512xf32>
    %442 = vector.shape_cast %441 : vector<1x8x512xf32> to vector<8x512xf32>
    %443 = arith.truncf %439 : vector<8x128xf32> to vector<8x128xbf16>
    %c0_143 = arith.constant 0 : index
    %c0_144 = arith.constant 0 : index
    %444 = vector.load %arg6[%c0_143, %c0_144] : memref<128x512xbf16, #tpu.memory_space<vmem>>, vector<128x512xbf16>
    %cst_145 = arith.constant dense<0.000000e+00> : vector<8x512xf32>
    %445 = tpu.matmul %443, %444, %cst_145 {dimension_numbers = #tpu.dot_dimension_numbers<[1], [0], [0], [1], [0, 0, 1, 1], [], []>} : vector<8x128xbf16>, vector<128x512xbf16>, vector<8x512xf32> -> vector<8x512xf32>
    %446 = arith.addf %442, %445 : vector<8x512xf32>
    %447 = vector.extract_strided_slice %446 {offsets = [0, 0], sizes = [8, 128], strides = [1, 1]} : vector<8x512xf32> to vector<8x128xf32>
    %448 = arith.negf %447 : vector<8x128xf32>
    %449 = math.exp %448 : vector<8x128xf32>
    %cst_146 = arith.constant 1.000000e+00 : f32
    %450 = vector.broadcast %cst_146 : f32 to vector<8x128xf32>
    %451 = arith.addf %450, %449 : vector<8x128xf32>
    %452 = arith.divf %450, %451 : vector<8x128xf32>
    %453 = vector.extract_strided_slice %446 {offsets = [0, 128], sizes = [8, 128], strides = [1, 1]} : vector<8x512xf32> to vector<8x128xf32>
    %454 = arith.negf %453 : vector<8x128xf32>
    %455 = math.exp %454 : vector<8x128xf32>
    %cst_147 = arith.constant 1.000000e+00 : f32
    %456 = vector.broadcast %cst_147 : f32 to vector<8x128xf32>
    %457 = arith.addf %456, %455 : vector<8x128xf32>
    %458 = arith.divf %456, %457 : vector<8x128xf32>
    %459 = vector.extract_strided_slice %446 {offsets = [0, 256], sizes = [8, 128], strides = [1, 1]} : vector<8x512xf32> to vector<8x128xf32>
    %460 = math.tanh %459 : vector<8x128xf32>
    %461 = vector.extract_strided_slice %446 {offsets = [0, 384], sizes = [8, 128], strides = [1, 1]} : vector<8x512xf32> to vector<8x128xf32>
    %462 = arith.negf %461 : vector<8x128xf32>
    %463 = math.exp %462 : vector<8x128xf32>
    %cst_148 = arith.constant 1.000000e+00 : f32
    %464 = vector.broadcast %cst_148 : f32 to vector<8x128xf32>
    %465 = arith.addf %464, %463 : vector<8x128xf32>
    %466 = arith.divf %464, %465 : vector<8x128xf32>
    %467 = arith.mulf %458, %437 : vector<8x128xf32>
    %468 = arith.mulf %452, %460 : vector<8x128xf32>
    %469 = arith.addf %467, %468 : vector<8x128xf32>
    %470 = math.tanh %469 : vector<8x128xf32>
    %471 = arith.mulf %466, %470 : vector<8x128xf32>
    %c5_i32_149 = arith.constant 5 : i32
    %472 = arith.index_cast %c5_i32_149 : i32 to index
    %c0_150 = arith.constant 0 : index
    %c0_151 = arith.constant 0 : index
    %473 = vector.load %arg11[%472, %c0_150, %c0_151] : memref<8x8x512xf32, #tpu.memory_space<vmem>>, vector<1x8x512xf32>
    %474 = vector.shape_cast %473 : vector<1x8x512xf32> to vector<8x512xf32>
    %475 = arith.truncf %471 : vector<8x128xf32> to vector<8x128xbf16>
    %c0_152 = arith.constant 0 : index
    %c0_153 = arith.constant 0 : index
    %476 = vector.load %arg6[%c0_152, %c0_153] : memref<128x512xbf16, #tpu.memory_space<vmem>>, vector<128x512xbf16>
    %cst_154 = arith.constant dense<0.000000e+00> : vector<8x512xf32>
    %477 = tpu.matmul %475, %476, %cst_154 {dimension_numbers = #tpu.dot_dimension_numbers<[1], [0], [0], [1], [0, 0, 1, 1], [], []>} : vector<8x128xbf16>, vector<128x512xbf16>, vector<8x512xf32> -> vector<8x512xf32>
    %478 = arith.addf %474, %477 : vector<8x512xf32>
    %479 = vector.extract_strided_slice %478 {offsets = [0, 0], sizes = [8, 128], strides = [1, 1]} : vector<8x512xf32> to vector<8x128xf32>
    %480 = arith.negf %479 : vector<8x128xf32>
    %481 = math.exp %480 : vector<8x128xf32>
    %cst_155 = arith.constant 1.000000e+00 : f32
    %482 = vector.broadcast %cst_155 : f32 to vector<8x128xf32>
    %483 = arith.addf %482, %481 : vector<8x128xf32>
    %484 = arith.divf %482, %483 : vector<8x128xf32>
    %485 = vector.extract_strided_slice %478 {offsets = [0, 128], sizes = [8, 128], strides = [1, 1]} : vector<8x512xf32> to vector<8x128xf32>
    %486 = arith.negf %485 : vector<8x128xf32>
    %487 = math.exp %486 : vector<8x128xf32>
    %cst_156 = arith.constant 1.000000e+00 : f32
    %488 = vector.broadcast %cst_156 : f32 to vector<8x128xf32>
    %489 = arith.addf %488, %487 : vector<8x128xf32>
    %490 = arith.divf %488, %489 : vector<8x128xf32>
    %491 = vector.extract_strided_slice %478 {offsets = [0, 256], sizes = [8, 128], strides = [1, 1]} : vector<8x512xf32> to vector<8x128xf32>
    %492 = math.tanh %491 : vector<8x128xf32>
    %493 = vector.extract_strided_slice %478 {offsets = [0, 384], sizes = [8, 128], strides = [1, 1]} : vector<8x512xf32> to vector<8x128xf32>
    %494 = arith.negf %493 : vector<8x128xf32>
    %495 = math.exp %494 : vector<8x128xf32>
    %cst_157 = arith.constant 1.000000e+00 : f32
    %496 = vector.broadcast %cst_157 : f32 to vector<8x128xf32>
    %497 = arith.addf %496, %495 : vector<8x128xf32>
    %498 = arith.divf %496, %497 : vector<8x128xf32>
    %499 = arith.mulf %490, %469 : vector<8x128xf32>
    %500 = arith.mulf %484, %492 : vector<8x128xf32>
    %501 = arith.addf %499, %500 : vector<8x128xf32>
    %502 = math.tanh %501 : vector<8x128xf32>
    %503 = arith.mulf %498, %502 : vector<8x128xf32>
    %c6_i32_158 = arith.constant 6 : i32
    %504 = arith.index_cast %c6_i32_158 : i32 to index
    %c0_159 = arith.constant 0 : index
    %c0_160 = arith.constant 0 : index
    %505 = vector.load %arg11[%504, %c0_159, %c0_160] : memref<8x8x512xf32, #tpu.memory_space<vmem>>, vector<1x8x512xf32>
    %506 = vector.shape_cast %505 : vector<1x8x512xf32> to vector<8x512xf32>
    %507 = arith.truncf %503 : vector<8x128xf32> to vector<8x128xbf16>
    %c0_161 = arith.constant 0 : index
    %c0_162 = arith.constant 0 : index
    %508 = vector.load %arg6[%c0_161, %c0_162] : memref<128x512xbf16, #tpu.memory_space<vmem>>, vector<128x512xbf16>
    %cst_163 = arith.constant dense<0.000000e+00> : vector<8x512xf32>
    %509 = tpu.matmul %507, %508, %cst_163 {dimension_numbers = #tpu.dot_dimension_numbers<[1], [0], [0], [1], [0, 0, 1, 1], [], []>} : vector<8x128xbf16>, vector<128x512xbf16>, vector<8x512xf32> -> vector<8x512xf32>
    %510 = arith.addf %506, %509 : vector<8x512xf32>
    %511 = vector.extract_strided_slice %510 {offsets = [0, 0], sizes = [8, 128], strides = [1, 1]} : vector<8x512xf32> to vector<8x128xf32>
    %512 = arith.negf %511 : vector<8x128xf32>
    %513 = math.exp %512 : vector<8x128xf32>
    %cst_164 = arith.constant 1.000000e+00 : f32
    %514 = vector.broadcast %cst_164 : f32 to vector<8x128xf32>
    %515 = arith.addf %514, %513 : vector<8x128xf32>
    %516 = arith.divf %514, %515 : vector<8x128xf32>
    %517 = vector.extract_strided_slice %510 {offsets = [0, 128], sizes = [8, 128], strides = [1, 1]} : vector<8x512xf32> to vector<8x128xf32>
    %518 = arith.negf %517 : vector<8x128xf32>
    %519 = math.exp %518 : vector<8x128xf32>
    %cst_165 = arith.constant 1.000000e+00 : f32
    %520 = vector.broadcast %cst_165 : f32 to vector<8x128xf32>
    %521 = arith.addf %520, %519 : vector<8x128xf32>
    %522 = arith.divf %520, %521 : vector<8x128xf32>
    %523 = vector.extract_strided_slice %510 {offsets = [0, 256], sizes = [8, 128], strides = [1, 1]} : vector<8x512xf32> to vector<8x128xf32>
    %524 = math.tanh %523 : vector<8x128xf32>
    %525 = vector.extract_strided_slice %510 {offsets = [0, 384], sizes = [8, 128], strides = [1, 1]} : vector<8x512xf32> to vector<8x128xf32>
    %526 = arith.negf %525 : vector<8x128xf32>
    %527 = math.exp %526 : vector<8x128xf32>
    %cst_166 = arith.constant 1.000000e+00 : f32
    %528 = vector.broadcast %cst_166 : f32 to vector<8x128xf32>
    %529 = arith.addf %528, %527 : vector<8x128xf32>
    %530 = arith.divf %528, %529 : vector<8x128xf32>
    %531 = arith.mulf %522, %501 : vector<8x128xf32>
    %532 = arith.mulf %516, %524 : vector<8x128xf32>
    %533 = arith.addf %531, %532 : vector<8x128xf32>
    %534 = math.tanh %533 : vector<8x128xf32>
    %535 = arith.mulf %530, %534 : vector<8x128xf32>
    %c7_i32_167 = arith.constant 7 : i32
    %536 = arith.index_cast %c7_i32_167 : i32 to index
    %c0_168 = arith.constant 0 : index
    %c0_169 = arith.constant 0 : index
    %537 = vector.load %arg11[%536, %c0_168, %c0_169] : memref<8x8x512xf32, #tpu.memory_space<vmem>>, vector<1x8x512xf32>
    %538 = vector.shape_cast %537 : vector<1x8x512xf32> to vector<8x512xf32>
    %539 = arith.truncf %535 : vector<8x128xf32> to vector<8x128xbf16>
    %c0_170 = arith.constant 0 : index
    %c0_171 = arith.constant 0 : index
    %540 = vector.load %arg6[%c0_170, %c0_171] : memref<128x512xbf16, #tpu.memory_space<vmem>>, vector<128x512xbf16>
    %cst_172 = arith.constant dense<0.000000e+00> : vector<8x512xf32>
    %541 = tpu.matmul %539, %540, %cst_172 {dimension_numbers = #tpu.dot_dimension_numbers<[1], [0], [0], [1], [0, 0, 1, 1], [], []>} : vector<8x128xbf16>, vector<128x512xbf16>, vector<8x512xf32> -> vector<8x512xf32>
    %542 = arith.addf %538, %541 : vector<8x512xf32>
    %543 = vector.extract_strided_slice %542 {offsets = [0, 0], sizes = [8, 128], strides = [1, 1]} : vector<8x512xf32> to vector<8x128xf32>
    %544 = arith.negf %543 : vector<8x128xf32>
    %545 = math.exp %544 : vector<8x128xf32>
    %cst_173 = arith.constant 1.000000e+00 : f32
    %546 = vector.broadcast %cst_173 : f32 to vector<8x128xf32>
    %547 = arith.addf %546, %545 : vector<8x128xf32>
    %548 = arith.divf %546, %547 : vector<8x128xf32>
    %549 = vector.extract_strided_slice %542 {offsets = [0, 128], sizes = [8, 128], strides = [1, 1]} : vector<8x512xf32> to vector<8x128xf32>
    %550 = arith.negf %549 : vector<8x128xf32>
    %551 = math.exp %550 : vector<8x128xf32>
    %cst_174 = arith.constant 1.000000e+00 : f32
    %552 = vector.broadcast %cst_174 : f32 to vector<8x128xf32>
    %553 = arith.addf %552, %551 : vector<8x128xf32>
    %554 = arith.divf %552, %553 : vector<8x128xf32>
    %555 = vector.extract_strided_slice %542 {offsets = [0, 256], sizes = [8, 128], strides = [1, 1]} : vector<8x512xf32> to vector<8x128xf32>
    %556 = math.tanh %555 : vector<8x128xf32>
    %557 = vector.extract_strided_slice %542 {offsets = [0, 384], sizes = [8, 128], strides = [1, 1]} : vector<8x512xf32> to vector<8x128xf32>
    %558 = arith.negf %557 : vector<8x128xf32>
    %559 = math.exp %558 : vector<8x128xf32>
    %cst_175 = arith.constant 1.000000e+00 : f32
    %560 = vector.broadcast %cst_175 : f32 to vector<8x128xf32>
    %561 = arith.addf %560, %559 : vector<8x128xf32>
    %562 = arith.divf %560, %561 : vector<8x128xf32>
    %563 = arith.mulf %554, %533 : vector<8x128xf32>
    %564 = arith.mulf %548, %556 : vector<8x128xf32>
    %565 = arith.addf %563, %564 : vector<8x128xf32>
    %566 = math.tanh %565 : vector<8x128xf32>
    %567 = arith.mulf %562, %566 : vector<8x128xf32>
    %c8_i32_176 = arith.constant 8 : i32
    %c0_177 = arith.constant 0 : index
    %c0_178 = arith.constant 0 : index
    %568 = vector.load %arg8[%c0_177, %c0_178] : memref<128x128xf32, #tpu.memory_space<vmem>>, vector<128x128xf32>
    %cst_179 = arith.constant dense<0.000000e+00> : vector<8x128xf32>
    %569 = tpu.matmul %567, %568, %cst_179 {dimension_numbers = #tpu.dot_dimension_numbers<[1], [0], [0], [1], [0, 0, 1, 1], [], []>} : vector<8x128xf32>, vector<128x128xf32>, vector<8x128xf32> -> vector<8x128xf32>
    %c0_180 = arith.constant 0 : index
    %c0_181 = arith.constant 0 : index
    %570 = vector.load %arg9[%c0_180, %c0_181] : memref<1x128xf32, #tpu.memory_space<vmem>>, vector<1x128xf32>
    %571 = vector.broadcast %570 : vector<1x128xf32> to vector<8x128xf32>
    %572 = arith.addf %569, %571 : vector<8x128xf32>
    %c0_182 = arith.constant 0 : index
    %c0_183 = arith.constant 0 : index
    %573 = vector.load %arg10[%c0_182, %c0_183] : memref<8x128xf32, #tpu.memory_space<vmem>>, vector<8x128xf32>
    tpu.vector_store %arg10[%c0_182, %c0_183], %572 {strides = array<i32>} : memref<8x128xf32, #tpu.memory_space<vmem>>, vector<8x128xf32>,
    return
  }
  func.func @transform_0(%arg0: i32) -> (i32, i32, i32) {
    %c0_i32 = arith.constant 0 : i32
    %c0_i32_0 = arith.constant 0 : i32
    %c0_i32_1 = arith.constant 0 : i32
    return %c0_i32, %arg0, %c0_i32_0 : i32, i32, i32
  }
  func.func @transform_1(%arg0: i32) -> (i32, i32) {
    %c0_i32 = arith.constant 0 : i32
    %c0_i32_0 = arith.constant 0 : i32
    %c0_i32_1 = arith.constant 0 : i32
    return %c0_i32, %c0_i32_0 : i32, i32
  }
  func.func @transform_2(%arg0: i32) -> (i32, i32) {
    %c0_i32 = arith.constant 0 : i32
    %c0_i32_0 = arith.constant 0 : i32
    %c0_i32_1 = arith.constant 0 : i32
    return %c0_i32, %c0_i32_0 : i32, i32
  }
  func.func @transform_3(%arg0: i32) -> (i32, i32) {
    %c0_i32 = arith.constant 0 : i32
    %c0_i32_0 = arith.constant 0 : i32
    %c0_i32_1 = arith.constant 0 : i32
    return %c0_i32, %c0_i32_0 : i32, i32
  }
  func.func @transform_4(%arg0: i32) -> (i32, i32) {
    %c0_i32 = arith.constant 0 : i32
    %c0_i32_0 = arith.constant 0 : i32
    %c0_i32_1 = arith.constant 0 : i32
    return %c0_i32, %c0_i32_0 : i32, i32
  }
  func.func @transform_5(%arg0: i32) -> (i32, i32) {
    %c0_i32 = arith.constant 0 : i32
    %c0_i32_0 = arith.constant 0 : i32
    %c0_i32_1 = arith.constant 0 : i32
    return %c0_i32, %c0_i32_0 : i32, i32
  }
  func.func @transform_6(%arg0: i32) -> (i32, i32) {
    %c0_i32 = arith.constant 0 : i32
    %c0_i32_0 = arith.constant 0 : i32
    %c0_i32_1 = arith.constant 0 : i32
    return %c0_i32, %c0_i32_0 : i32, i32
  }
  func.func @transform_7(%arg0: i32) -> (i32, i32) {
    %c0_i32 = arith.constant 0 : i32
    %c0_i32_0 = arith.constant 0 : i32
    %c0_i32_1 = arith.constant 0 : i32
    return %c0_i32, %c0_i32_0 : i32, i32
  }
  func.func @transform_8(%arg0: i32) -> (i32, i32) {
    %c0_i32 = arith.constant 0 : i32
    %c0_i32_0 = arith.constant 0 : i32
    %c0_i32_1 = arith.constant 0 : i32
    return %c0_i32, %c0_i32_0 : i32, i32
  }
  func.func @transform_9(%arg0: i32) -> (i32, i32) {
    %c0_i32 = arith.constant 0 : i32
    %c0_i32_0 = arith.constant 0 : i32
    return %arg0, %c0_i32 : i32, i32
  }
}

</mosaic_0001>

<llo_original>
// kernel: lstm_model_forward.1
$region0: #{lstm_model_forward.1}
  #allocation0 [shape = 'u32[]', space=smem, size = 0x4, offset = 0x4, fixed_abs, tag = 'smem constant byte address 0x4 - core index']
  #allocation1 [shape = 'u32[144,128]{1,0:T(1,128)}', space=vmem, size = 0x12000, scoped, tag = 'internal scratch']
  #allocation2 [shape = 'f32[8,8,512]{2,1,0:T(8,128)}', space=vmem, size = 0x20000, scoped, tag = 'scratch operand']
  #allocation3 [shape = 'f32[8,8,128]{2,1,0:T(8,128)}', space=vmem, size = 0x8000, scoped, tag = 'scratch operand']
  %s0 = inlined_call_operand.vmem [shape: f32[8,8,128], index: 0, kind: input, shape index: {}]
  %s1 = inlined_call_operand.hbm [shape: bf16[128,512], index: 1, kind: input, shape index: {}]
  %s2 = inlined_call_operand.hbm [shape: bf16[128,512], index: 2, kind: input, shape index: {}]
  %s3 = inlined_call_operand.vmem [shape: f32[1,512], index: 3, kind: input, shape index: {}]
  %s4 = inlined_call_operand.hbm [shape: bf16[128,512], index: 4, kind: input, shape index: {}]
  %s5 = inlined_call_operand.hbm [shape: bf16[128,512], index: 5, kind: input, shape index: {}]
  %s6 = inlined_call_operand.vmem [shape: f32[1,512], index: 6, kind: input, shape index: {}]
  %s7 = inlined_call_operand.hbm [shape: f32[128,128], index: 7, kind: input, shape index: {}]
  %s8 = inlined_call_operand.vmem [shape: f32[1,128], index: 8, kind: input, shape index: {}]
  %s9 = inlined_call_operand.vmem [shape: f32[8,128], index: 9, kind: output, shape index: {}]
  %s10 = sld [smem:[#allocation0]]
  $region66: #{lstm_model_forward.1} parent=0
    _
  %s12 = ssub.s32 1, %s10
  %s13 = scalar_select 0, %s12, %s10
  $region1: #{lstm_model_forward.1} parent=0
    #allocation4 [shape = 'u8[131072]{0}', space=vmem, size = 0x20000, scoped, tag = 'input window, operand 1, single buffered']
    #allocation5 [shape = 's32[1]{0}', space=sflag, size = 0x4, scoped, tag = 'scoped memory for lstm_model_forward.1']
    #allocation6 [shape = 'u8[131072]{0}', space=vmem, size = 0x20000, scoped, tag = 'input window, operand 2, single buffered']
    #allocation7 [shape = 's32[1]{0}', space=sflag, size = 0x4, scoped, tag = 'scoped memory for lstm_model_forward.1']
    #allocation8 [shape = 'u8[131072]{0}', space=vmem, size = 0x20000, scoped, tag = 'input window, operand 4, single buffered']
    #allocation9 [shape = 'u8[131072]{0}', space=vmem, size = 0x20000, scoped, tag = 'input window, operand 5, single buffered']
    #allocation10 [shape = 's32[1]{0}', space=sflag, size = 0x4, scoped, tag = 'scoped memory for lstm_model_forward.1']
    #allocation11 [shape = 'u8[65536]{0}', space=vmem, size = 0x10000, scoped, tag = 'input window, operand 7, single buffered']
    %14 = vsyncpa [#allocation5], 0
    %15 = vsyncpa [#allocation7], 0
    %16 = vsyncpa [#allocation10], 0
    // Predicated region
    $region2: #{lstm_model_forward.1} parent=1 // pred_check
      _
    $region3: #{lstm_model_forward.1} parent=1 // pred_check_branch
      %18 = sbr.rel (0) target = $region5
    $region4: #{lstm_model_forward.1} parent=1 // pred_region
      _
    $region5: #{lstm_model_forward.1} parent=1 // pred_fallthru
      _
    // Predicated region
    $region6: #{lstm_model_forward.1} parent=1 // pred_check
      _
    $region7: #{lstm_model_forward.1} parent=1 // pred_check_branch
      %20 = sbr.rel (0) target = $region9
    $region8: #{lstm_model_forward.1} parent=1 // pred_region
      %s22 = ssub.s32 4096, 4096
      %23 = vsyncadd [#allocation5], %s22
      %s24 = sshll.u32 [#allocation4], 4
      %s25 = int_to_ptr.vmem [resolvable:$true] %s24
      %30 = dma.hbm_to_vmem [thread:$0]  %s1, 4096, %s25, [#allocation5], 256, 256, 16
    $region9: #{lstm_model_forward.1} parent=1 // pred_fallthru
      _
    // Predicated region
    $region10: #{lstm_model_forward.1} parent=1 // pred_check
      _
    $region11: #{lstm_model_forward.1} parent=1 // pred_check_branch
      %32 = sbr.rel (0) target = $region13
    $region12: #{lstm_model_forward.1} parent=1 // pred_region
      %s34 = ssub.s32 4096, 4096
      %35 = vsyncadd [#allocation7], %s34
      %s36 = sshll.u32 [#allocation6], 4
      %s37 = int_to_ptr.vmem [resolvable:$true] %s36
      %42 = dma.hbm_to_vmem [thread:$0]  %s2, 4096, %s37, [#allocation7], 256, 256, 16
    $region13: #{lstm_model_forward.1} parent=1 // pred_fallthru
      _
    // Predicated region
    $region14: #{lstm_model_forward.1} parent=1 // pred_check
      _
    $region15: #{lstm_model_forward.1} parent=1 // pred_check_branch
      %44 = sbr.rel (0) target = $region17
    $region16: #{lstm_model_forward.1} parent=1 // pred_region
      _
    $region17: #{lstm_model_forward.1} parent=1 // pred_fallthru
      _
    // Predicated region
    $region18: #{lstm_model_forward.1} parent=1 // pred_check
      _
    $region19: #{lstm_model_forward.1} parent=1 // pred_check_branch
      %46 = sbr.rel (0) target = $region21
    $region20: #{lstm_model_forward.1} parent=1 // pred_region
      %s48 = ssub.s32 4096, 4096
      %49 = vsyncadd [#allocation7], %s48
      %s50 = sshll.u32 [#allocation8], 4
      %s51 = int_to_ptr.vmem [resolvable:$true] %s50
      %56 = dma.hbm_to_vmem [thread:$0]  %s4, 4096, %s51, [#allocation7], 256, 256, 16
    $region21: #{lstm_model_forward.1} parent=1 // pred_fallthru
      _
    // Predicated region
    $region22: #{lstm_model_forward.1} parent=1 // pred_check
      _
    $region23: #{lstm_model_forward.1} parent=1 // pred_check_branch
      %58 = sbr.rel (0) target = $region25
    $region24: #{lstm_model_forward.1} parent=1 // pred_region
      %s60 = ssub.s32 4096, 4096
      %61 = vsyncadd [#allocation10], %s60
      %s62 = sshll.u32 [#allocation9], 4
      %s63 = int_to_ptr.vmem [resolvable:$true] %s62
      %68 = dma.hbm_to_vmem [thread:$0]  %s5, 4096, %s63, [#allocation10], 256, 256, 16
    $region25: #{lstm_model_forward.1} parent=1 // pred_fallthru
      _
    // Predicated region
    $region26: #{lstm_model_forward.1} parent=1 // pred_check
      _
    $region27: #{lstm_model_forward.1} parent=1 // pred_check_branch
      %70 = sbr.rel (0) target = $region29
    $region28: #{lstm_model_forward.1} parent=1 // pred_region
      _
    $region29: #{lstm_model_forward.1} parent=1 // pred_fallthru
      _
    // Predicated region
    $region30: #{lstm_model_forward.1} parent=1 // pred_check
      _
    $region31: #{lstm_model_forward.1} parent=1 // pred_check_branch
      %72 = sbr.rel (0) target = $region33
    $region32: #{lstm_model_forward.1} parent=1 // pred_region
      %s74 = ssub.s32 2048, 2048
      %75 = vsyncadd [#allocation10], %s74
      %s76 = sshll.u32 [#allocation11], 4
      %s77 = int_to_ptr.vmem [resolvable:$true] %s76
      %82 = dma.hbm_to_vmem [thread:$0]  %s7, 2048, %s77, [#allocation10], 128, 128, 8
    $region33: #{lstm_model_forward.1} parent=1 // pred_fallthru
      _
    // Predicated region
    $region34: #{lstm_model_forward.1} parent=1 // pred_check
      _
    $region35: #{lstm_model_forward.1} parent=1 // pred_check_branch
      %84 = sbr.rel (0) target = $region37
    $region36: #{lstm_model_forward.1} parent=1 // pred_region
      _
    $region37: #{lstm_model_forward.1} parent=1 // pred_fallthru
      _
    // Predicated region
    $region38: #{lstm_model_forward.1} parent=1 // pred_check
      _
    $region39: #{lstm_model_forward.1} parent=1 // pred_check_branch
      %86 = sbr.rel (0) target = $region41
    $region40: #{lstm_model_forward.1} parent=1 // pred_region
      %87 = dma.done [#allocation5], 4096
    $region41: #{lstm_model_forward.1} parent=1 // pred_fallthru
      _
    // Predicated region
    $region42: #{lstm_model_forward.1} parent=1 // pred_check
      _
    $region43: #{lstm_model_forward.1} parent=1 // pred_check_branch
      %89 = sbr.rel (0) target = $region45
    $region44: #{lstm_model_forward.1} parent=1 // pred_region
      %90 = dma.done [#allocation7], 4096
    $region45: #{lstm_model_forward.1} parent=1 // pred_fallthru
      _
    // Predicated region
    $region46: #{lstm_model_forward.1} parent=1 // pred_check
      _
    $region47: #{lstm_model_forward.1} parent=1 // pred_check_branch
      %92 = sbr.rel (0) target = $region49
    $region48: #{lstm_model_forward.1} parent=1 // pred_region
      %93 = dma.done [#allocation7], 4096
    $region49: #{lstm_model_forward.1} parent=1 // pred_fallthru
      _
    // Predicated region
    $region50: #{lstm_model_forward.1} parent=1 // pred_check
      _
    $region51: #{lstm_model_forward.1} parent=1 // pred_check_branch
      %95 = sbr.rel (0) target = $region53
    $region52: #{lstm_model_forward.1} parent=1 // pred_region
      %96 = dma.done [#allocation10], 4096
    $region53: #{lstm_model_forward.1} parent=1 // pred_fallthru
      _
    // Predicated region
    $region54: #{lstm_model_forward.1} parent=1 // pred_check
      _
    $region55: #{lstm_model_forward.1} parent=1 // pred_check_branch
      %98 = sbr.rel (0) target = $region57
    $region56: #{lstm_model_forward.1} parent=1 // pred_region
      %99 = dma.done [#allocation10], 2048
    $region57: #{lstm_model_forward.1} parent=1 // pred_fallthru
      _
    %v101 = vld [vmem:[%s0] sm:$0xff]
    %v102 = vld [vmem:[%s0 + $0x8] sm:$0xff]
    %v103 = vld [vmem:[%s0 + $0x10] sm:$0xff]
    %v104 = vld [vmem:[%s0 + $0x18] sm:$0xff]
    %v105 = vld [vmem:[%s0 + $0x20] sm:$0xff]
    %v106 = vld [vmem:[%s0 + $0x28] sm:$0xff]
    %v107 = vld [vmem:[%s0 + $0x30] sm:$0xff]
    %v108 = vld [vmem:[%s0 + $0x38] sm:$0xff]
    %v109 = vpack.c.bf16 %v102, %v101
    %v110 = vpack.c.bf16 %v104, %v103
    %v111 = vpack.c.bf16 %v106, %v105
    %v112 = vpack.c.bf16 %v108, %v107
    %v113 = vld [vmem:[#allocation4] sm:$0xff]
    %v114 = vld [vmem:[#allocation4 + $0x8] sm:$0xff]
    %v115 = vld [vmem:[#allocation4 + $0x10] sm:$0xff]
    %v116 = vld [vmem:[#allocation4 + $0x18] sm:$0xff]
    %v117 = vld [vmem:[#allocation4 + $0x20] sm:$0xff]
    %v118 = vld [vmem:[#allocation4 + $0x28] sm:$0xff]
    %v119 = vld [vmem:[#allocation4 + $0x30] sm:$0xff]
    %v120 = vld [vmem:[#allocation4 + $0x38] sm:$0xff]
    %v121 = vld [vmem:[#allocation4 + $0x40] sm:$0xff]
    %v122 = vld [vmem:[#allocation4 + $0x48] sm:$0xff]
    %v123 = vld [vmem:[#allocation4 + $0x50] sm:$0xff]
    %v124 = vld [vmem:[#allocation4 + $0x58] sm:$0xff]
    %v125 = vld [vmem:[#allocation4 + $0x60] sm:$0xff]
    %v126 = vld [vmem:[#allocation4 + $0x68] sm:$0xff]
    %v127 = vld [vmem:[#allocation4 + $0x70] sm:$0xff]
    %v128 = vld [vmem:[#allocation4 + $0x78] sm:$0xff]
    %v129 = vld [vmem:[#allocation4 + $0x80] sm:$0xff]
    %v130 = vld [vmem:[#allocation4 + $0x88] sm:$0xff]
    %v131 = vld [vmem:[#allocation4 + $0x90] sm:$0xff]
    %v132 = vld [vmem:[#allocation4 + $0x98] sm:$0xff]
    %v133 = vld [vmem:[#allocation4 + $0xa0] sm:$0xff]
    %v134 = vld [vmem:[#allocation4 + $0xa8] sm:$0xff]
    %v135 = vld [vmem:[#allocation4 + $0xb0] sm:$0xff]
    %v136 = vld [vmem:[#allocation4 + $0xb8] sm:$0xff]
    %v137 = vld [vmem:[#allocation4 + $0xc0] sm:$0xff]
    %v138 = vld [vmem:[#allocation4 + $0xc8] sm:$0xff]
    %v139 = vld [vmem:[#allocation4 + $0xd0] sm:$0xff]
    %v140 = vld [vmem:[#allocation4 + $0xd8] sm:$0xff]
    %v141 = vld [vmem:[#allocation4 + $0xe0] sm:$0xff]
    %v142 = vld [vmem:[#allocation4 + $0xe8] sm:$0xff]
    %v143 = vld [vmem:[#allocation4 + $0xf0] sm:$0xff]
    %v144 = vld [vmem:[#allocation4 + $0xf8] sm:$0xff]
    %v145 = vld [vmem:[%s3] sm:$0xf]
    %v147 = vlaneseq
    %v148 = vshrl.u32 %v147, 7
    %v149 = vsub.s32 0, %v148
    %v150 = vrot.slane %v145, %v149
    %v151 = vlaneseq
    %v152 = vshrl.u32 %v151, 7
    %v153 = vsub.s32 1, %v152
    %v154 = vrot.slane %v145, %v153
    %v155 = vlaneseq
    %v156 = vshrl.u32 %v155, 7
    %v157 = vsub.s32 2, %v156
    %v158 = vrot.slane %v145, %v157
    %v159 = vlaneseq
    %v160 = vshrl.u32 %v159, 7
    %v161 = vsub.s32 3, %v160
    %v162 = vrot.slane %v145, %v161
    %v199 = vunpack.c.l.b16 %v113
    %v200 = vunpack.c.h.b16 %v113
    %v201 = vunpack.c.l.b16 %v114
    %v202 = vunpack.c.h.b16 %v114
    %v203 = vunpack.c.l.b16 %v115
    %v204 = vunpack.c.h.b16 %v115
    %v205 = vunpack.c.l.b16 %v116
    %v206 = vunpack.c.h.b16 %v116
    %v207 = vunpack.c.l.b16 %v117
    %v208 = vunpack.c.h.b16 %v117
    %v209 = vunpack.c.l.b16 %v118
    %v210 = vunpack.c.h.b16 %v118
    %v211 = vunpack.c.l.b16 %v119
    %v212 = vunpack.c.h.b16 %v119
    %v213 = vunpack.c.l.b16 %v120
    %v214 = vunpack.c.h.b16 %v120
    %v215 = vunpack.c.l.b16 %v121
    %v216 = vunpack.c.h.b16 %v121
    %v217 = vunpack.c.l.b16 %v122
    %v218 = vunpack.c.h.b16 %v122
    %v219 = vunpack.c.l.b16 %v123
    %v220 = vunpack.c.h.b16 %v123
    %v221 = vunpack.c.l.b16 %v124
    %v222 = vunpack.c.h.b16 %v124
    %v223 = vunpack.c.l.b16 %v125
    %v224 = vunpack.c.h.b16 %v125
    %v225 = vunpack.c.l.b16 %v126
    %v226 = vunpack.c.h.b16 %v126
    %v227 = vunpack.c.l.b16 %v127
    %v228 = vunpack.c.h.b16 %v127
    %v229 = vunpack.c.l.b16 %v128
    %v230 = vunpack.c.h.b16 %v128
    %v231 = vunpack.c.l.b16 %v129
    %v232 = vunpack.c.h.b16 %v129
    %v233 = vunpack.c.l.b16 %v130
    %v234 = vunpack.c.h.b16 %v130
    %v235 = vunpack.c.l.b16 %v131
    %v236 = vunpack.c.h.b16 %v131
    %v237 = vunpack.c.l.b16 %v132
    %v238 = vunpack.c.h.b16 %v132
    %v239 = vunpack.c.l.b16 %v133
    %v240 = vunpack.c.h.b16 %v133
    %v241 = vunpack.c.l.b16 %v134
    %v242 = vunpack.c.h.b16 %v134
    %v243 = vunpack.c.l.b16 %v135
    %v244 = vunpack.c.h.b16 %v135
    %v245 = vunpack.c.l.b16 %v136
    %v246 = vunpack.c.h.b16 %v136
    %v247 = vunpack.c.l.b16 %v137
    %v248 = vunpack.c.h.b16 %v137
    %v249 = vunpack.c.l.b16 %v138
    %v250 = vunpack.c.h.b16 %v138
    %v251 = vunpack.c.l.b16 %v139
    %v252 = vunpack.c.h.b16 %v139
    %v253 = vunpack.c.l.b16 %v140
    %v254 = vunpack.c.h.b16 %v140
    %v255 = vunpack.c.l.b16 %v141
    %v256 = vunpack.c.h.b16 %v141
    %v257 = vunpack.c.l.b16 %v142
    %v258 = vunpack.c.h.b16 %v142
    %v259 = vunpack.c.l.b16 %v143
    %v260 = vunpack.c.h.b16 %v143
    %v261 = vunpack.c.l.b16 %v144
    %v262 = vunpack.c.h.b16 %v144
    %v263 = vpack.c.b16 %v203, %v199
    %v264 = vpack.c.b16 %v204, %v200
    %v265 = vpack.c.b16 %v205, %v201
    %v266 = vpack.c.b16 %v206, %v202
    %v267 = vpack.c.b16 %v211, %v207
    %v268 = vpack.c.b16 %v212, %v208
    %v269 = vpack.c.b16 %v213, %v209
    %v270 = vpack.c.b16 %v214, %v210
    %v271 = vpack.c.b16 %v219, %v215
    %v272 = vpack.c.b16 %v220, %v216
    %v273 = vpack.c.b16 %v221, %v217
    %v274 = vpack.c.b16 %v222, %v218
    %v275 = vpack.c.b16 %v227, %v223
    %v276 = vpack.c.b16 %v228, %v224
    %v277 = vpack.c.b16 %v229, %v225
    %v278 = vpack.c.b16 %v230, %v226
    %v279 = vpack.c.b16 %v235, %v231
    %v280 = vpack.c.b16 %v236, %v232
    %v281 = vpack.c.b16 %v237, %v233
    %v282 = vpack.c.b16 %v238, %v234
    %v283 = vpack.c.b16 %v243, %v239
    %v284 = vpack.c.b16 %v244, %v240
    %v285 = vpack.c.b16 %v245, %v241
    %v286 = vpack.c.b16 %v246, %v242
    %v287 = vpack.c.b16 %v251, %v247
    %v288 = vpack.c.b16 %v252, %v248
    %v289 = vpack.c.b16 %v253, %v249
    %v290 = vpack.c.b16 %v254, %v250
    %v291 = vpack.c.b16 %v259, %v255
    %v292 = vpack.c.b16 %v260, %v256
    %v293 = vpack.c.b16 %v261, %v257
    %v294 = vpack.c.b16 %v262, %v258
    %327 = vmatprep.subr.bf16.mxu0 %v264
    %328 = vmatpush1.bf16.msra.mxu0 %v263
    %329 = vmatprep.subr.bf16.mxu0 %v268
    %330 = vmatpush1.bf16.msra.mxu0 %v267
    %331 = vmatprep.subr.bf16.mxu0 %v272
    %332 = vmatpush1.bf16.msra.mxu0 %v271
    %333 = vmatprep.subr.bf16.mxu0 %v276
    %334 = vmatpush1.bf16.msra.mxu0 %v275
    %335 = vmatprep.subr.bf16.mxu0 %v280
    %336 = vmatpush1.bf16.msra.mxu0 %v279
    %337 = vmatprep.subr.bf16.mxu0 %v284
    %338 = vmatpush1.bf16.msra.mxu0 %v283
    %339 = vmatprep.subr.bf16.mxu0 %v288
    %340 = vmatpush1.bf16.msra.mxu0 %v287
    %341 = vmatprep.subr.bf16.mxu0 %v292
    %342 = vmatpush1.bf16.msra.mxu0 %v291
    %343 = vmatprep.subr.bf16.mxu0 0
    %344 = vmatpush1.bf16.msra.mxu0 0
    %345 = vmatprep.subr.bf16.mxu0 0
    %346 = vmatpush1.bf16.msra.mxu0 0
    %347 = vmatprep.subr.bf16.mxu0 0
    %348 = vmatpush1.bf16.msra.mxu0 0
    %349 = vmatprep.subr.bf16.mxu0 0
    %350 = vmatpush1.bf16.msra.mxu0 0
    %351 = vmatprep.subr.bf16.mxu0 0
    %352 = vmatpush1.bf16.msra.mxu0 0
    %353 = vmatprep.subr.bf16.mxu0 0
    %354 = vmatpush1.bf16.msra.mxu0 0
    %355 = vmatprep.subr.bf16.mxu0 0
    %356 = vmatpush1.bf16.msra.mxu0 0
    %357 = vmatprep.subr.bf16.mxu0 0
    %358 = vmatpush1.bf16.msra.mxu0 0
    %359 = vmatprep.mubr.bf16.mxu0 0
    %360 = vmatmul.mubr.bf16.gmra.mrb[0].mxu0 %v109
    %v361 = vpop.f32.mrb[0].mxu0
    %v362 = vadd.f32 %v150, %v361
    %v363 = vpop.f32.mrb[0].mxu0
    %v364 = vadd.f32 %v154, %v363
    %v365 = vpop.f32.mrb[0].mxu0
    %v366 = vadd.f32 %v150, %v365
    %v367 = vpop.f32.mrb[0].mxu0
    %v368 = vadd.f32 %v154, %v367
    %369 = vmatprep.mubr.bf16.mxu0 0
    %370 = vmatmul.mubr.bf16.gmra.mrb[0].mxu0 %v110
    %v371 = vpop.f32.mrb[0].mxu0
    %v372 = vadd.f32 %v150, %v371
    %v373 = vpop.f32.mrb[0].mxu0
    %v374 = vadd.f32 %v154, %v373
    %v375 = vpop.f32.mrb[0].mxu0
    %v376 = vadd.f32 %v150, %v375
    %v377 = vpop.f32.mrb[0].mxu0
    %v378 = vadd.f32 %v154, %v377
    %379 = vmatprep.mubr.bf16.mxu0 0
    %380 = vmatmul.mubr.bf16.gmra.mrb[0].mxu0 %v111
    %v381 = vpop.f32.mrb[0].mxu0
    %v382 = vadd.f32 %v150, %v381
    %v383 = vpop.f32.mrb[0].mxu0
    %v384 = vadd.f32 %v154, %v383
    %v385 = vpop.f32.mrb[0].mxu0
    %v386 = vadd.f32 %v150, %v385
    %v387 = vpop.f32.mrb[0].mxu0
    %v388 = vadd.f32 %v154, %v387
    %389 = vmatprep.mubr.bf16.mxu0 0
    %390 = vmatmul.mubr.bf16.gmra.mrb[0].mxu0 %v112
    %v391 = vpop.f32.mrb[0].mxu0
    %v392 = vadd.f32 %v150, %v391
    %v393 = vpop.f32.mrb[0].mxu0
    %v394 = vadd.f32 %v154, %v393
    %v395 = vpop.f32.mrb[0].mxu0
    %v396 = vadd.f32 %v150, %v395
    %v397 = vpop.f32.mrb[0].mxu0
    %v398 = vadd.f32 %v154, %v397
    %399 = vdwg.mxu0
    %400 = vmatprep.subr.bf16.mxu0 %v266
    %401 = vmatpush1.bf16.msra.mxu0 %v265
    %402 = vmatprep.subr.bf16.mxu0 %v270
    %403 = vmatpush1.bf16.msra.mxu0 %v269
    %404 = vmatprep.subr.bf16.mxu0 %v274
    %405 = vmatpush1.bf16.msra.mxu0 %v273
    %406 = vmatprep.subr.bf16.mxu0 %v278
    %407 = vmatpush1.bf16.msra.mxu0 %v277
    %408 = vmatprep.subr.bf16.mxu0 %v282
    %409 = vmatpush1.bf16.msra.mxu0 %v281
    %410 = vmatprep.subr.bf16.mxu0 %v286
    %411 = vmatpush1.bf16.msra.mxu0 %v285
    %412 = vmatprep.subr.bf16.mxu0 %v290
    %413 = vmatpush1.bf16.msra.mxu0 %v289
    %414 = vmatprep.subr.bf16.mxu0 %v294
    %415 = vmatpush1.bf16.msra.mxu0 %v293
    %416 = vmatprep.subr.bf16.mxu0 0
    %417 = vmatpush1.bf16.msra.mxu0 0
    %418 = vmatprep.subr.bf16.mxu0 0
    %419 = vmatpush1.bf16.msra.mxu0 0
    %420 = vmatprep.subr.bf16.mxu0 0
    %421 = vmatpush1.bf16.msra.mxu0 0
    %422 = vmatprep.subr.bf16.mxu0 0
    %423 = vmatpush1.bf16.msra.mxu0 0
    %424 = vmatprep.subr.bf16.mxu0 0
    %425 = vmatpush1.bf16.msra.mxu0 0
    %426 = vmatprep.subr.bf16.mxu0 0
    %427 = vmatpush1.bf16.msra.mxu0 0
    %428 = vmatprep.subr.bf16.mxu0 0
    %429 = vmatpush1.bf16.msra.mxu0 0
    %430 = vmatprep.subr.bf16.mxu0 0
    %431 = vmatpush1.bf16.msra.mxu0 0
    %432 = vmatprep.mubr.bf16.mxu0 0
    %433 = vmatmul.mubr.bf16.gmra.mrb[0].mxu0 %v109
    %v434 = vpop.f32.mrb[0].mxu0
    %v435 = vadd.f32 %v158, %v434
    %v436 = vpop.f32.mrb[0].mxu0
    %v437 = vadd.f32 %v162, %v436
    %v438 = vpop.f32.mrb[0].mxu0
    %v439 = vadd.f32 %v158, %v438
    %v440 = vpop.f32.mrb[0].mxu0
    %v441 = vadd.f32 %v162, %v440
    %442 = vmatprep.mubr.bf16.mxu0 0
    %443 = vmatmul.mubr.bf16.gmra.mrb[0].mxu0 %v110
    %v444 = vpop.f32.mrb[0].mxu0
    %v445 = vadd.f32 %v158, %v444
    %v446 = vpop.f32.mrb[0].mxu0
    %v447 = vadd.f32 %v162, %v446
    %v448 = vpop.f32.mrb[0].mxu0
    %v449 = vadd.f32 %v158, %v448
    %v450 = vpop.f32.mrb[0].mxu0
    %v451 = vadd.f32 %v162, %v450
    %452 = vmatprep.mubr.bf16.mxu0 0
    %453 = vmatmul.mubr.bf16.gmra.mrb[0].mxu0 %v111
    %v454 = vpop.f32.mrb[0].mxu0
    %v455 = vadd.f32 %v158, %v454
    %v456 = vpop.f32.mrb[0].mxu0
    %v457 = vadd.f32 %v162, %v456
    %v458 = vpop.f32.mrb[0].mxu0
    %v459 = vadd.f32 %v158, %v458
    %v460 = vpop.f32.mrb[0].mxu0
    %v461 = vadd.f32 %v162, %v460
    %462 = vmatprep.mubr.bf16.mxu0 0
    %463 = vmatmul.mubr.bf16.gmra.mrb[0].mxu0 %v112
    %v464 = vpop.f32.mrb[0].mxu0
    %v465 = vadd.f32 %v158, %v464
    %v466 = vpop.f32.mrb[0].mxu0
    %v467 = vadd.f32 %v162, %v466
    %v468 = vpop.f32.mrb[0].mxu0
    %v469 = vadd.f32 %v158, %v468
    %v470 = vpop.f32.mrb[0].mxu0
    %v471 = vadd.f32 %v162, %v470
    %472 = vdwg.mxu0
    %473 = vst [vmem:[#allocation2] sm:$0xff] %v362
    %474 = vst [vmem:[#allocation2 + $0x8] sm:$0xff] %v364
    %475 = vst [vmem:[#allocation2 + $0x10] sm:$0xff] %v435
    %476 = vst [vmem:[#allocation2 + $0x18] sm:$0xff] %v437
    %477 = vst [vmem:[#allocation2 + $0x20] sm:$0xff] %v366
    %478 = vst [vmem:[#allocation2 + $0x28] sm:$0xff] %v368
    %479 = vst [vmem:[#allocation2 + $0x30] sm:$0xff] %v439
    %480 = vst [vmem:[#allocation2 + $0x38] sm:$0xff] %v441
    %481 = vst [vmem:[#allocation2 + $0x40] sm:$0xff] %v372
    %482 = vst [vmem:[#allocation2 + $0x48] sm:$0xff] %v374
    %483 = vst [vmem:[#allocation2 + $0x50] sm:$0xff] %v445
    %484 = vst [vmem:[#allocation2 + $0x58] sm:$0xff] %v447
    %485 = vst [vmem:[#allocation2 + $0x60] sm:$0xff] %v376
    %486 = vst [vmem:[#allocation2 + $0x68] sm:$0xff] %v378
    %487 = vst [vmem:[#allocation2 + $0x70] sm:$0xff] %v449
    %488 = vst [vmem:[#allocation2 + $0x78] sm:$0xff] %v451
    %489 = vst [vmem:[#allocation2 + $0x80] sm:$0xff] %v382
    %490 = vst [vmem:[#allocation2 + $0x88] sm:$0xff] %v384
    %491 = vst [vmem:[#allocation2 + $0x90] sm:$0xff] %v455
    %492 = vst [vmem:[#allocation2 + $0x98] sm:$0xff] %v457
    %493 = vst [vmem:[#allocation2 + $0xa0] sm:$0xff] %v386
    %494 = vst [vmem:[#allocation2 + $0xa8] sm:$0xff] %v388
    %495 = vst [vmem:[#allocation2 + $0xb0] sm:$0xff] %v459
    %496 = vst [vmem:[#allocation2 + $0xb8] sm:$0xff] %v461
    %497 = vst [vmem:[#allocation2 + $0xc0] sm:$0xff] %v392
    %498 = vst [vmem:[#allocation2 + $0xc8] sm:$0xff] %v394
    %499 = vst [vmem:[#allocation2 + $0xd0] sm:$0xff] %v465
    %500 = vst [vmem:[#allocation2 + $0xd8] sm:$0xff] %v467
    %501 = vst [vmem:[#allocation2 + $0xe0] sm:$0xff] %v396
    %502 = vst [vmem:[#allocation2 + $0xe8] sm:$0xff] %v398
    %503 = vst [vmem:[#allocation2 + $0xf0] sm:$0xff] %v469
    %504 = vst [vmem:[#allocation2 + $0xf8] sm:$0xff] %v471
    %v505 = vld [vmem:[#allocation2] sm:$0xff]
    %v506 = vld [vmem:[#allocation2 + $0x8] sm:$0xff]
    %v507 = vld [vmem:[#allocation2 + $0x10] sm:$0xff]
    %v508 = vld [vmem:[#allocation2 + $0x18] sm:$0xff]
    %v509 = vld [vmem:[#allocation6] sm:$0xff]
    %v510 = vld [vmem:[#allocation6 + $0x8] sm:$0xff]
    %v511 = vld [vmem:[#allocation6 + $0x10] sm:$0xff]
    %v512 = vld [vmem:[#allocation6 + $0x18] sm:$0xff]
    %v513 = vld [vmem:[#allocation6 + $0x20] sm:$0xff]
    %v514 = vld [vmem:[#allocation6 + $0x28] sm:$0xff]
    %v515 = vld [vmem:[#allocation6 + $0x30] sm:$0xff]
    %v516 = vld [vmem:[#allocation6 + $0x38] sm:$0xff]
    %v517 = vld [vmem:[#allocation6 + $0x40] sm:$0xff]
    %v518 = vld [vmem:[#allocation6 + $0x48] sm:$0xff]
    %v519 = vld [vmem:[#allocation6 + $0x50] sm:$0xff]
    %v520 = vld [vmem:[#allocation6 + $0x58] sm:$0xff]
    %v521 = vld [vmem:[#allocation6 + $0x60] sm:$0xff]
    %v522 = vld [vmem:[#allocation6 + $0x68] sm:$0xff]
    %v523 = vld [vmem:[#allocation6 + $0x70] sm:$0xff]
    %v524 = vld [vmem:[#allocation6 + $0x78] sm:$0xff]
    %v525 = vld [vmem:[#allocation6 + $0x80] sm:$0xff]
    %v526 = vld [vmem:[#allocation6 + $0x88] sm:$0xff]
    %v527 = vld [vmem:[#allocation6 + $0x90] sm:$0xff]
    %v528 = vld [vmem:[#allocation6 + $0x98] sm:$0xff]
    %v529 = vld [vmem:[#allocation6 + $0xa0] sm:$0xff]
    %v530 = vld [vmem:[#allocation6 + $0xa8] sm:$0xff]
    %v531 = vld [vmem:[#allocation6 + $0xb0] sm:$0xff]
    %v532 = vld [vmem:[#allocation6 + $0xb8] sm:$0xff]
    %v533 = vld [vmem:[#allocation6 + $0xc0] sm:$0xff]
    %v534 = vld [vmem:[#allocation6 + $0xc8] sm:$0xff]
    %v535 = vld [vmem:[#allocation6 + $0xd0] sm:$0xff]
    %v536 = vld [vmem:[#allocation6 + $0xd8] sm:$0xff]
    %v537 = vld [vmem:[#allocation6 + $0xe0] sm:$0xff]
    %v538 = vld [vmem:[#allocation6 + $0xe8] sm:$0xff]
    %v539 = vld [vmem:[#allocation6 + $0xf0] sm:$0xff]
    %v540 = vld [vmem:[#allocation6 + $0xf8] sm:$0xff]
    %v573 = vunpack.c.l.b16 %v509
    %v574 = vunpack.c.h.b16 %v509
    %v575 = vunpack.c.l.b16 %v510
    %v576 = vunpack.c.h.b16 %v510
    %v577 = vunpack.c.l.b16 %v511
    %v578 = vunpack.c.h.b16 %v511
    %v579 = vunpack.c.l.b16 %v512
    %v580 = vunpack.c.h.b16 %v512
    %v581 = vunpack.c.l.b16 %v513
    %v582 = vunpack.c.h.b16 %v513
    %v583 = vunpack.c.l.b16 %v514
    %v584 = vunpack.c.h.b16 %v514
    %v585 = vunpack.c.l.b16 %v515
    %v586 = vunpack.c.h.b16 %v515
    %v587 = vunpack.c.l.b16 %v516
    %v588 = vunpack.c.h.b16 %v516
    %v589 = vunpack.c.l.b16 %v517
    %v590 = vunpack.c.h.b16 %v517
    %v591 = vunpack.c.l.b16 %v518
    %v592 = vunpack.c.h.b16 %v518
    %v593 = vunpack.c.l.b16 %v519
    %v594 = vunpack.c.h.b16 %v519
    %v595 = vunpack.c.l.b16 %v520
    %v596 = vunpack.c.h.b16 %v520
    %v597 = vunpack.c.l.b16 %v521
    %v598 = vunpack.c.h.b16 %v521
    %v599 = vunpack.c.l.b16 %v522
    %v600 = vunpack.c.h.b16 %v522
    %v601 = vunpack.c.l.b16 %v523
    %v602 = vunpack.c.h.b16 %v523
    %v603 = vunpack.c.l.b16 %v524
    %v604 = vunpack.c.h.b16 %v524
    %v605 = vunpack.c.l.b16 %v525
    %v606 = vunpack.c.h.b16 %v525
    %v607 = vunpack.c.l.b16 %v526
    %v608 = vunpack.c.h.b16 %v526
    %v609 = vunpack.c.l.b16 %v527
    %v610 = vunpack.c.h.b16 %v527
    %v611 = vunpack.c.l.b16 %v528
    %v612 = vunpack.c.h.b16 %v528
    %v613 = vunpack.c.l.b16 %v529
    %v614 = vunpack.c.h.b16 %v529
    %v615 = vunpack.c.l.b16 %v530
    %v616 = vunpack.c.h.b16 %v530
    %v617 = vunpack.c.l.b16 %v531
    %v618 = vunpack.c.h.b16 %v531
    %v619 = vunpack.c.l.b16 %v532
    %v620 = vunpack.c.h.b16 %v532
    %v621 = vunpack.c.l.b16 %v533
    %v622 = vunpack.c.h.b16 %v533
    %v623 = vunpack.c.l.b16 %v534
    %v624 = vunpack.c.h.b16 %v534
    %v625 = vunpack.c.l.b16 %v535
    %v626 = vunpack.c.h.b16 %v535
    %v627 = vunpack.c.l.b16 %v536
    %v628 = vunpack.c.h.b16 %v536
    %v629 = vunpack.c.l.b16 %v537
    %v630 = vunpack.c.h.b16 %v537
    %v631 = vunpack.c.l.b16 %v538
    %v632 = vunpack.c.h.b16 %v538
    %v633 = vunpack.c.l.b16 %v539
    %v634 = vunpack.c.h.b16 %v539
    %v635 = vunpack.c.l.b16 %v540
    %v636 = vunpack.c.h.b16 %v540
    %v637 = vpack.c.b16 %v577, %v573
    %v638 = vpack.c.b16 %v578, %v574
    %v639 = vpack.c.b16 %v579, %v575
    %v640 = vpack.c.b16 %v580, %v576
    %v641 = vpack.c.b16 %v585, %v581
    %v642 = vpack.c.b16 %v586, %v582
    %v643 = vpack.c.b16 %v587, %v583
    %v644 = vpack.c.b16 %v588, %v584
    %v645 = vpack.c.b16 %v593, %v589
    %v646 = vpack.c.b16 %v594, %v590
    %v647 = vpack.c.b16 %v595, %v591
    %v648 = vpack.c.b16 %v596, %v592
    %v649 = vpack.c.b16 %v601, %v597
    %v650 = vpack.c.b16 %v602, %v598
    %v651 = vpack.c.b16 %v603, %v599
    %v652 = vpack.c.b16 %v604, %v600
    %v653 = vpack.c.b16 %v609, %v605
    %v654 = vpack.c.b16 %v610, %v606
    %v655 = vpack.c.b16 %v611, %v607
    %v656 = vpack.c.b16 %v612, %v608
    %v657 = vpack.c.b16 %v617, %v613
    %v658 = vpack.c.b16 %v618, %v614
    %v659 = vpack.c.b16 %v619, %v615
    %v660 = vpack.c.b16 %v620, %v616
    %v661 = vpack.c.b16 %v625, %v621
    %v662 = vpack.c.b16 %v626, %v622
    %v663 = vpack.c.b16 %v627, %v623
    %v664 = vpack.c.b16 %v628, %v624
    %v665 = vpack.c.b16 %v633, %v629
    %v666 = vpack.c.b16 %v634, %v630
    %v667 = vpack.c.b16 %v635, %v631
    %v668 = vpack.c.b16 %v636, %v632
    %701 = vmatprep.subr.bf16.mxu0 %v638
    %702 = vmatpush1.bf16.msra.mxu0 %v637
    %703 = vmatprep.subr.bf16.mxu0 %v642
    %704 = vmatpush1.bf16.msra.mxu0 %v641
    %705 = vmatprep.subr.bf16.mxu0 %v646
    %706 = vmatpush1.bf16.msra.mxu0 %v645
    %707 = vmatprep.subr.bf16.mxu0 %v650
    %708 = vmatpush1.bf16.msra.mxu0 %v649
    %709 = vmatprep.subr.bf16.mxu0 %v654
    %710 = vmatpush1.bf16.msra.mxu0 %v653
    %711 = vmatprep.subr.bf16.mxu0 %v658
    %712 = vmatpush1.bf16.msra.mxu0 %v657
    %713 = vmatprep.subr.bf16.mxu0 %v662
    %714 = vmatpush1.bf16.msra.mxu0 %v661
    %715 = vmatprep.subr.bf16.mxu0 %v666
    %716 = vmatpush1.bf16.msra.mxu0 %v665
    %717 = vmatprep.subr.bf16.mxu0 0
    %718 = vmatpush1.bf16.msra.mxu0 0
    %719 = vmatprep.subr.bf16.mxu0 0
    %720 = vmatpush1.bf16.msra.mxu0 0
    %721 = vmatprep.subr.bf16.mxu0 0
    %722 = vmatpush1.bf16.msra.mxu0 0
    %723 = vmatprep.subr.bf16.mxu0 0
    %724 = vmatpush1.bf16.msra.mxu0 0
    %725 = vmatprep.subr.bf16.mxu0 0
    %726 = vmatpush1.bf16.msra.mxu0 0
    %727 = vmatprep.subr.bf16.mxu0 0
    %728 = vmatpush1.bf16.msra.mxu0 0
    %729 = vmatprep.subr.bf16.mxu0 0
    %730 = vmatpush1.bf16.msra.mxu0 0
    %731 = vmatprep.subr.bf16.mxu0 0
    %732 = vmatpush1.bf16.msra.mxu0 0
    %733 = vmatprep.mubr.bf16.mxu0 0
    %734 = vmatmul.mubr.bf16.gmra.mrb[0].mxu0 0
    %v735 = vpop.f32.mrb[0].mxu0
    %v736 = vadd.f32 0.0, %v735
    %v737 = vpop.f32.mrb[0].mxu0
    %v738 = vadd.f32 0.0, %v737
    %v739 = vpop.f32.mrb[0].mxu0
    %v740 = vpop.f32.mrb[0].mxu0
    %741 = vdwg.mxu0
    %742 = vmatprep.subr.bf16.mxu0 %v640
    %743 = vmatpush1.bf16.msra.mxu0 %v639
    %744 = vmatprep.subr.bf16.mxu0 %v644
    %745 = vmatpush1.bf16.msra.mxu0 %v643
    %746 = vmatprep.subr.bf16.mxu0 %v648
    %747 = vmatpush1.bf16.msra.mxu0 %v647
    %748 = vmatprep.subr.bf16.mxu0 %v652
    %749 = vmatpush1.bf16.msra.mxu0 %v651
    %750 = vmatprep.subr.bf16.mxu0 %v656
    %751 = vmatpush1.bf16.msra.mxu0 %v655
    %752 = vmatprep.subr.bf16.mxu0 %v660
    %753 = vmatpush1.bf16.msra.mxu0 %v659
    %754 = vmatprep.subr.bf16.mxu0 %v664
    %755 = vmatpush1.bf16.msra.mxu0 %v663
    %756 = vmatprep.subr.bf16.mxu0 %v668
    %757 = vmatpush1.bf16.msra.mxu0 %v667
    %758 = vmatprep.subr.bf16.mxu0 0
    %759 = vmatpush1.bf16.msra.mxu0 0
    %760 = vmatprep.subr.bf16.mxu0 0
    %761 = vmatpush1.bf16.msra.mxu0 0
    %762 = vmatprep.subr.bf16.mxu0 0
    %763 = vmatpush1.bf16.msra.mxu0 0
    %764 = vmatprep.subr.bf16.mxu0 0
    %765 = vmatpush1.bf16.msra.mxu0 0
    %766 = vmatprep.subr.bf16.mxu0 0
    %767 = vmatpush1.bf16.msra.mxu0 0
    %768 = vmatprep.subr.bf16.mxu0 0
    %769 = vmatpush1.bf16.msra.mxu0 0
    %770 = vmatprep.subr.bf16.mxu0 0
    %771 = vmatpush1.bf16.msra.mxu0 0
    %772 = vmatprep.subr.bf16.mxu0 0
    %773 = vmatpush1.bf16.msra.mxu0 0
    %774 = vmatprep.mubr.bf16.mxu0 0
    %775 = vmatmul.mubr.bf16.gmra.mrb[0].mxu0 0
    %v776 = vpop.f32.mrb[0].mxu0
    %v777 = vadd.f32 0.0, %v776
    %v778 = vpop.f32.mrb[0].mxu0
    %v779 = vadd.f32 0.0, %v778
    %v780 = vpop.f32.mrb[0].mxu0
    %v781 = vpop.f32.mrb[0].mxu0
    %782 = vdwg.mxu0
    %v783 = vadd.f32 %v505, %v736
    %v784 = vadd.f32 %v506, %v738
    %v785 = vadd.f32 %v507, %v777
    %v786 = vadd.f32 %v508, %v779
    %v787 = vxor.u32 %v783, 2147483648
    %v788 = vmul.f32 %v787, 1.442695
    %v789 = vpow.pop %v788
    %v790 = vadd.f32 %v789, 1.0
    %v791 = vrcp.pop %v790
    %v792 = vmul.f32 1.0, %v791
    %v793 = vxor.u32 %v784, 2147483648
    %v794 = vmul.f32 %v793, 1.442695
    %v795 = vpow.pop %v794
    %v796 = vadd.f32 %v795, 1.0
    %v797 = vrcp.pop %v796
    %v798 = vmul.f32 1.0, %v797
    %v799 = vtanh.pop %v785
    %v800 = vxor.u32 %v786, 2147483648
    %v801 = vmul.f32 %v800, 1.442695
    %v802 = vpow.pop %v801
    %v803 = vadd.f32 %v802, 1.0
    %v804 = vrcp.pop %v803
    %v805 = vmul.f32 1.0, %v804
    %v806 = vmul.f32 %v798, 0.0
    %v807 = vmul.f32 %v792, %v799
    %v808 = vadd.f32 %v806, %v807
    %v809 = vtanh.pop %v808
    %v810 = vmul.f32 %v805, %v809
    %811 = vst [vmem:[#allocation3] sm:$0xff] %v810
    %s812 = scalar_lea.vmem [#allocation2], 32
    %v813 = vld [vmem:[%s812] sm:$0xff]
    %v814 = vld [vmem:[%s812 + $0x8] sm:$0xff]
    %v815 = vld [vmem:[%s812 + $0x10] sm:$0xff]
    %v816 = vld [vmem:[%s812 + $0x18] sm:$0xff]
    %v817 = vpack.c.bf16 %v810, %v810
    %v818 = vld [vmem:[#allocation6] sm:$0xff]
    %v819 = vld [vmem:[#allocation6 + $0x8] sm:$0xff]
    %v820 = vld [vmem:[#allocation6 + $0x10] sm:$0xff]
    %v821 = vld [vmem:[#allocation6 + $0x18] sm:$0xff]
    %v822 = vld [vmem:[#allocation6 + $0x20] sm:$0xff]
    %v823 = vld [vmem:[#allocation6 + $0x28] sm:$0xff]
    %v824 = vld [vmem:[#allocation6 + $0x30] sm:$0xff]
    %v825 = vld [vmem:[#allocation6 + $0x38] sm:$0xff]
    %v826 = vld [vmem:[#allocation6 + $0x40] sm:$0xff]
    %v827 = vld [vmem:[#allocation6 + $0x48] sm:$0xff]
    %v828 = vld [vmem:[#allocation6 + $0x50] sm:$0xff]
    %v829 = vld [vmem:[#allocation6 + $0x58] sm:$0xff]
    %v830 = vld [vmem:[#allocation6 + $0x60] sm:$0xff]
    %v831 = vld [vmem:[#allocation6 + $0x68] sm:$0xff]
    %v832 = vld [vmem:[#allocation6 + $0x70] sm:$0xff]
    %v833 = vld [vmem:[#allocation6 + $0x78] sm:$0xff]
    %v834 = vld [vmem:[#allocation6 + $0x80] sm:$0xff]
    %v835 = vld [vmem:[#allocation6 + $0x88] sm:$0xff]
    %v836 = vld [vmem:[#allocation6 + $0x90] sm:$0xff]
    %v837 = vld [vmem:[#allocation6 + $0x98] sm:$0xff]
    %v838 = vld [vmem:[#allocation6 + $0xa0] sm:$0xff]
    %v839 = vld [vmem:[#allocation6 + $0xa8] sm:$0xff]
    %v840 = vld [vmem:[#allocation6 + $0xb0] sm:$0xff]
    %v841 = vld [vmem:[#allocation6 + $0xb8] sm:$0xff]
    %v842 = vld [vmem:[#allocation6 + $0xc0] sm:$0xff]
    %v843 = vld [vmem:[#allocation6 + $0xc8] sm:$0xff]
    %v844 = vld [vmem:[#allocation6 + $0xd0] sm:$0xff]
    %v845 = vld [vmem:[#allocation6 + $0xd8] sm:$0xff]
    %v846 = vld [vmem:[#allocation6 + $0xe0] sm:$0xff]
    %v847 = vld [vmem:[#allocation6 + $0xe8] sm:$0xff]
    %v848 = vld [vmem:[#allocation6 + $0xf0] sm:$0xff]
    %v849 = vld [vmem:[#allocation6 + $0xf8] sm:$0xff]
    %v882 = vunpack.c.l.b16 %v818
    %v883 = vunpack.c.h.b16 %v818
    %v884 = vunpack.c.l.b16 %v819
    %v885 = vunpack.c.h.b16 %v819
    %v886 = vunpack.c.l.b16 %v820
    %v887 = vunpack.c.h.b16 %v820
    %v888 = vunpack.c.l.b16 %v821
    %v889 = vunpack.c.h.b16 %v821
    %v890 = vunpack.c.l.b16 %v822
    %v891 = vunpack.c.h.b16 %v822
    %v892 = vunpack.c.l.b16 %v823
    %v893 = vunpack.c.h.b16 %v823
    %v894 = vunpack.c.l.b16 %v824
    %v895 = vunpack.c.h.b16 %v824
    %v896 = vunpack.c.l.b16 %v825
    %v897 = vunpack.c.h.b16 %v825
    %v898 = vunpack.c.l.b16 %v826
    %v899 = vunpack.c.h.b16 %v826
    %v900 = vunpack.c.l.b16 %v827
    %v901 = vunpack.c.h.b16 %v827
    %v902 = vunpack.c.l.b16 %v828
    %v903 = vunpack.c.h.b16 %v828
    %v904 = vunpack.c.l.b16 %v829
    %v905 = vunpack.c.h.b16 %v829
    %v906 = vunpack.c.l.b16 %v830
    %v907 = vunpack.c.h.b16 %v830
    %v908 = vunpack.c.l.b16 %v831
    %v909 = vunpack.c.h.b16 %v831
    %v910 = vunpack.c.l.b16 %v832
    %v911 = vunpack.c.h.b16 %v832
    %v912 = vunpack.c.l.b16 %v833
    %v913 = vunpack.c.h.b16 %v833
    %v914 = vunpack.c.l.b16 %v834
    %v915 = vunpack.c.h.b16 %v834
    %v916 = vunpack.c.l.b16 %v835
    %v917 = vunpack.c.h.b16 %v835
    %v918 = vunpack.c.l.b16 %v836
    %v919 = vunpack.c.h.b16 %v836
    %v920 = vunpack.c.l.b16 %v837
    %v921 = vunpack.c.h.b16 %v837
    %v922 = vunpack.c.l.b16 %v838
    %v923 = vunpack.c.h.b16 %v838
    %v924 = vunpack.c.l.b16 %v839
    %v925 = vunpack.c.h.b16 %v839
    %v926 = vunpack.c.l.b16 %v840
    %v927 = vunpack.c.h.b16 %v840
    %v928 = vunpack.c.l.b16 %v841
    %v929 = vunpack.c.h.b16 %v841
    %v930 = vunpack.c.l.b16 %v842
    %v931 = vunpack.c.h.b16 %v842
    %v932 = vunpack.c.l.b16 %v843
    %v933 = vunpack.c.h.b16 %v843
    %v934 = vunpack.c.l.b16 %v844
    %v935 = vunpack.c.h.b16 %v844
    %v936 = vunpack.c.l.b16 %v845
    %v937 = vunpack.c.h.b16 %v845
    %v938 = vunpack.c.l.b16 %v846
    %v939 = vunpack.c.h.b16 %v846
    %v940 = vunpack.c.l.b16 %v847
    %v941 = vunpack.c.h.b16 %v847
    %v942 = vunpack.c.l.b16 %v848
    %v943 = vunpack.c.h.b16 %v848
    %v944 = vunpack.c.l.b16 %v849
    %v945 = vunpack.c.h.b16 %v849
    %v946 = vpack.c.b16 %v886, %v882
    %v947 = vpack.c.b16 %v887, %v883
    %v948 = vpack.c.b16 %v888, %v884
    %v949 = vpack.c.b16 %v889, %v885
    %v950 = vpack.c.b16 %v894, %v890
    %v951 = vpack.c.b16 %v895, %v891
    %v952 = vpack.c.b16 %v896, %v892
    %v953 = vpack.c.b16 %v897, %v893
    %v954 = vpack.c.b16 %v902, %v898
    %v955 = vpack.c.b16 %v903, %v899
    %v956 = vpack.c.b16 %v904, %v900
    %v957 = vpack.c.b16 %v905, %v901
    %v958 = vpack.c.b16 %v910, %v906
    %v959 = vpack.c.b16 %v911, %v907
    %v960 = vpack.c.b16 %v912, %v908
    %v961 = vpack.c.b16 %v913, %v909
    %v962 = vpack.c.b16 %v918, %v914
    %v963 = vpack.c.b16 %v919, %v915
    %v964 = vpack.c.b16 %v920, %v916
    %v965 = vpack.c.b16 %v921, %v917
    %v966 = vpack.c.b16 %v926, %v922
    %v967 = vpack.c.b16 %v927, %v923
    %v968 = vpack.c.b16 %v928, %v924
    %v969 = vpack.c.b16 %v929, %v925
    %v970 = vpack.c.b16 %v934, %v930
    %v971 = vpack.c.b16 %v935, %v931
    %v972 = vpack.c.b16 %v936, %v932
    %v973 = vpack.c.b16 %v937, %v933
    %v974 = vpack.c.b16 %v942, %v938
    %v975 = vpack.c.b16 %v943, %v939
    %v976 = vpack.c.b16 %v944, %v940
    %v977 = vpack.c.b16 %v945, %v941
    %1010 = vmatprep.subr.bf16.mxu0 %v947
    %1011 = vmatpush1.bf16.msra.mxu0 %v946
    %1012 = vmatprep.subr.bf16.mxu0 %v951
    %1013 = vmatpush1.bf16.msra.mxu0 %v950
    %1014 = vmatprep.subr.bf16.mxu0 %v955
    %1015 = vmatpush1.bf16.msra.mxu0 %v954
    %1016 = vmatprep.subr.bf16.mxu0 %v959
    %1017 = vmatpush1.bf16.msra.mxu0 %v958
    %1018 = vmatprep.subr.bf16.mxu0 %v963
    %1019 = vmatpush1.bf16.msra.mxu0 %v962
    %1020 = vmatprep.subr.bf16.mxu0 %v967
    %1021 = vmatpush1.bf16.msra.mxu0 %v966
    %1022 = vmatprep.subr.bf16.mxu0 %v971
    %1023 = vmatpush1.bf16.msra.mxu0 %v970
    %1024 = vmatprep.subr.bf16.mxu0 %v975
    %1025 = vmatpush1.bf16.msra.mxu0 %v974
    %1026 = vmatprep.subr.bf16.mxu0 0
    %1027 = vmatpush1.bf16.msra.mxu0 0
    %1028 = vmatprep.subr.bf16.mxu0 0
    %1029 = vmatpush1.bf16.msra.mxu0 0
    %1030 = vmatprep.subr.bf16.mxu0 0
    %1031 = vmatpush1.bf16.msra.mxu0 0
    %1032 = vmatprep.subr.bf16.mxu0 0
    %1033 = vmatpush1.bf16.msra.mxu0 0
    %1034 = vmatprep.subr.bf16.mxu0 0
    %1035 = vmatpush1.bf16.msra.mxu0 0
    %1036 = vmatprep.subr.bf16.mxu0 0
    %1037 = vmatpush1.bf16.msra.mxu0 0
    %1038 = vmatprep.subr.bf16.mxu0 0
    %1039 = vmatpush1.bf16.msra.mxu0 0
    %1040 = vmatprep.subr.bf16.mxu0 0
    %1041 = vmatpush1.bf16.msra.mxu0 0
    %1042 = vmatprep.mubr.bf16.mxu0 0
    %1043 = vmatmul.mubr.bf16.gmra.mrb[0].mxu0 %v817
    %v1044 = vpop.f32.mrb[0].mxu0
    %v1045 = vadd.f32 0.0, %v1044
    %v1046 = vpop.f32.mrb[0].mxu0
    %v1047 = vadd.f32 0.0, %v1046
    %v1048 = vpop.f32.mrb[0].mxu0
    %v1049 = vpop.f32.mrb[0].mxu0
    %1050 = vdwg.mxu0
    %1051 = vmatprep.subr.bf16.mxu0 %v949
    %1052 = vmatpush1.bf16.msra.mxu0 %v948
    %1053 = vmatprep.subr.bf16.mxu0 %v953
    %1054 = vmatpush1.bf16.msra.mxu0 %v952
    %1055 = vmatprep.subr.bf16.mxu0 %v957
    %1056 = vmatpush1.bf16.msra.mxu0 %v956
    %1057 = vmatprep.subr.bf16.mxu0 %v961
    %1058 = vmatpush1.bf16.msra.mxu0 %v960
    %1059 = vmatprep.subr.bf16.mxu0 %v965
    %1060 = vmatpush1.bf16.msra.mxu0 %v964
    %1061 = vmatprep.subr.bf16.mxu0 %v969
    %1062 = vmatpush1.bf16.msra.mxu0 %v968
    %1063 = vmatprep.subr.bf16.mxu0 %v973
    %1064 = vmatpush1.bf16.msra.mxu0 %v972
    %1065 = vmatprep.subr.bf16.mxu0 %v977
    %1066 = vmatpush1.bf16.msra.mxu0 %v976
    %1067 = vmatprep.subr.bf16.mxu0 0
    %1068 = vmatpush1.bf16.msra.mxu0 0
    %1069 = vmatprep.subr.bf16.mxu0 0
    %1070 = vmatpush1.bf16.msra.mxu0 0
    %1071 = vmatprep.subr.bf16.mxu0 0
    %1072 = vmatpush1.bf16.msra.mxu0 0
    %1073 = vmatprep.subr.bf16.mxu0 0
    %1074 = vmatpush1.bf16.msra.mxu0 0
    %1075 = vmatprep.subr.bf16.mxu0 0
    %1076 = vmatpush1.bf16.msra.mxu0 0
    %1077 = vmatprep.subr.bf16.mxu0 0
    %1078 = vmatpush1.bf16.msra.mxu0 0
    %1079 = vmatprep.subr.bf16.mxu0 0
    %1080 = vmatpush1.bf16.msra.mxu0 0
    %1081 = vmatprep.subr.bf16.mxu0 0
    %1082 = vmatpush1.bf16.msra.mxu0 0
    %1083 = vmatprep.mubr.bf16.mxu0 0
    %1084 = vmatmul.mubr.bf16.gmra.mrb[0].mxu0 %v817
    %v1085 = vpop.f32.mrb[0].mxu0
    %v1086 = vadd.f32 0.0, %v1085
    %v1087 = vpop.f32.mrb[0].mxu0
    %v1088 = vadd.f32 0.0, %v1087
    %v1089 = vpop.f32.mrb[0].mxu0
    %v1090 = vpop.f32.mrb[0].mxu0
    %1091 = vdwg.mxu0
    %v1092 = vadd.f32 %v813, %v1045
    %v1093 = vadd.f32 %v814, %v1047
    %v1094 = vadd.f32 %v815, %v1086
    %v1095 = vadd.f32 %v816, %v1088
    %v1096 = vxor.u32 %v1092, 2147483648
    %v1097 = vmul.f32 %v1096, 1.442695
    %v1098 = vpow.pop %v1097
    %v1099 = vadd.f32 %v1098, 1.0
    %v1100 = vrcp.pop %v1099
    %v1101 = vmul.f32 1.0, %v1100
    %v1102 = vxor.u32 %v1093, 2147483648
    %v1103 = vmul.f32 %v1102, 1.442695
    %v1104 = vpow.pop %v1103
    %v1105 = vadd.f32 %v1104, 1.0
    %v1106 = vrcp.pop %v1105
    %v1107 = vmul.f32 1.0, %v1106
    %v1108 = vtanh.pop %v1094
    %v1109 = vxor.u32 %v1095, 2147483648
    %v1110 = vmul.f32 %v1109, 1.442695
    %v1111 = vpow.pop %v1110
    %v1112 = vadd.f32 %v1111, 1.0
    %v1113 = vrcp.pop %v1112
    %v1114 = vmul.f32 1.0, %v1113
    %v1115 = vmul.f32 %v1107, %v808
    %v1116 = vmul.f32 %v1101, %v1108
    %v1117 = vadd.f32 %v1115, %v1116
    %v1118 = vtanh.pop %v1117
    %v1119 = vmul.f32 %v1114, %v1118
    %s1120 = scalar_lea.vmem [#allocation3], 8
    %1121 = vst [vmem:[%s1120] sm:$0xff] %v1119
    %s1122 = scalar_lea.vmem [#allocation2], 64
    %v1123 = vld [vmem:[%s1122] sm:$0xff]
    %v1124 = vld [vmem:[%s1122 + $0x8] sm:$0xff]
    %v1125 = vld [vmem:[%s1122 + $0x10] sm:$0xff]
    %v1126 = vld [vmem:[%s1122 + $0x18] sm:$0xff]
    %v1127 = vpack.c.bf16 %v1119, %v1119
    %v1128 = vld [vmem:[#allocation6] sm:$0xff]
    %v1129 = vld [vmem:[#allocation6 + $0x8] sm:$0xff]
    %v1130 = vld [vmem:[#allocation6 + $0x10] sm:$0xff]
    %v1131 = vld [vmem:[#allocation6 + $0x18] sm:$0xff]
    %v1132 = vld [vmem:[#allocation6 + $0x20] sm:$0xff]
    %v1133 = vld [vmem:[#allocation6 + $0x28] sm:$0xff]
    %v1134 = vld [vmem:[#allocation6 + $0x30] sm:$0xff]
    %v1135 = vld [vmem:[#allocation6 + $0x38] sm:$0xff]
    %v1136 = vld [vmem:[#allocation6 + $0x40] sm:$0xff]
    %v1137 = vld [vmem:[#allocation6 + $0x48] sm:$0xff]
    %v1138 = vld [vmem:[#allocation6 + $0x50] sm:$0xff]
    %v1139 = vld [vmem:[#allocation6 + $0x58] sm:$0xff]
    %v1140 = vld [vmem:[#allocation6 + $0x60] sm:$0xff]
    %v1141 = vld [vmem:[#allocation6 + $0x68] sm:$0xff]
    %v1142 = vld [vmem:[#allocation6 + $0x70] sm:$0xff]
    %v1143 = vld [vmem:[#allocation6 + $0x78] sm:$0xff]
    %v1144 = vld [vmem:[#allocation6 + $0x80] sm:$0xff]
    %v1145 = vld [vmem:[#allocation6 + $0x88] sm:$0xff]
    %v1146 = vld [vmem:[#allocation6 + $0x90] sm:$0xff]
    %v1147 = vld [vmem:[#allocation6 + $0x98] sm:$0xff]
    %v1148 = vld [vmem:[#allocation6 + $0xa0] sm:$0xff]
    %v1149 = vld [vmem:[#allocation6 + $0xa8] sm:$0xff]
    %v1150 = vld [vmem:[#allocation6 + $0xb0] sm:$0xff]
    %v1151 = vld [vmem:[#allocation6 + $0xb8] sm:$0xff]
    %v1152 = vld [vmem:[#allocation6 + $0xc0] sm:$0xff]
    %v1153 = vld [vmem:[#allocation6 + $0xc8] sm:$0xff]
    %v1154 = vld [vmem:[#allocation6 + $0xd0] sm:$0xff]
    %v1155 = vld [vmem:[#allocation6 + $0xd8] sm:$0xff]
    %v1156 = vld [vmem:[#allocation6 + $0xe0] sm:$0xff]
    %v1157 = vld [vmem:[#allocation6 + $0xe8] sm:$0xff]
    %v1158 = vld [vmem:[#allocation6 + $0xf0] sm:$0xff]
    %v1159 = vld [vmem:[#allocation6 + $0xf8] sm:$0xff]
    %v1192 = vunpack.c.l.b16 %v1128
    %v1193 = vunpack.c.h.b16 %v1128
    %v1194 = vunpack.c.l.b16 %v1129
    %v1195 = vunpack.c.h.b16 %v1129
    %v1196 = vunpack.c.l.b16 %v1130
    %v1197 = vunpack.c.h.b16 %v1130
    %v1198 = vunpack.c.l.b16 %v1131
    %v1199 = vunpack.c.h.b16 %v1131
    %v1200 = vunpack.c.l.b16 %v1132
    %v1201 = vunpack.c.h.b16 %v1132
    %v1202 = vunpack.c.l.b16 %v1133
    %v1203 = vunpack.c.h.b16 %v1133
    %v1204 = vunpack.c.l.b16 %v1134
    %v1205 = vunpack.c.h.b16 %v1134
    %v1206 = vunpack.c.l.b16 %v1135
    %v1207 = vunpack.c.h.b16 %v1135
    %v1208 = vunpack.c.l.b16 %v1136
    %v1209 = vunpack.c.h.b16 %v1136
    %v1210 = vunpack.c.l.b16 %v1137
    %v1211 = vunpack.c.h.b16 %v1137
    %v1212 = vunpack.c.l.b16 %v1138
    %v1213 = vunpack.c.h.b16 %v1138
    %v1214 = vunpack.c.l.b16 %v1139
    %v1215 = vunpack.c.h.b16 %v1139
    %v1216 = vunpack.c.l.b16 %v1140
    %v1217 = vunpack.c.h.b16 %v1140
    %v1218 = vunpack.c.l.b16 %v1141
    %v1219 = vunpack.c.h.b16 %v1141
    %v1220 = vunpack.c.l.b16 %v1142
    %v1221 = vunpack.c.h.b16 %v1142
    %v1222 = vunpack.c.l.b16 %v1143
    %v1223 = vunpack.c.h.b16 %v1143
    %v1224 = vunpack.c.l.b16 %v1144
    %v1225 = vunpack.c.h.b16 %v1144
    %v1226 = vunpack.c.l.b16 %v1145
    %v1227 = vunpack.c.h.b16 %v1145
    %v1228 = vunpack.c.l.b16 %v1146
    %v1229 = vunpack.c.h.b16 %v1146
    %v1230 = vunpack.c.l.b16 %v1147
    %v1231 = vunpack.c.h.b16 %v1147
    %v1232 = vunpack.c.l.b16 %v1148
    %v1233 = vunpack.c.h.b16 %v1148
    %v1234 = vunpack.c.l.b16 %v1149
    %v1235 = vunpack.c.h.b16 %v1149
    %v1236 = vunpack.c.l.b16 %v1150
    %v1237 = vunpack.c.h.b16 %v1150
    %v1238 = vunpack.c.l.b16 %v1151
    %v1239 = vunpack.c.h.b16 %v1151
    %v1240 = vunpack.c.l.b16 %v1152
    %v1241 = vunpack.c.h.b16 %v1152
    %v1242 = vunpack.c.l.b16 %v1153
    %v1243 = vunpack.c.h.b16 %v1153
    %v1244 = vunpack.c.l.b16 %v1154
    %v1245 = vunpack.c.h.b16 %v1154
    %v1246 = vunpack.c.l.b16 %v1155
    %v1247 = vunpack.c.h.b16 %v1155
    %v1248 = vunpack.c.l.b16 %v1156
    %v1249 = vunpack.c.h.b16 %v1156
    %v1250 = vunpack.c.l.b16 %v1157
    %v1251 = vunpack.c.h.b16 %v1157
    %v1252 = vunpack.c.l.b16 %v1158
    %v1253 = vunpack.c.h.b16 %v1158
    %v1254 = vunpack.c.l.b16 %v1159
    %v1255 = vunpack.c.h.b16 %v1159
    %v1256 = vpack.c.b16 %v1196, %v1192
    %v1257 = vpack.c.b16 %v1197, %v1193
    %v1258 = vpack.c.b16 %v1198, %v1194
    %v1259 = vpack.c.b16 %v1199, %v1195
    %v1260 = vpack.c.b16 %v1204, %v1200
    %v1261 = vpack.c.b16 %v1205, %v1201
    %v1262 = vpack.c.b16 %v1206, %v1202
    %v1263 = vpack.c.b16 %v1207, %v1203
    %v1264 = vpack.c.b16 %v1212, %v1208
    %v1265 = vpack.c.b16 %v1213, %v1209
    %v1266 = vpack.c.b16 %v1214, %v1210
    %v1267 = vpack.c.b16 %v1215, %v1211
    %v1268 = vpack.c.b16 %v1220, %v1216
    %v1269 = vpack.c.b16 %v1221, %v1217
    %v1270 = vpack.c.b16 %v1222, %v1218
    %v1271 = vpack.c.b16 %v1223, %v1219
    %v1272 = vpack.c.b16 %v1228, %v1224
    %v1273 = vpack.c.b16 %v1229, %v1225
    %v1274 = vpack.c.b16 %v1230, %v1226
    %v1275 = vpack.c.b16 %v1231, %v1227
    %v1276 = vpack.c.b16 %v1236, %v1232
    %v1277 = vpack.c.b16 %v1237, %v1233
    %v1278 = vpack.c.b16 %v1238, %v1234
    %v1279 = vpack.c.b16 %v1239, %v1235
    %v1280 = vpack.c.b16 %v1244, %v1240
    %v1281 = vpack.c.b16 %v1245, %v1241
    %v1282 = vpack.c.b16 %v1246, %v1242
    %v1283 = vpack.c.b16 %v1247, %v1243
    %v1284 = vpack.c.b16 %v1252, %v1248
    %v1285 = vpack.c.b16 %v1253, %v1249
    %v1286 = vpack.c.b16 %v1254, %v1250
    %v1287 = vpack.c.b16 %v1255, %v1251
    %1320 = vmatprep.subr.bf16.mxu0 %v1257
    %1321 = vmatpush1.bf16.msra.mxu0 %v1256
    %1322 = vmatprep.subr.bf16.mxu0 %v1261
    %1323 = vmatpush1.bf16.msra.mxu0 %v1260
    %1324 = vmatprep.subr.bf16.mxu0 %v1265
    %1325 = vmatpush1.bf16.msra.mxu0 %v1264
    %1326 = vmatprep.subr.bf16.mxu0 %v1269
    %1327 = vmatpush1.bf16.msra.mxu0 %v1268
    %1328 = vmatprep.subr.bf16.mxu0 %v1273
    %1329 = vmatpush1.bf16.msra.mxu0 %v1272
    %1330 = vmatprep.subr.bf16.mxu0 %v1277
    %1331 = vmatpush1.bf16.msra.mxu0 %v1276
    %1332 = vmatprep.subr.bf16.mxu0 %v1281
    %1333 = vmatpush1.bf16.msra.mxu0 %v1280
    %1334 = vmatprep.subr.bf16.mxu0 %v1285
    %1335 = vmatpush1.bf16.msra.mxu0 %v1284
    %1336 = vmatprep.subr.bf16.mxu0 0
    %1337 = vmatpush1.bf16.msra.mxu0 0
    %1338 = vmatprep.subr.bf16.mxu0 0
    %1339 = vmatpush1.bf16.msra.mxu0 0
    %1340 = vmatprep.subr.bf16.mxu0 0
    %1341 = vmatpush1.bf16.msra.mxu0 0
    %1342 = vmatprep.subr.bf16.mxu0 0
    %1343 = vmatpush1.bf16.msra.mxu0 0
    %1344 = vmatprep.subr.bf16.mxu0 0
    %1345 = vmatpush1.bf16.msra.mxu0 0
    %1346 = vmatprep.subr.bf16.mxu0 0
    %1347 = vmatpush1.bf16.msra.mxu0 0
    %1348 = vmatprep.subr.bf16.mxu0 0
    %1349 = vmatpush1.bf16.msra.mxu0 0
    %1350 = vmatprep.subr.bf16.mxu0 0
    %1351 = vmatpush1.bf16.msra.mxu0 0
    %1352 = vmatprep.mubr.bf16.mxu0 0
    %1353 = vmatmul.mubr.bf16.gmra.mrb[0].mxu0 %v1127
    %v1354 = vpop.f32.mrb[0].mxu0
    %v1355 = vadd.f32 0.0, %v1354
    %v1356 = vpop.f32.mrb[0].mxu0
    %v1357 = vadd.f32 0.0, %v1356
    %v1358 = vpop.f32.mrb[0].mxu0
    %v1359 = vpop.f32.mrb[0].mxu0
    %1360 = vdwg.mxu0
    %1361 = vmatprep.subr.bf16.mxu0 %v1259
    %1362 = vmatpush1.bf16.msra.mxu0 %v1258
    %1363 = vmatprep.subr.bf16.mxu0 %v1263
    %1364 = vmatpush1.bf16.msra.mxu0 %v1262
    %1365 = vmatprep.subr.bf16.mxu0 %v1267
    %1366 = vmatpush1.bf16.msra.mxu0 %v1266
    %1367 = vmatprep.subr.bf16.mxu0 %v1271
    %1368 = vmatpush1.bf16.msra.mxu0 %v1270
    %1369 = vmatprep.subr.bf16.mxu0 %v1275
    %1370 = vmatpush1.bf16.msra.mxu0 %v1274
    %1371 = vmatprep.subr.bf16.mxu0 %v1279
    %1372 = vmatpush1.bf16.msra.mxu0 %v1278
    %1373 = vmatprep.subr.bf16.mxu0 %v1283
    %1374 = vmatpush1.bf16.msra.mxu0 %v1282
    %1375 = vmatprep.subr.bf16.mxu0 %v1287
    %1376 = vmatpush1.bf16.msra.mxu0 %v1286
    %1377 = vmatprep.subr.bf16.mxu0 0
    %1378 = vmatpush1.bf16.msra.mxu0 0
    %1379 = vmatprep.subr.bf16.mxu0 0
    %1380 = vmatpush1.bf16.msra.mxu0 0
    %1381 = vmatprep.subr.bf16.mxu0 0
    %1382 = vmatpush1.bf16.msra.mxu0 0
    %1383 = vmatprep.subr.bf16.mxu0 0
    %1384 = vmatpush1.bf16.msra.mxu0 0
    %1385 = vmatprep.subr.bf16.mxu0 0
    %1386 = vmatpush1.bf16.msra.mxu0 0
    %1387 = vmatprep.subr.bf16.mxu0 0
    %1388 = vmatpush1.bf16.msra.mxu0 0
    %1389 = vmatprep.subr.bf16.mxu0 0
    %1390 = vmatpush1.bf16.msra.mxu0 0
    %1391 = vmatprep.subr.bf16.mxu0 0
    %1392 = vmatpush1.bf16.msra.mxu0 0
    %1393 = vmatprep.mubr.bf16.mxu0 0
    %1394 = vmatmul.mubr.bf16.gmra.mrb[0].mxu0 %v1127
    %v1395 = vpop.f32.mrb[0].mxu0
    %v1396 = vadd.f32 0.0, %v1395
    %v1397 = vpop.f32.mrb[0].mxu0
    %v1398 = vadd.f32 0.0, %v1397
    %v1399 = vpop.f32.mrb[0].mxu0
    %v1400 = vpop.f32.mrb[0].mxu0
    %1401 = vdwg.mxu0
    %v1402 = vadd.f32 %v1123, %v1355
    %v1403 = vadd.f32 %v1124, %v1357
    %v1404 = vadd.f32 %v1125, %v1396
    %v1405 = vadd.f32 %v1126, %v1398
    %v1406 = vxor.u32 %v1402, 2147483648
    %v1407 = vmul.f32 %v1406, 1.442695
    %v1408 = vpow.pop %v1407
    %v1409 = vadd.f32 %v1408, 1.0
    %v1410 = vrcp.pop %v1409
    %v1411 = vmul.f32 1.0, %v1410
    %v1412 = vxor.u32 %v1403, 2147483648
    %v1413 = vmul.f32 %v1412, 1.442695
    %v1414 = vpow.pop %v1413
    %v1415 = vadd.f32 %v1414, 1.0
    %v1416 = vrcp.pop %v1415
    %v1417 = vmul.f32 1.0, %v1416
    %v1418 = vtanh.pop %v1404
    %v1419 = vxor.u32 %v1405, 2147483648
    %v1420 = vmul.f32 %v1419, 1.442695
    %v1421 = vpow.pop %v1420
    %v1422 = vadd.f32 %v1421, 1.0
    %v1423 = vrcp.pop %v1422
    %v1424 = vmul.f32 1.0, %v1423
    %v1425 = vmul.f32 %v1417, %v1117
    %v1426 = vmul.f32 %v1411, %v1418
    %v1427 = vadd.f32 %v1425, %v1426
    %v1428 = vtanh.pop %v1427
    %v1429 = vmul.f32 %v1424, %v1428
    %s1430 = scalar_lea.vmem [#allocation3], 16
    %1431 = vst [vmem:[%s1430] sm:$0xff] %v1429
    %s1432 = scalar_lea.vmem [#allocation2], 96
    %v1433 = vld [vmem:[%s1432] sm:$0xff]
    %v1434 = vld [vmem:[%s1432 + $0x8] sm:$0xff]
    %v1435 = vld [vmem:[%s1432 + $0x10] sm:$0xff]
    %v1436 = vld [vmem:[%s1432 + $0x18] sm:$0xff]
    %v1437 = vpack.c.bf16 %v1429, %v1429
    %v1438 = vld [vmem:[#allocation6] sm:$0xff]
    %v1439 = vld [vmem:[#allocation6 + $0x8] sm:$0xff]
    %v1440 = vld [vmem:[#allocation6 + $0x10] sm:$0xff]
    %v1441 = vld [vmem:[#allocation6 + $0x18] sm:$0xff]
    %v1442 = vld [vmem:[#allocation6 + $0x20] sm:$0xff]
    %v1443 = vld [vmem:[#allocation6 + $0x28] sm:$0xff]
    %v1444 = vld [vmem:[#allocation6 + $0x30] sm:$0xff]
    %v1445 = vld [vmem:[#allocation6 + $0x38] sm:$0xff]
    %v1446 = vld [vmem:[#allocation6 + $0x40] sm:$0xff]
    %v1447 = vld [vmem:[#allocation6 + $0x48] sm:$0xff]
    %v1448 = vld [vmem:[#allocation6 + $0x50] sm:$0xff]
    %v1449 = vld [vmem:[#allocation6 + $0x58] sm:$0xff]
    %v1450 = vld [vmem:[#allocation6 + $0x60] sm:$0xff]
    %v1451 = vld [vmem:[#allocation6 + $0x68] sm:$0xff]
    %v1452 = vld [vmem:[#allocation6 + $0x70] sm:$0xff]
    %v1453 = vld [vmem:[#allocation6 + $0x78] sm:$0xff]
    %v1454 = vld [vmem:[#allocation6 + $0x80] sm:$0xff]
    %v1455 = vld [vmem:[#allocation6 + $0x88] sm:$0xff]
    %v1456 = vld [vmem:[#allocation6 + $0x90] sm:$0xff]
    %v1457 = vld [vmem:[#allocation6 + $0x98] sm:$0xff]
    %v1458 = vld [vmem:[#allocation6 + $0xa0] sm:$0xff]
    %v1459 = vld [vmem:[#allocation6 + $0xa8] sm:$0xff]
    %v1460 = vld [vmem:[#allocation6 + $0xb0] sm:$0xff]
    %v1461 = vld [vmem:[#allocation6 + $0xb8] sm:$0xff]
    %v1462 = vld [vmem:[#allocation6 + $0xc0] sm:$0xff]
    %v1463 = vld [vmem:[#allocation6 + $0xc8] sm:$0xff]
    %v1464 = vld [vmem:[#allocation6 + $0xd0] sm:$0xff]
    %v1465 = vld [vmem:[#allocation6 + $0xd8] sm:$0xff]
    %v1466 = vld [vmem:[#allocation6 + $0xe0] sm:$0xff]
    %v1467 = vld [vmem:[#allocation6 + $0xe8] sm:$0xff]
    %v1468 = vld [vmem:[#allocation6 + $0xf0] sm:$0xff]
    %v1469 = vld [vmem:[#allocation6 + $0xf8] sm:$0xff]
    %v1502 = vunpack.c.l.b16 %v1438
    %v1503 = vunpack.c.h.b16 %v1438
    %v1504 = vunpack.c.l.b16 %v1439
    %v1505 = vunpack.c.h.b16 %v1439
    %v1506 = vunpack.c.l.b16 %v1440
    %v1507 = vunpack.c.h.b16 %v1440
    %v1508 = vunpack.c.l.b16 %v1441
    %v1509 = vunpack.c.h.b16 %v1441
    %v1510 = vunpack.c.l.b16 %v1442
    %v1511 = vunpack.c.h.b16 %v1442
    %v1512 = vunpack.c.l.b16 %v1443
    %v1513 = vunpack.c.h.b16 %v1443
    %v1514 = vunpack.c.l.b16 %v1444
    %v1515 = vunpack.c.h.b16 %v1444
    %v1516 = vunpack.c.l.b16 %v1445
    %v1517 = vunpack.c.h.b16 %v1445
    %v1518 = vunpack.c.l.b16 %v1446
    %v1519 = vunpack.c.h.b16 %v1446
    %v1520 = vunpack.c.l.b16 %v1447
    %v1521 = vunpack.c.h.b16 %v1447
    %v1522 = vunpack.c.l.b16 %v1448
    %v1523 = vunpack.c.h.b16 %v1448
    %v1524 = vunpack.c.l.b16 %v1449
    %v1525 = vunpack.c.h.b16 %v1449
    %v1526 = vunpack.c.l.b16 %v1450
    %v1527 = vunpack.c.h.b16 %v1450
    %v1528 = vunpack.c.l.b16 %v1451
    %v1529 = vunpack.c.h.b16 %v1451
    %v1530 = vunpack.c.l.b16 %v1452
    %v1531 = vunpack.c.h.b16 %v1452
    %v1532 = vunpack.c.l.b16 %v1453
    %v1533 = vunpack.c.h.b16 %v1453
    %v1534 = vunpack.c.l.b16 %v1454
    %v1535 = vunpack.c.h.b16 %v1454
    %v1536 = vunpack.c.l.b16 %v1455
    %v1537 = vunpack.c.h.b16 %v1455
    %v1538 = vunpack.c.l.b16 %v1456
    %v1539 = vunpack.c.h.b16 %v1456
    %v1540 = vunpack.c.l.b16 %v1457
    %v1541 = vunpack.c.h.b16 %v1457
    %v1542 = vunpack.c.l.b16 %v1458
    %v1543 = vunpack.c.h.b16 %v1458
    %v1544 = vunpack.c.l.b16 %v1459
    %v1545 = vunpack.c.h.b16 %v1459
    %v1546 = vunpack.c.l.b16 %v1460
    %v1547 = vunpack.c.h.b16 %v1460
    %v1548 = vunpack.c.l.b16 %v1461
    %v1549 = vunpack.c.h.b16 %v1461
    %v1550 = vunpack.c.l.b16 %v1462
    %v1551 = vunpack.c.h.b16 %v1462
    %v1552 = vunpack.c.l.b16 %v1463
    %v1553 = vunpack.c.h.b16 %v1463
    %v1554 = vunpack.c.l.b16 %v1464
    %v1555 = vunpack.c.h.b16 %v1464
    %v1556 = vunpack.c.l.b16 %v1465
    %v1557 = vunpack.c.h.b16 %v1465
    %v1558 = vunpack.c.l.b16 %v1466
    %v1559 = vunpack.c.h.b16 %v1466
    %v1560 = vunpack.c.l.b16 %v1467
    %v1561 = vunpack.c.h.b16 %v1467
    %v1562 = vunpack.c.l.b16 %v1468
    %v1563 = vunpack.c.h.b16 %v1468
    %v1564 = vunpack.c.l.b16 %v1469
    %v1565 = vunpack.c.h.b16 %v1469
    %v1566 = vpack.c.b16 %v1506, %v1502
    %v1567 = vpack.c.b16 %v1507, %v1503
    %v1568 = vpack.c.b16 %v1508, %v1504
    %v1569 = vpack.c.b16 %v1509, %v1505
    %v1570 = vpack.c.b16 %v1514, %v1510
    %v1571 = vpack.c.b16 %v1515, %v1511
    %v1572 = vpack.c.b16 %v1516, %v1512
    %v1573 = vpack.c.b16 %v1517, %v1513
    %v1574 = vpack.c.b16 %v1522, %v1518
    %v1575 = vpack.c.b16 %v1523, %v1519
    %v1576 = vpack.c.b16 %v1524, %v1520
    %v1577 = vpack.c.b16 %v1525, %v1521
    %v1578 = vpack.c.b16 %v1530, %v1526
    %v1579 = vpack.c.b16 %v1531, %v1527
    %v1580 = vpack.c.b16 %v1532, %v1528
    %v1581 = vpack.c.b16 %v1533, %v1529
    %v1582 = vpack.c.b16 %v1538, %v1534
    %v1583 = vpack.c.b16 %v1539, %v1535
    %v1584 = vpack.c.b16 %v1540, %v1536
    %v1585 = vpack.c.b16 %v1541, %v1537
    %v1586 = vpack.c.b16 %v1546, %v1542
    %v1587 = vpack.c.b16 %v1547, %v1543
    %v1588 = vpack.c.b16 %v1548, %v1544
    %v1589 = vpack.c.b16 %v1549, %v1545
    %v1590 = vpack.c.b16 %v1554, %v1550
    %v1591 = vpack.c.b16 %v1555, %v1551
    %v1592 = vpack.c.b16 %v1556, %v1552
    %v1593 = vpack.c.b16 %v1557, %v1553
    %v1594 = vpack.c.b16 %v1562, %v1558
    %v1595 = vpack.c.b16 %v1563, %v1559
    %v1596 = vpack.c.b16 %v1564, %v1560
    %v1597 = vpack.c.b16 %v1565, %v1561
    %1630 = vmatprep.subr.bf16.mxu0 %v1567
    %1631 = vmatpush1.bf16.msra.mxu0 %v1566
    %1632 = vmatprep.subr.bf16.mxu0 %v1571
    %1633 = vmatpush1.bf16.msra.mxu0 %v1570
    %1634 = vmatprep.subr.bf16.mxu0 %v1575
    %1635 = vmatpush1.bf16.msra.mxu0 %v1574
    %1636 = vmatprep.subr.bf16.mxu0 %v1579
    %1637 = vmatpush1.bf16.msra.mxu0 %v1578
    %1638 = vmatprep.subr.bf16.mxu0 %v1583
    %1639 = vmatpush1.bf16.msra.mxu0 %v1582
    %1640 = vmatprep.subr.bf16.mxu0 %v1587
    %1641 = vmatpush1.bf16.msra.mxu0 %v1586
    %1642 = vmatprep.subr.bf16.mxu0 %v1591
    %1643 = vmatpush1.bf16.msra.mxu0 %v1590
    %1644 = vmatprep.subr.bf16.mxu0 %v1595
    %1645 = vmatpush1.bf16.msra.mxu0 %v1594
    %1646 = vmatprep.subr.bf16.mxu0 0
    %1647 = vmatpush1.bf16.msra.mxu0 0
    %1648 = vmatprep.subr.bf16.mxu0 0
    %1649 = vmatpush1.bf16.msra.mxu0 0
    %1650 = vmatprep.subr.bf16.mxu0 0
    %1651 = vmatpush1.bf16.msra.mxu0 0
    %1652 = vmatprep.subr.bf16.mxu0 0
    %1653 = vmatpush1.bf16.msra.mxu0 0
    %1654 = vmatprep.subr.bf16.mxu0 0
    %1655 = vmatpush1.bf16.msra.mxu0 0
    %1656 = vmatprep.subr.bf16.mxu0 0
    %1657 = vmatpush1.bf16.msra.mxu0 0
    %1658 = vmatprep.subr.bf16.mxu0 0
    %1659 = vmatpush1.bf16.msra.mxu0 0
    %1660 = vmatprep.subr.bf16.mxu0 0
    %1661 = vmatpush1.bf16.msra.mxu0 0
    %1662 = vmatprep.mubr.bf16.mxu0 0
    %1663 = vmatmul.mubr.bf16.gmra.mrb[0].mxu0 %v1437
    %v1664 = vpop.f32.mrb[0].mxu0
    %v1665 = vadd.f32 0.0, %v1664
    %v1666 = vpop.f32.mrb[0].mxu0
    %v1667 = vadd.f32 0.0, %v1666
    %v1668 = vpop.f32.mrb[0].mxu0
    %v1669 = vpop.f32.mrb[0].mxu0
    %1670 = vdwg.mxu0
    %1671 = vmatprep.subr.bf16.mxu0 %v1569
    %1672 = vmatpush1.bf16.msra.mxu0 %v1568
    %1673 = vmatprep.subr.bf16.mxu0 %v1573
    %1674 = vmatpush1.bf16.msra.mxu0 %v1572
    %1675 = vmatprep.subr.bf16.mxu0 %v1577
    %1676 = vmatpush1.bf16.msra.mxu0 %v1576
    %1677 = vmatprep.subr.bf16.mxu0 %v1581
    %1678 = vmatpush1.bf16.msra.mxu0 %v1580
    %1679 = vmatprep.subr.bf16.mxu0 %v1585
    %1680 = vmatpush1.bf16.msra.mxu0 %v1584
    %1681 = vmatprep.subr.bf16.mxu0 %v1589
    %1682 = vmatpush1.bf16.msra.mxu0 %v1588
    %1683 = vmatprep.subr.bf16.mxu0 %v1593
    %1684 = vmatpush1.bf16.msra.mxu0 %v1592
    %1685 = vmatprep.subr.bf16.mxu0 %v1597
    %1686 = vmatpush1.bf16.msra.mxu0 %v1596
    %1687 = vmatprep.subr.bf16.mxu0 0
    %1688 = vmatpush1.bf16.msra.mxu0 0
    %1689 = vmatprep.subr.bf16.mxu0 0
    %1690 = vmatpush1.bf16.msra.mxu0 0
    %1691 = vmatprep.subr.bf16.mxu0 0
    %1692 = vmatpush1.bf16.msra.mxu0 0
    %1693 = vmatprep.subr.bf16.mxu0 0
    %1694 = vmatpush1.bf16.msra.mxu0 0
    %1695 = vmatprep.subr.bf16.mxu0 0
    %1696 = vmatpush1.bf16.msra.mxu0 0
    %1697 = vmatprep.subr.bf16.mxu0 0
    %1698 = vmatpush1.bf16.msra.mxu0 0
    %1699 = vmatprep.subr.bf16.mxu0 0
    %1700 = vmatpush1.bf16.msra.mxu0 0
    %1701 = vmatprep.subr.bf16.mxu0 0
    %1702 = vmatpush1.bf16.msra.mxu0 0
    %1703 = vmatprep.mubr.bf16.mxu0 0
    %1704 = vmatmul.mubr.bf16.gmra.mrb[0].mxu0 %v1437
    %v1705 = vpop.f32.mrb[0].mxu0
    %v1706 = vadd.f32 0.0, %v1705
    %v1707 = vpop.f32.mrb[0].mxu0
    %v1708 = vadd.f32 0.0, %v1707
    %v1709 = vpop.f32.mrb[0].mxu0
    %v1710 = vpop.f32.mrb[0].mxu0
    %1711 = vdwg.mxu0
    %v1712 = vadd.f32 %v1433, %v1665
    %v1713 = vadd.f32 %v1434, %v1667
    %v1714 = vadd.f32 %v1435, %v1706
    %v1715 = vadd.f32 %v1436, %v1708
    %v1716 = vxor.u32 %v1712, 2147483648
    %v1717 = vmul.f32 %v1716, 1.442695
    %v1718 = vpow.pop %v1717
    %v1719 = vadd.f32 %v1718, 1.0
    %v1720 = vrcp.pop %v1719
    %v1721 = vmul.f32 1.0, %v1720
    %v1722 = vxor.u32 %v1713, 2147483648
    %v1723 = vmul.f32 %v1722, 1.442695
    %v1724 = vpow.pop %v1723
    %v1725 = vadd.f32 %v1724, 1.0
    %v1726 = vrcp.pop %v1725
    %v1727 = vmul.f32 1.0, %v1726
    %v1728 = vtanh.pop %v1714
    %v1729 = vxor.u32 %v1715, 2147483648
    %v1730 = vmul.f32 %v1729, 1.442695
    %v1731 = vpow.pop %v1730
    %v1732 = vadd.f32 %v1731, 1.0
    %v1733 = vrcp.pop %v1732
    %v1734 = vmul.f32 1.0, %v1733
    %v1735 = vmul.f32 %v1727, %v1427
    %v1736 = vmul.f32 %v1721, %v1728
    %v1737 = vadd.f32 %v1735, %v1736
    %v1738 = vtanh.pop %v1737
    %v1739 = vmul.f32 %v1734, %v1738
    %s1740 = scalar_lea.vmem [#allocation3], 24
    %1741 = vst [vmem:[%s1740] sm:$0xff] %v1739
    %s1742 = scalar_lea.vmem [#allocation2], 128
    %v1743 = vld [vmem:[%s1742] sm:$0xff]
    %v1744 = vld [vmem:[%s1742 + $0x8] sm:$0xff]
    %v1745 = vld [vmem:[%s1742 + $0x10] sm:$0xff]
    %v1746 = vld [vmem:[%s1742 + $0x18] sm:$0xff]
    %v1747 = vpack.c.bf16 %v1739, %v1739
    %v1748 = vld [vmem:[#allocation6] sm:$0xff]
    %v1749 = vld [vmem:[#allocation6 + $0x8] sm:$0xff]
    %v1750 = vld [vmem:[#allocation6 + $0x10] sm:$0xff]
    %v1751 = vld [vmem:[#allocation6 + $0x18] sm:$0xff]
    %v1752 = vld [vmem:[#allocation6 + $0x20] sm:$0xff]
    %v1753 = vld [vmem:[#allocation6 + $0x28] sm:$0xff]
    %v1754 = vld [vmem:[#allocation6 + $0x30] sm:$0xff]
    %v1755 = vld [vmem:[#allocation6 + $0x38] sm:$0xff]
    %v1756 = vld [vmem:[#allocation6 + $0x40] sm:$0xff]
    %v1757 = vld [vmem:[#allocation6 + $0x48] sm:$0xff]
    %v1758 = vld [vmem:[#allocation6 + $0x50] sm:$0xff]
    %v1759 = vld [vmem:[#allocation6 + $0x58] sm:$0xff]
    %v1760 = vld [vmem:[#allocation6 + $0x60] sm:$0xff]
    %v1761 = vld [vmem:[#allocation6 + $0x68] sm:$0xff]
    %v1762 = vld [vmem:[#allocation6 + $0x70] sm:$0xff]
    %v1763 = vld [vmem:[#allocation6 + $0x78] sm:$0xff]
    %v1764 = vld [vmem:[#allocation6 + $0x80] sm:$0xff]
    %v1765 = vld [vmem:[#allocation6 + $0x88] sm:$0xff]
    %v1766 = vld [vmem:[#allocation6 + $0x90] sm:$0xff]
    %v1767 = vld [vmem:[#allocation6 + $0x98] sm:$0xff]
    %v1768 = vld [vmem:[#allocation6 + $0xa0] sm:$0xff]
    %v1769 = vld [vmem:[#allocation6 + $0xa8] sm:$0xff]
    %v1770 = vld [vmem:[#allocation6 + $0xb0] sm:$0xff]
    %v1771 = vld [vmem:[#allocation6 + $0xb8] sm:$0xff]
    %v1772 = vld [vmem:[#allocation6 + $0xc0] sm:$0xff]
    %v1773 = vld [vmem:[#allocation6 + $0xc8] sm:$0xff]
    %v1774 = vld [vmem:[#allocation6 + $0xd0] sm:$0xff]
    %v1775 = vld [vmem:[#allocation6 + $0xd8] sm:$0xff]
    %v1776 = vld [vmem:[#allocation6 + $0xe0] sm:$0xff]
    %v1777 = vld [vmem:[#allocation6 + $0xe8] sm:$0xff]
    %v1778 = vld [vmem:[#allocation6 + $0xf0] sm:$0xff]
    %v1779 = vld [vmem:[#allocation6 + $0xf8] sm:$0xff]
    %v1812 = vunpack.c.l.b16 %v1748
    %v1813 = vunpack.c.h.b16 %v1748
    %v1814 = vunpack.c.l.b16 %v1749
    %v1815 = vunpack.c.h.b16 %v1749
    %v1816 = vunpack.c.l.b16 %v1750
    %v1817 = vunpack.c.h.b16 %v1750
    %v1818 = vunpack.c.l.b16 %v1751
    %v1819 = vunpack.c.h.b16 %v1751
    %v1820 = vunpack.c.l.b16 %v1752
    %v1821 = vunpack.c.h.b16 %v1752
    %v1822 = vunpack.c.l.b16 %v1753
    %v1823 = vunpack.c.h.b16 %v1753
    %v1824 = vunpack.c.l.b16 %v1754
    %v1825 = vunpack.c.h.b16 %v1754
    %v1826 = vunpack.c.l.b16 %v1755
    %v1827 = vunpack.c.h.b16 %v1755
    %v1828 = vunpack.c.l.b16 %v1756
    %v1829 = vunpack.c.h.b16 %v1756
    %v1830 = vunpack.c.l.b16 %v1757
    %v1831 = vunpack.c.h.b16 %v1757
    %v1832 = vunpack.c.l.b16 %v1758
    %v1833 = vunpack.c.h.b16 %v1758
    %v1834 = vunpack.c.l.b16 %v1759
    %v1835 = vunpack.c.h.b16 %v1759
    %v1836 = vunpack.c.l.b16 %v1760
    %v1837 = vunpack.c.h.b16 %v1760
    %v1838 = vunpack.c.l.b16 %v1761
    %v1839 = vunpack.c.h.b16 %v1761
    %v1840 = vunpack.c.l.b16 %v1762
    %v1841 = vunpack.c.h.b16 %v1762
    %v1842 = vunpack.c.l.b16 %v1763
    %v1843 = vunpack.c.h.b16 %v1763
    %v1844 = vunpack.c.l.b16 %v1764
    %v1845 = vunpack.c.h.b16 %v1764
    %v1846 = vunpack.c.l.b16 %v1765
    %v1847 = vunpack.c.h.b16 %v1765
    %v1848 = vunpack.c.l.b16 %v1766
    %v1849 = vunpack.c.h.b16 %v1766
    %v1850 = vunpack.c.l.b16 %v1767
    %v1851 = vunpack.c.h.b16 %v1767
    %v1852 = vunpack.c.l.b16 %v1768
    %v1853 = vunpack.c.h.b16 %v1768
    %v1854 = vunpack.c.l.b16 %v1769
    %v1855 = vunpack.c.h.b16 %v1769
    %v1856 = vunpack.c.l.b16 %v1770
    %v1857 = vunpack.c.h.b16 %v1770
    %v1858 = vunpack.c.l.b16 %v1771
    %v1859 = vunpack.c.h.b16 %v1771
    %v1860 = vunpack.c.l.b16 %v1772
    %v1861 = vunpack.c.h.b16 %v1772
    %v1862 = vunpack.c.l.b16 %v1773
    %v1863 = vunpack.c.h.b16 %v1773
    %v1864 = vunpack.c.l.b16 %v1774
    %v1865 = vunpack.c.h.b16 %v1774
    %v1866 = vunpack.c.l.b16 %v1775
    %v1867 = vunpack.c.h.b16 %v1775
    %v1868 = vunpack.c.l.b16 %v1776
    %v1869 = vunpack.c.h.b16 %v1776
    %v1870 = vunpack.c.l.b16 %v1777
    %v1871 = vunpack.c.h.b16 %v1777
    %v1872 = vunpack.c.l.b16 %v1778
    %v1873 = vunpack.c.h.b16 %v1778
    %v1874 = vunpack.c.l.b16 %v1779
    %v1875 = vunpack.c.h.b16 %v1779
    %v1876 = vpack.c.b16 %v1816, %v1812
    %v1877 = vpack.c.b16 %v1817, %v1813
    %v1878 = vpack.c.b16 %v1818, %v1814
    %v1879 = vpack.c.b16 %v1819, %v1815
    %v1880 = vpack.c.b16 %v1824, %v1820
    %v1881 = vpack.c.b16 %v1825, %v1821
    %v1882 = vpack.c.b16 %v1826, %v1822
    %v1883 = vpack.c.b16 %v1827, %v1823
    %v1884 = vpack.c.b16 %v1832, %v1828
    %v1885 = vpack.c.b16 %v1833, %v1829
    %v1886 = vpack.c.b16 %v1834, %v1830
    %v1887 = vpack.c.b16 %v1835, %v1831
    %v1888 = vpack.c.b16 %v1840, %v1836
    %v1889 = vpack.c.b16 %v1841, %v1837
    %v1890 = vpack.c.b16 %v1842, %v1838
    %v1891 = vpack.c.b16 %v1843, %v1839
    %v1892 = vpack.c.b16 %v1848, %v1844
    %v1893 = vpack.c.b16 %v1849, %v1845
    %v1894 = vpack.c.b16 %v1850, %v1846
    %v1895 = vpack.c.b16 %v1851, %v1847
    %v1896 = vpack.c.b16 %v1856, %v1852
    %v1897 = vpack.c.b16 %v1857, %v1853
    %v1898 = vpack.c.b16 %v1858, %v1854
    %v1899 = vpack.c.b16 %v1859, %v1855
    %v1900 = vpack.c.b16 %v1864, %v1860
    %v1901 = vpack.c.b16 %v1865, %v1861
    %v1902 = vpack.c.b16 %v1866, %v1862
    %v1903 = vpack.c.b16 %v1867, %v1863
    %v1904 = vpack.c.b16 %v1872, %v1868
    %v1905 = vpack.c.b16 %v1873, %v1869
    %v1906 = vpack.c.b16 %v1874, %v1870
    %v1907 = vpack.c.b16 %v1875, %v1871
    %1940 = vmatprep.subr.bf16.mxu0 %v1877
    %1941 = vmatpush1.bf16.msra.mxu0 %v1876
    %1942 = vmatprep.subr.bf16.mxu0 %v1881
    %1943 = vmatpush1.bf16.msra.mxu0 %v1880
    %1944 = vmatprep.subr.bf16.mxu0 %v1885
    %1945 = vmatpush1.bf16.msra.mxu0 %v1884
    %1946 = vmatprep.subr.bf16.mxu0 %v1889
    %1947 = vmatpush1.bf16.msra.mxu0 %v1888
    %1948 = vmatprep.subr.bf16.mxu0 %v1893
    %1949 = vmatpush1.bf16.msra.mxu0 %v1892
    %1950 = vmatprep.subr.bf16.mxu0 %v1897
    %1951 = vmatpush1.bf16.msra.mxu0 %v1896
    %1952 = vmatprep.subr.bf16.mxu0 %v1901
    %1953 = vmatpush1.bf16.msra.mxu0 %v1900
    %1954 = vmatprep.subr.bf16.mxu0 %v1905
    %1955 = vmatpush1.bf16.msra.mxu0 %v1904
    %1956 = vmatprep.subr.bf16.mxu0 0
    %1957 = vmatpush1.bf16.msra.mxu0 0
    %1958 = vmatprep.subr.bf16.mxu0 0
    %1959 = vmatpush1.bf16.msra.mxu0 0
    %1960 = vmatprep.subr.bf16.mxu0 0
    %1961 = vmatpush1.bf16.msra.mxu0 0
    %1962 = vmatprep.subr.bf16.mxu0 0
    %1963 = vmatpush1.bf16.msra.mxu0 0
    %1964 = vmatprep.subr.bf16.mxu0 0
    %1965 = vmatpush1.bf16.msra.mxu0 0
    %1966 = vmatprep.subr.bf16.mxu0 0
    %1967 = vmatpush1.bf16.msra.mxu0 0
    %1968 = vmatprep.subr.bf16.mxu0 0
    %1969 = vmatpush1.bf16.msra.mxu0 0
    %1970 = vmatprep.subr.bf16.mxu0 0
    %1971 = vmatpush1.bf16.msra.mxu0 0
    %1972 = vmatprep.mubr.bf16.mxu0 0
    %1973 = vmatmul.mubr.bf16.gmra.mrb[0].mxu0 %v1747
    %v1974 = vpop.f32.mrb[0].mxu0
    %v1975 = vadd.f32 0.0, %v1974
    %v1976 = vpop.f32.mrb[0].mxu0
    %v1977 = vadd.f32 0.0, %v1976
    %v1978 = vpop.f32.mrb[0].mxu0
    %v1979 = vpop.f32.mrb[0].mxu0
    %1980 = vdwg.mxu0
    %1981 = vmatprep.subr.bf16.mxu0 %v1879
    %1982 = vmatpush1.bf16.msra.mxu0 %v1878
    %1983 = vmatprep.subr.bf16.mxu0 %v1883
    %1984 = vmatpush1.bf16.msra.mxu0 %v1882
    %1985 = vmatprep.subr.bf16.mxu0 %v1887
    %1986 = vmatpush1.bf16.msra.mxu0 %v1886
    %1987 = vmatprep.subr.bf16.mxu0 %v1891
    %1988 = vmatpush1.bf16.msra.mxu0 %v1890
    %1989 = vmatprep.subr.bf16.mxu0 %v1895
    %1990 = vmatpush1.bf16.msra.mxu0 %v1894
    %1991 = vmatprep.subr.bf16.mxu0 %v1899
    %1992 = vmatpush1.bf16.msra.mxu0 %v1898
    %1993 = vmatprep.subr.bf16.mxu0 %v1903
    %1994 = vmatpush1.bf16.msra.mxu0 %v1902
    %1995 = vmatprep.subr.bf16.mxu0 %v1907
    %1996 = vmatpush1.bf16.msra.mxu0 %v1906
    %1997 = vmatprep.subr.bf16.mxu0 0
    %1998 = vmatpush1.bf16.msra.mxu0 0
    %1999 = vmatprep.subr.bf16.mxu0 0
    %2000 = vmatpush1.bf16.msra.mxu0 0
    %2001 = vmatprep.subr.bf16.mxu0 0
    %2002 = vmatpush1.bf16.msra.mxu0 0
    %2003 = vmatprep.subr.bf16.mxu0 0
    %2004 = vmatpush1.bf16.msra.mxu0 0
    %2005 = vmatprep.subr.bf16.mxu0 0
    %2006 = vmatpush1.bf16.msra.mxu0 0
    %2007 = vmatprep.subr.bf16.mxu0 0
    %2008 = vmatpush1.bf16.msra.mxu0 0
    %2009 = vmatprep.subr.bf16.mxu0 0
    %2010 = vmatpush1.bf16.msra.mxu0 0
    %2011 = vmatprep.subr.bf16.mxu0 0
    %2012 = vmatpush1.bf16.msra.mxu0 0
    %2013 = vmatprep.mubr.bf16.mxu0 0
    %2014 = vmatmul.mubr.bf16.gmra.mrb[0].mxu0 %v1747
    %v2015 = vpop.f32.mrb[0].mxu0
    %v2016 = vadd.f32 0.0, %v2015
    %v2017 = vpop.f32.mrb[0].mxu0
    %v2018 = vadd.f32 0.0, %v2017
    %v2019 = vpop.f32.mrb[0].mxu0
    %v2020 = vpop.f32.mrb[0].mxu0
    %2021 = vdwg.mxu0
    %v2022 = vadd.f32 %v1743, %v1975
    %v2023 = vadd.f32 %v1744, %v1977
    %v2024 = vadd.f32 %v1745, %v2016
    %v2025 = vadd.f32 %v1746, %v2018
    %v2026 = vxor.u32 %v2022, 2147483648
    %v2027 = vmul.f32 %v2026, 1.442695
    %v2028 = vpow.pop %v2027
    %v2029 = vadd.f32 %v2028, 1.0
    %v2030 = vrcp.pop %v2029
    %v2031 = vmul.f32 1.0, %v2030
    %v2032 = vxor.u32 %v2023, 2147483648
    %v2033 = vmul.f32 %v2032, 1.442695
    %v2034 = vpow.pop %v2033
    %v2035 = vadd.f32 %v2034, 1.0
    %v2036 = vrcp.pop %v2035
    %v2037 = vmul.f32 1.0, %v2036
    %v2038 = vtanh.pop %v2024
    %v2039 = vxor.u32 %v2025, 2147483648
    %v2040 = vmul.f32 %v2039, 1.442695
    %v2041 = vpow.pop %v2040
    %v2042 = vadd.f32 %v2041, 1.0
    %v2043 = vrcp.pop %v2042
    %v2044 = vmul.f32 1.0, %v2043
    %v2045 = vmul.f32 %v2037, %v1737
    %v2046 = vmul.f32 %v2031, %v2038
    %v2047 = vadd.f32 %v2045, %v2046
    %v2048 = vtanh.pop %v2047
    %v2049 = vmul.f32 %v2044, %v2048
    %s2050 = scalar_lea.vmem [#allocation3], 32
    %2051 = vst [vmem:[%s2050] sm:$0xff] %v2049
    %s2052 = scalar_lea.vmem [#allocation2], 160
    %v2053 = vld [vmem:[%s2052] sm:$0xff]
    %v2054 = vld [vmem:[%s2052 + $0x8] sm:$0xff]
    %v2055 = vld [vmem:[%s2052 + $0x10] sm:$0xff]
    %v2056 = vld [vmem:[%s2052 + $0x18] sm:$0xff]
    %v2057 = vpack.c.bf16 %v2049, %v2049
    %v2058 = vld [vmem:[#allocation6] sm:$0xff]
    %v2059 = vld [vmem:[#allocation6 + $0x8] sm:$0xff]
    %v2060 = vld [vmem:[#allocation6 + $0x10] sm:$0xff]
    %v2061 = vld [vmem:[#allocation6 + $0x18] sm:$0xff]
    %v2062 = vld [vmem:[#allocation6 + $0x20] sm:$0xff]
    %v2063 = vld [vmem:[#allocation6 + $0x28] sm:$0xff]
    %v2064 = vld [vmem:[#allocation6 + $0x30] sm:$0xff]
    %v2065 = vld [vmem:[#allocation6 + $0x38] sm:$0xff]
    %v2066 = vld [vmem:[#allocation6 + $0x40] sm:$0xff]
    %v2067 = vld [vmem:[#allocation6 + $0x48] sm:$0xff]
    %v2068 = vld [vmem:[#allocation6 + $0x50] sm:$0xff]
    %v2069 = vld [vmem:[#allocation6 + $0x58] sm:$0xff]
    %v2070 = vld [vmem:[#allocation6 + $0x60] sm:$0xff]
    %v2071 = vld [vmem:[#allocation6 + $0x68] sm:$0xff]
    %v2072 = vld [vmem:[#allocation6 + $0x70] sm:$0xff]
    %v2073 = vld [vmem:[#allocation6 + $0x78] sm:$0xff]
    %v2074 = vld [vmem:[#allocation6 + $0x80] sm:$0xff]
    %v2075 = vld [vmem:[#allocation6 + $0x88] sm:$0xff]
    %v2076 = vld [vmem:[#allocation6 + $0x90] sm:$0xff]
    %v2077 = vld [vmem:[#allocation6 + $0x98] sm:$0xff]
    %v2078 = vld [vmem:[#allocation6 + $0xa0] sm:$0xff]
    %v2079 = vld [vmem:[#allocation6 + $0xa8] sm:$0xff]
    %v2080 = vld [vmem:[#allocation6 + $0xb0] sm:$0xff]
    %v2081 = vld [vmem:[#allocation6 + $0xb8] sm:$0xff]
    %v2082 = vld [vmem:[#allocation6 + $0xc0] sm:$0xff]
    %v2083 = vld [vmem:[#allocation6 + $0xc8] sm:$0xff]
    %v2084 = vld [vmem:[#allocation6 + $0xd0] sm:$0xff]
    %v2085 = vld [vmem:[#allocation6 + $0xd8] sm:$0xff]
    %v2086 = vld [vmem:[#allocation6 + $0xe0] sm:$0xff]
    %v2087 = vld [vmem:[#allocation6 + $0xe8] sm:$0xff]
    %v2088 = vld [vmem:[#allocation6 + $0xf0] sm:$0xff]
    %v2089 = vld [vmem:[#allocation6 + $0xf8] sm:$0xff]
    %v2122 = vunpack.c.l.b16 %v2058
    %v2123 = vunpack.c.h.b16 %v2058
    %v2124 = vunpack.c.l.b16 %v2059
    %v2125 = vunpack.c.h.b16 %v2059
    %v2126 = vunpack.c.l.b16 %v2060
    %v2127 = vunpack.c.h.b16 %v2060
    %v2128 = vunpack.c.l.b16 %v2061
    %v2129 = vunpack.c.h.b16 %v2061
    %v2130 = vunpack.c.l.b16 %v2062
    %v2131 = vunpack.c.h.b16 %v2062
    %v2132 = vunpack.c.l.b16 %v2063
    %v2133 = vunpack.c.h.b16 %v2063
    %v2134 = vunpack.c.l.b16 %v2064
    %v2135 = vunpack.c.h.b16 %v2064
    %v2136 = vunpack.c.l.b16 %v2065
    %v2137 = vunpack.c.h.b16 %v2065
    %v2138 = vunpack.c.l.b16 %v2066
    %v2139 = vunpack.c.h.b16 %v2066
    %v2140 = vunpack.c.l.b16 %v2067
    %v2141 = vunpack.c.h.b16 %v2067
    %v2142 = vunpack.c.l.b16 %v2068
    %v2143 = vunpack.c.h.b16 %v2068
    %v2144 = vunpack.c.l.b16 %v2069
    %v2145 = vunpack.c.h.b16 %v2069
    %v2146 = vunpack.c.l.b16 %v2070
    %v2147 = vunpack.c.h.b16 %v2070
    %v2148 = vunpack.c.l.b16 %v2071
    %v2149 = vunpack.c.h.b16 %v2071
    %v2150 = vunpack.c.l.b16 %v2072
    %v2151 = vunpack.c.h.b16 %v2072
    %v2152 = vunpack.c.l.b16 %v2073
    %v2153 = vunpack.c.h.b16 %v2073
    %v2154 = vunpack.c.l.b16 %v2074
    %v2155 = vunpack.c.h.b16 %v2074
    %v2156 = vunpack.c.l.b16 %v2075
    %v2157 = vunpack.c.h.b16 %v2075
    %v2158 = vunpack.c.l.b16 %v2076
    %v2159 = vunpack.c.h.b16 %v2076
    %v2160 = vunpack.c.l.b16 %v2077
    %v2161 = vunpack.c.h.b16 %v2077
    %v2162 = vunpack.c.l.b16 %v2078
    %v2163 = vunpack.c.h.b16 %v2078
    %v2164 = vunpack.c.l.b16 %v2079
    %v2165 = vunpack.c.h.b16 %v2079
    %v2166 = vunpack.c.l.b16 %v2080
    %v2167 = vunpack.c.h.b16 %v2080
    %v2168 = vunpack.c.l.b16 %v2081
    %v2169 = vunpack.c.h.b16 %v2081
    %v2170 = vunpack.c.l.b16 %v2082
    %v2171 = vunpack.c.h.b16 %v2082
    %v2172 = vunpack.c.l.b16 %v2083
    %v2173 = vunpack.c.h.b16 %v2083
    %v2174 = vunpack.c.l.b16 %v2084
    %v2175 = vunpack.c.h.b16 %v2084
    %v2176 = vunpack.c.l.b16 %v2085
    %v2177 = vunpack.c.h.b16 %v2085
    %v2178 = vunpack.c.l.b16 %v2086
    %v2179 = vunpack.c.h.b16 %v2086
    %v2180 = vunpack.c.l.b16 %v2087
    %v2181 = vunpack.c.h.b16 %v2087
    %v2182 = vunpack.c.l.b16 %v2088
    %v2183 = vunpack.c.h.b16 %v2088
    %v2184 = vunpack.c.l.b16 %v2089
    %v2185 = vunpack.c.h.b16 %v2089
    %v2186 = vpack.c.b16 %v2126, %v2122
    %v2187 = vpack.c.b16 %v2127, %v2123
    %v2188 = vpack.c.b16 %v2128, %v2124
    %v2189 = vpack.c.b16 %v2129, %v2125
    %v2190 = vpack.c.b16 %v2134, %v2130
    %v2191 = vpack.c.b16 %v2135, %v2131
    %v2192 = vpack.c.b16 %v2136, %v2132
    %v2193 = vpack.c.b16 %v2137, %v2133
    %v2194 = vpack.c.b16 %v2142, %v2138
    %v2195 = vpack.c.b16 %v2143, %v2139
    %v2196 = vpack.c.b16 %v2144, %v2140
    %v2197 = vpack.c.b16 %v2145, %v2141
    %v2198 = vpack.c.b16 %v2150, %v2146
    %v2199 = vpack.c.b16 %v2151, %v2147
    %v2200 = vpack.c.b16 %v2152, %v2148
    %v2201 = vpack.c.b16 %v2153, %v2149
    %v2202 = vpack.c.b16 %v2158, %v2154
    %v2203 = vpack.c.b16 %v2159, %v2155
    %v2204 = vpack.c.b16 %v2160, %v2156
    %v2205 = vpack.c.b16 %v2161, %v2157
    %v2206 = vpack.c.b16 %v2166, %v2162
    %v2207 = vpack.c.b16 %v2167, %v2163
    %v2208 = vpack.c.b16 %v2168, %v2164
    %v2209 = vpack.c.b16 %v2169, %v2165
    %v2210 = vpack.c.b16 %v2174, %v2170
    %v2211 = vpack.c.b16 %v2175, %v2171
    %v2212 = vpack.c.b16 %v2176, %v2172
    %v2213 = vpack.c.b16 %v2177, %v2173
    %v2214 = vpack.c.b16 %v2182, %v2178
    %v2215 = vpack.c.b16 %v2183, %v2179
    %v2216 = vpack.c.b16 %v2184, %v2180
    %v2217 = vpack.c.b16 %v2185, %v2181
    %2250 = vmatprep.subr.bf16.mxu0 %v2187
    %2251 = vmatpush1.bf16.msra.mxu0 %v2186
    %2252 = vmatprep.subr.bf16.mxu0 %v2191
    %2253 = vmatpush1.bf16.msra.mxu0 %v2190
    %2254 = vmatprep.subr.bf16.mxu0 %v2195
    %2255 = vmatpush1.bf16.msra.mxu0 %v2194
    %2256 = vmatprep.subr.bf16.mxu0 %v2199
    %2257 = vmatpush1.bf16.msra.mxu0 %v2198
    %2258 = vmatprep.subr.bf16.mxu0 %v2203
    %2259 = vmatpush1.bf16.msra.mxu0 %v2202
    %2260 = vmatprep.subr.bf16.mxu0 %v2207
    %2261 = vmatpush1.bf16.msra.mxu0 %v2206
    %2262 = vmatprep.subr.bf16.mxu0 %v2211
    %2263 = vmatpush1.bf16.msra.mxu0 %v2210
    %2264 = vmatprep.subr.bf16.mxu0 %v2215
    %2265 = vmatpush1.bf16.msra.mxu0 %v2214
    %2266 = vmatprep.subr.bf16.mxu0 0
    %2267 = vmatpush1.bf16.msra.mxu0 0
    %2268 = vmatprep.subr.bf16.mxu0 0
    %2269 = vmatpush1.bf16.msra.mxu0 0
    %2270 = vmatprep.subr.bf16.mxu0 0
    %2271 = vmatpush1.bf16.msra.mxu0 0
    %2272 = vmatprep.subr.bf16.mxu0 0
    %2273 = vmatpush1.bf16.msra.mxu0 0
    %2274 = vmatprep.subr.bf16.mxu0 0
    %2275 = vmatpush1.bf16.msra.mxu0 0
    %2276 = vmatprep.subr.bf16.mxu0 0
    %2277 = vmatpush1.bf16.msra.mxu0 0
    %2278 = vmatprep.subr.bf16.mxu0 0
    %2279 = vmatpush1.bf16.msra.mxu0 0
    %2280 = vmatprep.subr.bf16.mxu0 0
    %2281 = vmatpush1.bf16.msra.mxu0 0
    %2282 = vmatprep.mubr.bf16.mxu0 0
    %2283 = vmatmul.mubr.bf16.gmra.mrb[0].mxu0 %v2057
    %v2284 = vpop.f32.mrb[0].mxu0
    %v2285 = vadd.f32 0.0, %v2284
    %v2286 = vpop.f32.mrb[0].mxu0
    %v2287 = vadd.f32 0.0, %v2286
    %v2288 = vpop.f32.mrb[0].mxu0
    %v2289 = vpop.f32.mrb[0].mxu0
    %2290 = vdwg.mxu0
    %2291 = vmatprep.subr.bf16.mxu0 %v2189
    %2292 = vmatpush1.bf16.msra.mxu0 %v2188
    %2293 = vmatprep.subr.bf16.mxu0 %v2193
    %2294 = vmatpush1.bf16.msra.mxu0 %v2192
    %2295 = vmatprep.subr.bf16.mxu0 %v2197
    %2296 = vmatpush1.bf16.msra.mxu0 %v2196
    %2297 = vmatprep.subr.bf16.mxu0 %v2201
    %2298 = vmatpush1.bf16.msra.mxu0 %v2200
    %2299 = vmatprep.subr.bf16.mxu0 %v2205
    %2300 = vmatpush1.bf16.msra.mxu0 %v2204
    %2301 = vmatprep.subr.bf16.mxu0 %v2209
    %2302 = vmatpush1.bf16.msra.mxu0 %v2208
    %2303 = vmatprep.subr.bf16.mxu0 %v2213
    %2304 = vmatpush1.bf16.msra.mxu0 %v2212
    %2305 = vmatprep.subr.bf16.mxu0 %v2217
    %2306 = vmatpush1.bf16.msra.mxu0 %v2216
    %2307 = vmatprep.subr.bf16.mxu0 0
    %2308 = vmatpush1.bf16.msra.mxu0 0
    %2309 = vmatprep.subr.bf16.mxu0 0
    %2310 = vmatpush1.bf16.msra.mxu0 0
    %2311 = vmatprep.subr.bf16.mxu0 0
    %2312 = vmatpush1.bf16.msra.mxu0 0
    %2313 = vmatprep.subr.bf16.mxu0 0
    %2314 = vmatpush1.bf16.msra.mxu0 0
    %2315 = vmatprep.subr.bf16.mxu0 0
    %2316 = vmatpush1.bf16.msra.mxu0 0
    %2317 = vmatprep.subr.bf16.mxu0 0
    %2318 = vmatpush1.bf16.msra.mxu0 0
    %2319 = vmatprep.subr.bf16.mxu0 0
    %2320 = vmatpush1.bf16.msra.mxu0 0
    %2321 = vmatprep.subr.bf16.mxu0 0
    %2322 = vmatpush1.bf16.msra.mxu0 0
    %2323 = vmatprep.mubr.bf16.mxu0 0
    %2324 = vmatmul.mubr.bf16.gmra.mrb[0].mxu0 %v2057
    %v2325 = vpop.f32.mrb[0].mxu0
    %v2326 = vadd.f32 0.0, %v2325
    %v2327 = vpop.f32.mrb[0].mxu0
    %v2328 = vadd.f32 0.0, %v2327
    %v2329 = vpop.f32.mrb[0].mxu0
    %v2330 = vpop.f32.mrb[0].mxu0
    %2331 = vdwg.mxu0
    %v2332 = vadd.f32 %v2053, %v2285
    %v2333 = vadd.f32 %v2054, %v2287
    %v2334 = vadd.f32 %v2055, %v2326
    %v2335 = vadd.f32 %v2056, %v2328
    %v2336 = vxor.u32 %v2332, 2147483648
    %v2337 = vmul.f32 %v2336, 1.442695
    %v2338 = vpow.pop %v2337
    %v2339 = vadd.f32 %v2338, 1.0
    %v2340 = vrcp.pop %v2339
    %v2341 = vmul.f32 1.0, %v2340
    %v2342 = vxor.u32 %v2333, 2147483648
    %v2343 = vmul.f32 %v2342, 1.442695
    %v2344 = vpow.pop %v2343
    %v2345 = vadd.f32 %v2344, 1.0
    %v2346 = vrcp.pop %v2345
    %v2347 = vmul.f32 1.0, %v2346
    %v2348 = vtanh.pop %v2334
    %v2349 = vxor.u32 %v2335, 2147483648
    %v2350 = vmul.f32 %v2349, 1.442695
    %v2351 = vpow.pop %v2350
    %v2352 = vadd.f32 %v2351, 1.0
    %v2353 = vrcp.pop %v2352
    %v2354 = vmul.f32 1.0, %v2353
    %v2355 = vmul.f32 %v2347, %v2047
    %v2356 = vmul.f32 %v2341, %v2348
    %v2357 = vadd.f32 %v2355, %v2356
    %v2358 = vtanh.pop %v2357
    %v2359 = vmul.f32 %v2354, %v2358
    %s2360 = scalar_lea.vmem [#allocation3], 40
    %2361 = vst [vmem:[%s2360] sm:$0xff] %v2359
    %s2362 = scalar_lea.vmem [#allocation2], 192
    %v2363 = vld [vmem:[%s2362] sm:$0xff]
    %v2364 = vld [vmem:[%s2362 + $0x8] sm:$0xff]
    %v2365 = vld [vmem:[%s2362 + $0x10] sm:$0xff]
    %v2366 = vld [vmem:[%s2362 + $0x18] sm:$0xff]
    %v2367 = vpack.c.bf16 %v2359, %v2359
    %v2368 = vld [vmem:[#allocation6] sm:$0xff]
    %v2369 = vld [vmem:[#allocation6 + $0x8] sm:$0xff]
    %v2370 = vld [vmem:[#allocation6 + $0x10] sm:$0xff]
    %v2371 = vld [vmem:[#allocation6 + $0x18] sm:$0xff]
    %v2372 = vld [vmem:[#allocation6 + $0x20] sm:$0xff]
    %v2373 = vld [vmem:[#allocation6 + $0x28] sm:$0xff]
    %v2374 = vld [vmem:[#allocation6 + $0x30] sm:$0xff]
    %v2375 = vld [vmem:[#allocation6 + $0x38] sm:$0xff]
    %v2376 = vld [vmem:[#allocation6 + $0x40] sm:$0xff]
    %v2377 = vld [vmem:[#allocation6 + $0x48] sm:$0xff]
    %v2378 = vld [vmem:[#allocation6 + $0x50] sm:$0xff]
    %v2379 = vld [vmem:[#allocation6 + $0x58] sm:$0xff]
    %v2380 = vld [vmem:[#allocation6 + $0x60] sm:$0xff]
    %v2381 = vld [vmem:[#allocation6 + $0x68] sm:$0xff]
    %v2382 = vld [vmem:[#allocation6 + $0x70] sm:$0xff]
    %v2383 = vld [vmem:[#allocation6 + $0x78] sm:$0xff]
    %v2384 = vld [vmem:[#allocation6 + $0x80] sm:$0xff]
    %v2385 = vld [vmem:[#allocation6 + $0x88] sm:$0xff]
    %v2386 = vld [vmem:[#allocation6 + $0x90] sm:$0xff]
    %v2387 = vld [vmem:[#allocation6 + $0x98] sm:$0xff]
    %v2388 = vld [vmem:[#allocation6 + $0xa0] sm:$0xff]
    %v2389 = vld [vmem:[#allocation6 + $0xa8] sm:$0xff]
    %v2390 = vld [vmem:[#allocation6 + $0xb0] sm:$0xff]
    %v2391 = vld [vmem:[#allocation6 + $0xb8] sm:$0xff]
    %v2392 = vld [vmem:[#allocation6 + $0xc0] sm:$0xff]
    %v2393 = vld [vmem:[#allocation6 + $0xc8] sm:$0xff]
    %v2394 = vld [vmem:[#allocation6 + $0xd0] sm:$0xff]
    %v2395 = vld [vmem:[#allocation6 + $0xd8] sm:$0xff]
    %v2396 = vld [vmem:[#allocation6 + $0xe0] sm:$0xff]
    %v2397 = vld [vmem:[#allocation6 + $0xe8] sm:$0xff]
    %v2398 = vld [vmem:[#allocation6 + $0xf0] sm:$0xff]
    %v2399 = vld [vmem:[#allocation6 + $0xf8] sm:$0xff]
    %v2432 = vunpack.c.l.b16 %v2368
    %v2433 = vunpack.c.h.b16 %v2368
    %v2434 = vunpack.c.l.b16 %v2369
    %v2435 = vunpack.c.h.b16 %v2369
    %v2436 = vunpack.c.l.b16 %v2370
    %v2437 = vunpack.c.h.b16 %v2370
    %v2438 = vunpack.c.l.b16 %v2371
    %v2439 = vunpack.c.h.b16 %v2371
    %v2440 = vunpack.c.l.b16 %v2372
    %v2441 = vunpack.c.h.b16 %v2372
    %v2442 = vunpack.c.l.b16 %v2373
    %v2443 = vunpack.c.h.b16 %v2373
    %v2444 = vunpack.c.l.b16 %v2374
    %v2445 = vunpack.c.h.b16 %v2374
    %v2446 = vunpack.c.l.b16 %v2375
    %v2447 = vunpack.c.h.b16 %v2375
    %v2448 = vunpack.c.l.b16 %v2376
    %v2449 = vunpack.c.h.b16 %v2376
    %v2450 = vunpack.c.l.b16 %v2377
    %v2451 = vunpack.c.h.b16 %v2377
    %v2452 = vunpack.c.l.b16 %v2378
    %v2453 = vunpack.c.h.b16 %v2378
    %v2454 = vunpack.c.l.b16 %v2379
    %v2455 = vunpack.c.h.b16 %v2379
    %v2456 = vunpack.c.l.b16 %v2380
    %v2457 = vunpack.c.h.b16 %v2380
    %v2458 = vunpack.c.l.b16 %v2381
    %v2459 = vunpack.c.h.b16 %v2381
    %v2460 = vunpack.c.l.b16 %v2382
    %v2461 = vunpack.c.h.b16 %v2382
    %v2462 = vunpack.c.l.b16 %v2383
    %v2463 = vunpack.c.h.b16 %v2383
    %v2464 = vunpack.c.l.b16 %v2384
    %v2465 = vunpack.c.h.b16 %v2384
    %v2466 = vunpack.c.l.b16 %v2385
    %v2467 = vunpack.c.h.b16 %v2385
    %v2468 = vunpack.c.l.b16 %v2386
    %v2469 = vunpack.c.h.b16 %v2386
    %v2470 = vunpack.c.l.b16 %v2387
    %v2471 = vunpack.c.h.b16 %v2387
    %v2472 = vunpack.c.l.b16 %v2388
    %v2473 = vunpack.c.h.b16 %v2388
    %v2474 = vunpack.c.l.b16 %v2389
    %v2475 = vunpack.c.h.b16 %v2389
    %v2476 = vunpack.c.l.b16 %v2390
    %v2477 = vunpack.c.h.b16 %v2390
    %v2478 = vunpack.c.l.b16 %v2391
    %v2479 = vunpack.c.h.b16 %v2391
    %v2480 = vunpack.c.l.b16 %v2392
    %v2481 = vunpack.c.h.b16 %v2392
    %v2482 = vunpack.c.l.b16 %v2393
    %v2483 = vunpack.c.h.b16 %v2393
    %v2484 = vunpack.c.l.b16 %v2394
    %v2485 = vunpack.c.h.b16 %v2394
    %v2486 = vunpack.c.l.b16 %v2395
    %v2487 = vunpack.c.h.b16 %v2395
    %v2488 = vunpack.c.l.b16 %v2396
    %v2489 = vunpack.c.h.b16 %v2396
    %v2490 = vunpack.c.l.b16 %v2397
    %v2491 = vunpack.c.h.b16 %v2397
    %v2492 = vunpack.c.l.b16 %v2398
    %v2493 = vunpack.c.h.b16 %v2398
    %v2494 = vunpack.c.l.b16 %v2399
    %v2495 = vunpack.c.h.b16 %v2399
    %v2496 = vpack.c.b16 %v2436, %v2432
    %v2497 = vpack.c.b16 %v2437, %v2433
    %v2498 = vpack.c.b16 %v2438, %v2434
    %v2499 = vpack.c.b16 %v2439, %v2435
    %v2500 = vpack.c.b16 %v2444, %v2440
    %v2501 = vpack.c.b16 %v2445, %v2441
    %v2502 = vpack.c.b16 %v2446, %v2442
    %v2503 = vpack.c.b16 %v2447, %v2443
    %v2504 = vpack.c.b16 %v2452, %v2448
    %v2505 = vpack.c.b16 %v2453, %v2449
    %v2506 = vpack.c.b16 %v2454, %v2450
    %v2507 = vpack.c.b16 %v2455, %v2451
    %v2508 = vpack.c.b16 %v2460, %v2456
    %v2509 = vpack.c.b16 %v2461, %v2457
    %v2510 = vpack.c.b16 %v2462, %v2458
    %v2511 = vpack.c.b16 %v2463, %v2459
    %v2512 = vpack.c.b16 %v2468, %v2464
    %v2513 = vpack.c.b16 %v2469, %v2465
    %v2514 = vpack.c.b16 %v2470, %v2466
    %v2515 = vpack.c.b16 %v2471, %v2467
    %v2516 = vpack.c.b16 %v2476, %v2472
    %v2517 = vpack.c.b16 %v2477, %v2473
    %v2518 = vpack.c.b16 %v2478, %v2474
    %v2519 = vpack.c.b16 %v2479, %v2475
    %v2520 = vpack.c.b16 %v2484, %v2480
    %v2521 = vpack.c.b16 %v2485, %v2481
    %v2522 = vpack.c.b16 %v2486, %v2482
    %v2523 = vpack.c.b16 %v2487, %v2483
    %v2524 = vpack.c.b16 %v2492, %v2488
    %v2525 = vpack.c.b16 %v2493, %v2489
    %v2526 = vpack.c.b16 %v2494, %v2490
    %v2527 = vpack.c.b16 %v2495, %v2491
    %2560 = vmatprep.subr.bf16.mxu0 %v2497
    %2561 = vmatpush1.bf16.msra.mxu0 %v2496
    %2562 = vmatprep.subr.bf16.mxu0 %v2501
    %2563 = vmatpush1.bf16.msra.mxu0 %v2500
    %2564 = vmatprep.subr.bf16.mxu0 %v2505
    %2565 = vmatpush1.bf16.msra.mxu0 %v2504
    %2566 = vmatprep.subr.bf16.mxu0 %v2509
    %2567 = vmatpush1.bf16.msra.mxu0 %v2508
    %2568 = vmatprep.subr.bf16.mxu0 %v2513
    %2569 = vmatpush1.bf16.msra.mxu0 %v2512
    %2570 = vmatprep.subr.bf16.mxu0 %v2517
    %2571 = vmatpush1.bf16.msra.mxu0 %v2516
    %2572 = vmatprep.subr.bf16.mxu0 %v2521
    %2573 = vmatpush1.bf16.msra.mxu0 %v2520
    %2574 = vmatprep.subr.bf16.mxu0 %v2525
    %2575 = vmatpush1.bf16.msra.mxu0 %v2524
    %2576 = vmatprep.subr.bf16.mxu0 0
    %2577 = vmatpush1.bf16.msra.mxu0 0
    %2578 = vmatprep.subr.bf16.mxu0 0
    %2579 = vmatpush1.bf16.msra.mxu0 0
    %2580 = vmatprep.subr.bf16.mxu0 0
    %2581 = vmatpush1.bf16.msra.mxu0 0
    %2582 = vmatprep.subr.bf16.mxu0 0
    %2583 = vmatpush1.bf16.msra.mxu0 0
    %2584 = vmatprep.subr.bf16.mxu0 0
    %2585 = vmatpush1.bf16.msra.mxu0 0
    %2586 = vmatprep.subr.bf16.mxu0 0
    %2587 = vmatpush1.bf16.msra.mxu0 0
    %2588 = vmatprep.subr.bf16.mxu0 0
    %2589 = vmatpush1.bf16.msra.mxu0 0
    %2590 = vmatprep.subr.bf16.mxu0 0
    %2591 = vmatpush1.bf16.msra.mxu0 0
    %2592 = vmatprep.mubr.bf16.mxu0 0
    %2593 = vmatmul.mubr.bf16.gmra.mrb[0].mxu0 %v2367
    %v2594 = vpop.f32.mrb[0].mxu0
    %v2595 = vadd.f32 0.0, %v2594
    %v2596 = vpop.f32.mrb[0].mxu0
    %v2597 = vadd.f32 0.0, %v2596
    %v2598 = vpop.f32.mrb[0].mxu0
    %v2599 = vpop.f32.mrb[0].mxu0
    %2600 = vdwg.mxu0
    %2601 = vmatprep.subr.bf16.mxu0 %v2499
    %2602 = vmatpush1.bf16.msra.mxu0 %v2498
    %2603 = vmatprep.subr.bf16.mxu0 %v2503
    %2604 = vmatpush1.bf16.msra.mxu0 %v2502
    %2605 = vmatprep.subr.bf16.mxu0 %v2507
    %2606 = vmatpush1.bf16.msra.mxu0 %v2506
    %2607 = vmatprep.subr.bf16.mxu0 %v2511
    %2608 = vmatpush1.bf16.msra.mxu0 %v2510
    %2609 = vmatprep.subr.bf16.mxu0 %v2515
    %2610 = vmatpush1.bf16.msra.mxu0 %v2514
    %2611 = vmatprep.subr.bf16.mxu0 %v2519
    %2612 = vmatpush1.bf16.msra.mxu0 %v2518
    %2613 = vmatprep.subr.bf16.mxu0 %v2523
    %2614 = vmatpush1.bf16.msra.mxu0 %v2522
    %2615 = vmatprep.subr.bf16.mxu0 %v2527
    %2616 = vmatpush1.bf16.msra.mxu0 %v2526
    %2617 = vmatprep.subr.bf16.mxu0 0
    %2618 = vmatpush1.bf16.msra.mxu0 0
    %2619 = vmatprep.subr.bf16.mxu0 0
    %2620 = vmatpush1.bf16.msra.mxu0 0
    %2621 = vmatprep.subr.bf16.mxu0 0
    %2622 = vmatpush1.bf16.msra.mxu0 0
    %2623 = vmatprep.subr.bf16.mxu0 0
    %2624 = vmatpush1.bf16.msra.mxu0 0
    %2625 = vmatprep.subr.bf16.mxu0 0
    %2626 = vmatpush1.bf16.msra.mxu0 0
    %2627 = vmatprep.subr.bf16.mxu0 0
    %2628 = vmatpush1.bf16.msra.mxu0 0
    %2629 = vmatprep.subr.bf16.mxu0 0
    %2630 = vmatpush1.bf16.msra.mxu0 0
    %2631 = vmatprep.subr.bf16.mxu0 0
    %2632 = vmatpush1.bf16.msra.mxu0 0
    %2633 = vmatprep.mubr.bf16.mxu0 0
    %2634 = vmatmul.mubr.bf16.gmra.mrb[0].mxu0 %v2367
    %v2635 = vpop.f32.mrb[0].mxu0
    %v2636 = vadd.f32 0.0, %v2635
    %v2637 = vpop.f32.mrb[0].mxu0
    %v2638 = vadd.f32 0.0, %v2637
    %v2639 = vpop.f32.mrb[0].mxu0
    %v2640 = vpop.f32.mrb[0].mxu0
    %2641 = vdwg.mxu0
    %v2642 = vadd.f32 %v2363, %v2595
    %v2643 = vadd.f32 %v2364, %v2597
    %v2644 = vadd.f32 %v2365, %v2636
    %v2645 = vadd.f32 %v2366, %v2638
    %v2646 = vxor.u32 %v2642, 2147483648
    %v2647 = vmul.f32 %v2646, 1.442695
    %v2648 = vpow.pop %v2647
    %v2649 = vadd.f32 %v2648, 1.0
    %v2650 = vrcp.pop %v2649
    %v2651 = vmul.f32 1.0, %v2650
    %v2652 = vxor.u32 %v2643, 2147483648
    %v2653 = vmul.f32 %v2652, 1.442695
    %v2654 = vpow.pop %v2653
    %v2655 = vadd.f32 %v2654, 1.0
    %v2656 = vrcp.pop %v2655
    %v2657 = vmul.f32 1.0, %v2656
    %v2658 = vtanh.pop %v2644
    %v2659 = vxor.u32 %v2645, 2147483648
    %v2660 = vmul.f32 %v2659, 1.442695
    %v2661 = vpow.pop %v2660
    %v2662 = vadd.f32 %v2661, 1.0
    %v2663 = vrcp.pop %v2662
    %v2664 = vmul.f32 1.0, %v2663
    %v2665 = vmul.f32 %v2657, %v2357
    %v2666 = vmul.f32 %v2651, %v2658
    %v2667 = vadd.f32 %v2665, %v2666
    %v2668 = vtanh.pop %v2667
    %v2669 = vmul.f32 %v2664, %v2668
    %s2670 = scalar_lea.vmem [#allocation3], 48
    %2671 = vst [vmem:[%s2670] sm:$0xff] %v2669
    %s2672 = scalar_lea.vmem [#allocation2], 224
    %v2673 = vld [vmem:[%s2672] sm:$0xff]
    %v2674 = vld [vmem:[%s2672 + $0x8] sm:$0xff]
    %v2675 = vld [vmem:[%s2672 + $0x10] sm:$0xff]
    %v2676 = vld [vmem:[%s2672 + $0x18] sm:$0xff]
    %v2677 = vpack.c.bf16 %v2669, %v2669
    %v2678 = vld [vmem:[#allocation6] sm:$0xff]
    %v2679 = vld [vmem:[#allocation6 + $0x8] sm:$0xff]
    %v2680 = vld [vmem:[#allocation6 + $0x10] sm:$0xff]
    %v2681 = vld [vmem:[#allocation6 + $0x18] sm:$0xff]
    %v2682 = vld [vmem:[#allocation6 + $0x20] sm:$0xff]
    %v2683 = vld [vmem:[#allocation6 + $0x28] sm:$0xff]
    %v2684 = vld [vmem:[#allocation6 + $0x30] sm:$0xff]
    %v2685 = vld [vmem:[#allocation6 + $0x38] sm:$0xff]
    %v2686 = vld [vmem:[#allocation6 + $0x40] sm:$0xff]
    %v2687 = vld [vmem:[#allocation6 + $0x48] sm:$0xff]
    %v2688 = vld [vmem:[#allocation6 + $0x50] sm:$0xff]
    %v2689 = vld [vmem:[#allocation6 + $0x58] sm:$0xff]
    %v2690 = vld [vmem:[#allocation6 + $0x60] sm:$0xff]
    %v2691 = vld [vmem:[#allocation6 + $0x68] sm:$0xff]
    %v2692 = vld [vmem:[#allocation6 + $0x70] sm:$0xff]
    %v2693 = vld [vmem:[#allocation6 + $0x78] sm:$0xff]
    %v2694 = vld [vmem:[#allocation6 + $0x80] sm:$0xff]
    %v2695 = vld [vmem:[#allocation6 + $0x88] sm:$0xff]
    %v2696 = vld [vmem:[#allocation6 + $0x90] sm:$0xff]
    %v2697 = vld [vmem:[#allocation6 + $0x98] sm:$0xff]
    %v2698 = vld [vmem:[#allocation6 + $0xa0] sm:$0xff]
    %v2699 = vld [vmem:[#allocation6 + $0xa8] sm:$0xff]
    %v2700 = vld [vmem:[#allocation6 + $0xb0] sm:$0xff]
    %v2701 = vld [vmem:[#allocation6 + $0xb8] sm:$0xff]
    %v2702 = vld [vmem:[#allocation6 + $0xc0] sm:$0xff]
    %v2703 = vld [vmem:[#allocation6 + $0xc8] sm:$0xff]
    %v2704 = vld [vmem:[#allocation6 + $0xd0] sm:$0xff]
    %v2705 = vld [vmem:[#allocation6 + $0xd8] sm:$0xff]
    %v2706 = vld [vmem:[#allocation6 + $0xe0] sm:$0xff]
    %v2707 = vld [vmem:[#allocation6 + $0xe8] sm:$0xff]
    %v2708 = vld [vmem:[#allocation6 + $0xf0] sm:$0xff]
    %v2709 = vld [vmem:[#allocation6 + $0xf8] sm:$0xff]
    %v2742 = vunpack.c.l.b16 %v2678
    %v2743 = vunpack.c.h.b16 %v2678
    %v2744 = vunpack.c.l.b16 %v2679
    %v2745 = vunpack.c.h.b16 %v2679
    %v2746 = vunpack.c.l.b16 %v2680
    %v2747 = vunpack.c.h.b16 %v2680
    %v2748 = vunpack.c.l.b16 %v2681
    %v2749 = vunpack.c.h.b16 %v2681
    %v2750 = vunpack.c.l.b16 %v2682
    %v2751 = vunpack.c.h.b16 %v2682
    %v2752 = vunpack.c.l.b16 %v2683
    %v2753 = vunpack.c.h.b16 %v2683
    %v2754 = vunpack.c.l.b16 %v2684
    %v2755 = vunpack.c.h.b16 %v2684
    %v2756 = vunpack.c.l.b16 %v2685
    %v2757 = vunpack.c.h.b16 %v2685
    %v2758 = vunpack.c.l.b16 %v2686
    %v2759 = vunpack.c.h.b16 %v2686
    %v2760 = vunpack.c.l.b16 %v2687
    %v2761 = vunpack.c.h.b16 %v2687
    %v2762 = vunpack.c.l.b16 %v2688
    %v2763 = vunpack.c.h.b16 %v2688
    %v2764 = vunpack.c.l.b16 %v2689
    %v2765 = vunpack.c.h.b16 %v2689
    %v2766 = vunpack.c.l.b16 %v2690
    %v2767 = vunpack.c.h.b16 %v2690
    %v2768 = vunpack.c.l.b16 %v2691
    %v2769 = vunpack.c.h.b16 %v2691
    %v2770 = vunpack.c.l.b16 %v2692
    %v2771 = vunpack.c.h.b16 %v2692
    %v2772 = vunpack.c.l.b16 %v2693
    %v2773 = vunpack.c.h.b16 %v2693
    %v2774 = vunpack.c.l.b16 %v2694
    %v2775 = vunpack.c.h.b16 %v2694
    %v2776 = vunpack.c.l.b16 %v2695
    %v2777 = vunpack.c.h.b16 %v2695
    %v2778 = vunpack.c.l.b16 %v2696
    %v2779 = vunpack.c.h.b16 %v2696
    %v2780 = vunpack.c.l.b16 %v2697
    %v2781 = vunpack.c.h.b16 %v2697
    %v2782 = vunpack.c.l.b16 %v2698
    %v2783 = vunpack.c.h.b16 %v2698
    %v2784 = vunpack.c.l.b16 %v2699
    %v2785 = vunpack.c.h.b16 %v2699
    %v2786 = vunpack.c.l.b16 %v2700
    %v2787 = vunpack.c.h.b16 %v2700
    %v2788 = vunpack.c.l.b16 %v2701
    %v2789 = vunpack.c.h.b16 %v2701
    %v2790 = vunpack.c.l.b16 %v2702
    %v2791 = vunpack.c.h.b16 %v2702
    %v2792 = vunpack.c.l.b16 %v2703
    %v2793 = vunpack.c.h.b16 %v2703
    %v2794 = vunpack.c.l.b16 %v2704
    %v2795 = vunpack.c.h.b16 %v2704
    %v2796 = vunpack.c.l.b16 %v2705
    %v2797 = vunpack.c.h.b16 %v2705
    %v2798 = vunpack.c.l.b16 %v2706
    %v2799 = vunpack.c.h.b16 %v2706
    %v2800 = vunpack.c.l.b16 %v2707
    %v2801 = vunpack.c.h.b16 %v2707
    %v2802 = vunpack.c.l.b16 %v2708
    %v2803 = vunpack.c.h.b16 %v2708
    %v2804 = vunpack.c.l.b16 %v2709
    %v2805 = vunpack.c.h.b16 %v2709
    %v2806 = vpack.c.b16 %v2746, %v2742
    %v2807 = vpack.c.b16 %v2747, %v2743
    %v2808 = vpack.c.b16 %v2748, %v2744
    %v2809 = vpack.c.b16 %v2749, %v2745
    %v2810 = vpack.c.b16 %v2754, %v2750
    %v2811 = vpack.c.b16 %v2755, %v2751
    %v2812 = vpack.c.b16 %v2756, %v2752
    %v2813 = vpack.c.b16 %v2757, %v2753
    %v2814 = vpack.c.b16 %v2762, %v2758
    %v2815 = vpack.c.b16 %v2763, %v2759
    %v2816 = vpack.c.b16 %v2764, %v2760
    %v2817 = vpack.c.b16 %v2765, %v2761
    %v2818 = vpack.c.b16 %v2770, %v2766
    %v2819 = vpack.c.b16 %v2771, %v2767
    %v2820 = vpack.c.b16 %v2772, %v2768
    %v2821 = vpack.c.b16 %v2773, %v2769
    %v2822 = vpack.c.b16 %v2778, %v2774
    %v2823 = vpack.c.b16 %v2779, %v2775
    %v2824 = vpack.c.b16 %v2780, %v2776
    %v2825 = vpack.c.b16 %v2781, %v2777
    %v2826 = vpack.c.b16 %v2786, %v2782
    %v2827 = vpack.c.b16 %v2787, %v2783
    %v2828 = vpack.c.b16 %v2788, %v2784
    %v2829 = vpack.c.b16 %v2789, %v2785
    %v2830 = vpack.c.b16 %v2794, %v2790
    %v2831 = vpack.c.b16 %v2795, %v2791
    %v2832 = vpack.c.b16 %v2796, %v2792
    %v2833 = vpack.c.b16 %v2797, %v2793
    %v2834 = vpack.c.b16 %v2802, %v2798
    %v2835 = vpack.c.b16 %v2803, %v2799
    %v2836 = vpack.c.b16 %v2804, %v2800
    %v2837 = vpack.c.b16 %v2805, %v2801
    %2870 = vmatprep.subr.bf16.mxu0 %v2807
    %2871 = vmatpush1.bf16.msra.mxu0 %v2806
    %2872 = vmatprep.subr.bf16.mxu0 %v2811
    %2873 = vmatpush1.bf16.msra.mxu0 %v2810
    %2874 = vmatprep.subr.bf16.mxu0 %v2815
    %2875 = vmatpush1.bf16.msra.mxu0 %v2814
    %2876 = vmatprep.subr.bf16.mxu0 %v2819
    %2877 = vmatpush1.bf16.msra.mxu0 %v2818
    %2878 = vmatprep.subr.bf16.mxu0 %v2823
    %2879 = vmatpush1.bf16.msra.mxu0 %v2822
    %2880 = vmatprep.subr.bf16.mxu0 %v2827
    %2881 = vmatpush1.bf16.msra.mxu0 %v2826
    %2882 = vmatprep.subr.bf16.mxu0 %v2831
    %2883 = vmatpush1.bf16.msra.mxu0 %v2830
    %2884 = vmatprep.subr.bf16.mxu0 %v2835
    %2885 = vmatpush1.bf16.msra.mxu0 %v2834
    %2886 = vmatprep.subr.bf16.mxu0 0
    %2887 = vmatpush1.bf16.msra.mxu0 0
    %2888 = vmatprep.subr.bf16.mxu0 0
    %2889 = vmatpush1.bf16.msra.mxu0 0
    %2890 = vmatprep.subr.bf16.mxu0 0
    %2891 = vmatpush1.bf16.msra.mxu0 0
    %2892 = vmatprep.subr.bf16.mxu0 0
    %2893 = vmatpush1.bf16.msra.mxu0 0
    %2894 = vmatprep.subr.bf16.mxu0 0
    %2895 = vmatpush1.bf16.msra.mxu0 0
    %2896 = vmatprep.subr.bf16.mxu0 0
    %2897 = vmatpush1.bf16.msra.mxu0 0
    %2898 = vmatprep.subr.bf16.mxu0 0
    %2899 = vmatpush1.bf16.msra.mxu0 0
    %2900 = vmatprep.subr.bf16.mxu0 0
    %2901 = vmatpush1.bf16.msra.mxu0 0
    %2902 = vmatprep.mubr.bf16.mxu0 0
    %2903 = vmatmul.mubr.bf16.gmra.mrb[0].mxu0 %v2677
    %v2904 = vpop.f32.mrb[0].mxu0
    %v2905 = vadd.f32 0.0, %v2904
    %v2906 = vpop.f32.mrb[0].mxu0
    %v2907 = vadd.f32 0.0, %v2906
    %v2908 = vpop.f32.mrb[0].mxu0
    %v2909 = vpop.f32.mrb[0].mxu0
    %2910 = vdwg.mxu0
    %2911 = vmatprep.subr.bf16.mxu0 %v2809
    %2912 = vmatpush1.bf16.msra.mxu0 %v2808
    %2913 = vmatprep.subr.bf16.mxu0 %v2813
    %2914 = vmatpush1.bf16.msra.mxu0 %v2812
    %2915 = vmatprep.subr.bf16.mxu0 %v2817
    %2916 = vmatpush1.bf16.msra.mxu0 %v2816
    %2917 = vmatprep.subr.bf16.mxu0 %v2821
    %2918 = vmatpush1.bf16.msra.mxu0 %v2820
    %2919 = vmatprep.subr.bf16.mxu0 %v2825
    %2920 = vmatpush1.bf16.msra.mxu0 %v2824
    %2921 = vmatprep.subr.bf16.mxu0 %v2829
    %2922 = vmatpush1.bf16.msra.mxu0 %v2828
    %2923 = vmatprep.subr.bf16.mxu0 %v2833
    %2924 = vmatpush1.bf16.msra.mxu0 %v2832
    %2925 = vmatprep.subr.bf16.mxu0 %v2837
    %2926 = vmatpush1.bf16.msra.mxu0 %v2836
    %2927 = vmatprep.subr.bf16.mxu0 0
    %2928 = vmatpush1.bf16.msra.mxu0 0
    %2929 = vmatprep.subr.bf16.mxu0 0
    %2930 = vmatpush1.bf16.msra.mxu0 0
    %2931 = vmatprep.subr.bf16.mxu0 0
    %2932 = vmatpush1.bf16.msra.mxu0 0
    %2933 = vmatprep.subr.bf16.mxu0 0
    %2934 = vmatpush1.bf16.msra.mxu0 0
    %2935 = vmatprep.subr.bf16.mxu0 0
    %2936 = vmatpush1.bf16.msra.mxu0 0
    %2937 = vmatprep.subr.bf16.mxu0 0
    %2938 = vmatpush1.bf16.msra.mxu0 0
    %2939 = vmatprep.subr.bf16.mxu0 0
    %2940 = vmatpush1.bf16.msra.mxu0 0
    %2941 = vmatprep.subr.bf16.mxu0 0
    %2942 = vmatpush1.bf16.msra.mxu0 0
    %2943 = vmatprep.mubr.bf16.mxu0 0
    %2944 = vmatmul.mubr.bf16.gmra.mrb[0].mxu0 %v2677
    %v2945 = vpop.f32.mrb[0].mxu0
    %v2946 = vadd.f32 0.0, %v2945
    %v2947 = vpop.f32.mrb[0].mxu0
    %v2948 = vadd.f32 0.0, %v2947
    %v2949 = vpop.f32.mrb[0].mxu0
    %v2950 = vpop.f32.mrb[0].mxu0
    %2951 = vdwg.mxu0
    %v2952 = vadd.f32 %v2673, %v2905
    %v2953 = vadd.f32 %v2674, %v2907
    %v2954 = vadd.f32 %v2675, %v2946
    %v2955 = vadd.f32 %v2676, %v2948
    %v2956 = vxor.u32 %v2952, 2147483648
    %v2957 = vmul.f32 %v2956, 1.442695
    %v2958 = vpow.pop %v2957
    %v2959 = vadd.f32 %v2958, 1.0
    %v2960 = vrcp.pop %v2959
    %v2961 = vmul.f32 1.0, %v2960
    %v2962 = vxor.u32 %v2953, 2147483648
    %v2963 = vmul.f32 %v2962, 1.442695
    %v2964 = vpow.pop %v2963
    %v2965 = vadd.f32 %v2964, 1.0
    %v2966 = vrcp.pop %v2965
    %v2967 = vmul.f32 1.0, %v2966
    %v2968 = vtanh.pop %v2954
    %v2969 = vxor.u32 %v2955, 2147483648
    %v2970 = vmul.f32 %v2969, 1.442695
    %v2971 = vpow.pop %v2970
    %v2972 = vadd.f32 %v2971, 1.0
    %v2973 = vrcp.pop %v2972
    %v2974 = vmul.f32 1.0, %v2973
    %v2975 = vmul.f32 %v2967, %v2667
    %v2976 = vmul.f32 %v2961, %v2968
    %v2977 = vadd.f32 %v2975, %v2976
    %v2978 = vtanh.pop %v2977
    %v2979 = vmul.f32 %v2974, %v2978
    %s2980 = scalar_lea.vmem [#allocation3], 56
    %2981 = vst [vmem:[%s2980] sm:$0xff] %v2979
    %v2982 = vld [vmem:[#allocation3] sm:$0xff]
    %v2983 = vld [vmem:[#allocation3 + $0x8] sm:$0xff]
    %v2984 = vld [vmem:[#allocation3 + $0x10] sm:$0xff]
    %v2985 = vld [vmem:[#allocation3 + $0x18] sm:$0xff]
    %v2986 = vld [vmem:[#allocation3 + $0x20] sm:$0xff]
    %v2987 = vld [vmem:[#allocation3 + $0x28] sm:$0xff]
    %v2988 = vld [vmem:[#allocation3 + $0x30] sm:$0xff]
    %v2989 = vld [vmem:[#allocation3 + $0x38] sm:$0xff]
    %v2990 = vpack.c.bf16 %v2983, %v2982
    %v2991 = vpack.c.bf16 %v2985, %v2984
    %v2992 = vpack.c.bf16 %v2987, %v2986
    %v2993 = vpack.c.bf16 %v2989, %v2988
    %v2994 = vld [vmem:[#allocation8] sm:$0xff]
    %v2995 = vld [vmem:[#allocation8 + $0x8] sm:$0xff]
    %v2996 = vld [vmem:[#allocation8 + $0x10] sm:$0xff]
    %v2997 = vld [vmem:[#allocation8 + $0x18] sm:$0xff]
    %v2998 = vld [vmem:[#allocation8 + $0x20] sm:$0xff]
    %v2999 = vld [vmem:[#allocation8 + $0x28] sm:$0xff]
    %v3000 = vld [vmem:[#allocation8 + $0x30] sm:$0xff]
    %v3001 = vld [vmem:[#allocation8 + $0x38] sm:$0xff]
    %v3002 = vld [vmem:[#allocation8 + $0x40] sm:$0xff]
    %v3003 = vld [vmem:[#allocation8 + $0x48] sm:$0xff]
    %v3004 = vld [vmem:[#allocation8 + $0x50] sm:$0xff]
    %v3005 = vld [vmem:[#allocation8 + $0x58] sm:$0xff]
    %v3006 = vld [vmem:[#allocation8 + $0x60] sm:$0xff]
    %v3007 = vld [vmem:[#allocation8 + $0x68] sm:$0xff]
    %v3008 = vld [vmem:[#allocation8 + $0x70] sm:$0xff]
    %v3009 = vld [vmem:[#allocation8 + $0x78] sm:$0xff]
    %v3010 = vld [vmem:[#allocation8 + $0x80] sm:$0xff]
    %v3011 = vld [vmem:[#allocation8 + $0x88] sm:$0xff]
    %v3012 = vld [vmem:[#allocation8 + $0x90] sm:$0xff]
    %v3013 = vld [vmem:[#allocation8 + $0x98] sm:$0xff]
    %v3014 = vld [vmem:[#allocation8 + $0xa0] sm:$0xff]
    %v3015 = vld [vmem:[#allocation8 + $0xa8] sm:$0xff]
    %v3016 = vld [vmem:[#allocation8 + $0xb0] sm:$0xff]
    %v3017 = vld [vmem:[#allocation8 + $0xb8] sm:$0xff]
    %v3018 = vld [vmem:[#allocation8 + $0xc0] sm:$0xff]
    %v3019 = vld [vmem:[#allocation8 + $0xc8] sm:$0xff]
    %v3020 = vld [vmem:[#allocation8 + $0xd0] sm:$0xff]
    %v3021 = vld [vmem:[#allocation8 + $0xd8] sm:$0xff]
    %v3022 = vld [vmem:[#allocation8 + $0xe0] sm:$0xff]
    %v3023 = vld [vmem:[#allocation8 + $0xe8] sm:$0xff]
    %v3024 = vld [vmem:[#allocation8 + $0xf0] sm:$0xff]
    %v3025 = vld [vmem:[#allocation8 + $0xf8] sm:$0xff]
    %v3026 = vld [vmem:[%s6] sm:$0xf]
    %v3028 = vlaneseq
    %v3029 = vshrl.u32 %v3028, 7
    %v3030 = vsub.s32 0, %v3029
    %v3031 = vrot.slane %v3026, %v3030
    %v3032 = vlaneseq
    %v3033 = vshrl.u32 %v3032, 7
    %v3034 = vsub.s32 1, %v3033
    %v3035 = vrot.slane %v3026, %v3034
    %v3036 = vlaneseq
    %v3037 = vshrl.u32 %v3036, 7
    %v3038 = vsub.s32 2, %v3037
    %v3039 = vrot.slane %v3026, %v3038
    %v3040 = vlaneseq
    %v3041 = vshrl.u32 %v3040, 7
    %v3042 = vsub.s32 3, %v3041
    %v3043 = vrot.slane %v3026, %v3042
    %v3080 = vunpack.c.l.b16 %v2994
    %v3081 = vunpack.c.h.b16 %v2994
    %v3082 = vunpack.c.l.b16 %v2995
    %v3083 = vunpack.c.h.b16 %v2995
    %v3084 = vunpack.c.l.b16 %v2996
    %v3085 = vunpack.c.h.b16 %v2996
    %v3086 = vunpack.c.l.b16 %v2997
    %v3087 = vunpack.c.h.b16 %v2997
    %v3088 = vunpack.c.l.b16 %v2998
    %v3089 = vunpack.c.h.b16 %v2998
    %v3090 = vunpack.c.l.b16 %v2999
    %v3091 = vunpack.c.h.b16 %v2999
    %v3092 = vunpack.c.l.b16 %v3000
    %v3093 = vunpack.c.h.b16 %v3000
    %v3094 = vunpack.c.l.b16 %v3001
    %v3095 = vunpack.c.h.b16 %v3001
    %v3096 = vunpack.c.l.b16 %v3002
    %v3097 = vunpack.c.h.b16 %v3002
    %v3098 = vunpack.c.l.b16 %v3003
    %v3099 = vunpack.c.h.b16 %v3003
    %v3100 = vunpack.c.l.b16 %v3004
    %v3101 = vunpack.c.h.b16 %v3004
    %v3102 = vunpack.c.l.b16 %v3005
    %v3103 = vunpack.c.h.b16 %v3005
    %v3104 = vunpack.c.l.b16 %v3006
    %v3105 = vunpack.c.h.b16 %v3006
    %v3106 = vunpack.c.l.b16 %v3007
    %v3107 = vunpack.c.h.b16 %v3007
    %v3108 = vunpack.c.l.b16 %v3008
    %v3109 = vunpack.c.h.b16 %v3008
    %v3110 = vunpack.c.l.b16 %v3009
    %v3111 = vunpack.c.h.b16 %v3009
    %v3112 = vunpack.c.l.b16 %v3010
    %v3113 = vunpack.c.h.b16 %v3010
    %v3114 = vunpack.c.l.b16 %v3011
    %v3115 = vunpack.c.h.b16 %v3011
    %v3116 = vunpack.c.l.b16 %v3012
    %v3117 = vunpack.c.h.b16 %v3012
    %v3118 = vunpack.c.l.b16 %v3013
    %v3119 = vunpack.c.h.b16 %v3013
    %v3120 = vunpack.c.l.b16 %v3014
    %v3121 = vunpack.c.h.b16 %v3014
    %v3122 = vunpack.c.l.b16 %v3015
    %v3123 = vunpack.c.h.b16 %v3015
    %v3124 = vunpack.c.l.b16 %v3016
    %v3125 = vunpack.c.h.b16 %v3016
    %v3126 = vunpack.c.l.b16 %v3017
    %v3127 = vunpack.c.h.b16 %v3017
    %v3128 = vunpack.c.l.b16 %v3018
    %v3129 = vunpack.c.h.b16 %v3018
    %v3130 = vunpack.c.l.b16 %v3019
    %v3131 = vunpack.c.h.b16 %v3019
    %v3132 = vunpack.c.l.b16 %v3020
    %v3133 = vunpack.c.h.b16 %v3020
    %v3134 = vunpack.c.l.b16 %v3021
    %v3135 = vunpack.c.h.b16 %v3021
    %v3136 = vunpack.c.l.b16 %v3022
    %v3137 = vunpack.c.h.b16 %v3022
    %v3138 = vunpack.c.l.b16 %v3023
    %v3139 = vunpack.c.h.b16 %v3023
    %v3140 = vunpack.c.l.b16 %v3024
    %v3141 = vunpack.c.h.b16 %v3024
    %v3142 = vunpack.c.l.b16 %v3025
    %v3143 = vunpack.c.h.b16 %v3025
    %v3144 = vpack.c.b16 %v3084, %v3080
    %v3145 = vpack.c.b16 %v3085, %v3081
    %v3146 = vpack.c.b16 %v3086, %v3082
    %v3147 = vpack.c.b16 %v3087, %v3083
    %v3148 = vpack.c.b16 %v3092, %v3088
    %v3149 = vpack.c.b16 %v3093, %v3089
    %v3150 = vpack.c.b16 %v3094, %v3090
    %v3151 = vpack.c.b16 %v3095, %v3091
    %v3152 = vpack.c.b16 %v3100, %v3096
    %v3153 = vpack.c.b16 %v3101, %v3097
    %v3154 = vpack.c.b16 %v3102, %v3098
    %v3155 = vpack.c.b16 %v3103, %v3099
    %v3156 = vpack.c.b16 %v3108, %v3104
    %v3157 = vpack.c.b16 %v3109, %v3105
    %v3158 = vpack.c.b16 %v3110, %v3106
    %v3159 = vpack.c.b16 %v3111, %v3107
    %v3160 = vpack.c.b16 %v3116, %v3112
    %v3161 = vpack.c.b16 %v3117, %v3113
    %v3162 = vpack.c.b16 %v3118, %v3114
    %v3163 = vpack.c.b16 %v3119, %v3115
    %v3164 = vpack.c.b16 %v3124, %v3120
    %v3165 = vpack.c.b16 %v3125, %v3121
    %v3166 = vpack.c.b16 %v3126, %v3122
    %v3167 = vpack.c.b16 %v3127, %v3123
    %v3168 = vpack.c.b16 %v3132, %v3128
    %v3169 = vpack.c.b16 %v3133, %v3129
    %v3170 = vpack.c.b16 %v3134, %v3130
    %v3171 = vpack.c.b16 %v3135, %v3131
    %v3172 = vpack.c.b16 %v3140, %v3136
    %v3173 = vpack.c.b16 %v3141, %v3137
    %v3174 = vpack.c.b16 %v3142, %v3138
    %v3175 = vpack.c.b16 %v3143, %v3139
    %3208 = vmatprep.subr.bf16.mxu0 %v3145
    %3209 = vmatpush1.bf16.msra.mxu0 %v3144
    %3210 = vmatprep.subr.bf16.mxu0 %v3149
    %3211 = vmatpush1.bf16.msra.mxu0 %v3148
    %3212 = vmatprep.subr.bf16.mxu0 %v3153
    %3213 = vmatpush1.bf16.msra.mxu0 %v3152
    %3214 = vmatprep.subr.bf16.mxu0 %v3157
    %3215 = vmatpush1.bf16.msra.mxu0 %v3156
    %3216 = vmatprep.subr.bf16.mxu0 %v3161
    %3217 = vmatpush1.bf16.msra.mxu0 %v3160
    %3218 = vmatprep.subr.bf16.mxu0 %v3165
    %3219 = vmatpush1.bf16.msra.mxu0 %v3164
    %3220 = vmatprep.subr.bf16.mxu0 %v3169
    %3221 = vmatpush1.bf16.msra.mxu0 %v3168
    %3222 = vmatprep.subr.bf16.mxu0 %v3173
    %3223 = vmatpush1.bf16.msra.mxu0 %v3172
    %3224 = vmatprep.subr.bf16.mxu0 0
    %3225 = vmatpush1.bf16.msra.mxu0 0
    %3226 = vmatprep.subr.bf16.mxu0 0
    %3227 = vmatpush1.bf16.msra.mxu0 0
    %3228 = vmatprep.subr.bf16.mxu0 0
    %3229 = vmatpush1.bf16.msra.mxu0 0
    %3230 = vmatprep.subr.bf16.mxu0 0
    %3231 = vmatpush1.bf16.msra.mxu0 0
    %3232 = vmatprep.subr.bf16.mxu0 0
    %3233 = vmatpush1.bf16.msra.mxu0 0
    %3234 = vmatprep.subr.bf16.mxu0 0
    %3235 = vmatpush1.bf16.msra.mxu0 0
    %3236 = vmatprep.subr.bf16.mxu0 0
    %3237 = vmatpush1.bf16.msra.mxu0 0
    %3238 = vmatprep.subr.bf16.mxu0 0
    %3239 = vmatpush1.bf16.msra.mxu0 0
    %3240 = vmatprep.mubr.bf16.mxu0 0
    %3241 = vmatmul.mubr.bf16.gmra.mrb[0].mxu0 %v2990
    %v3242 = vpop.f32.mrb[0].mxu0
    %v3243 = vadd.f32 %v3031, %v3242
    %v3244 = vpop.f32.mrb[0].mxu0
    %v3245 = vadd.f32 %v3035, %v3244
    %v3246 = vpop.f32.mrb[0].mxu0
    %v3247 = vadd.f32 %v3031, %v3246
    %v3248 = vpop.f32.mrb[0].mxu0
    %v3249 = vadd.f32 %v3035, %v3248
    %3250 = vmatprep.mubr.bf16.mxu0 0
    %3251 = vmatmul.mubr.bf16.gmra.mrb[0].mxu0 %v2991
    %v3252 = vpop.f32.mrb[0].mxu0
    %v3253 = vadd.f32 %v3031, %v3252
    %v3254 = vpop.f32.mrb[0].mxu0
    %v3255 = vadd.f32 %v3035, %v3254
    %v3256 = vpop.f32.mrb[0].mxu0
    %v3257 = vadd.f32 %v3031, %v3256
    %v3258 = vpop.f32.mrb[0].mxu0
    %v3259 = vadd.f32 %v3035, %v3258
    %3260 = vmatprep.mubr.bf16.mxu0 0
    %3261 = vmatmul.mubr.bf16.gmra.mrb[0].mxu0 %v2992
    %v3262 = vpop.f32.mrb[0].mxu0
    %v3263 = vadd.f32 %v3031, %v3262
    %v3264 = vpop.f32.mrb[0].mxu0
    %v3265 = vadd.f32 %v3035, %v3264
    %v3266 = vpop.f32.mrb[0].mxu0
    %v3267 = vadd.f32 %v3031, %v3266
    %v3268 = vpop.f32.mrb[0].mxu0
    %v3269 = vadd.f32 %v3035, %v3268
    %3270 = vmatprep.mubr.bf16.mxu0 0
    %3271 = vmatmul.mubr.bf16.gmra.mrb[0].mxu0 %v2993
    %v3272 = vpop.f32.mrb[0].mxu0
    %v3273 = vadd.f32 %v3031, %v3272
    %v3274 = vpop.f32.mrb[0].mxu0
    %v3275 = vadd.f32 %v3035, %v3274
    %v3276 = vpop.f32.mrb[0].mxu0
    %v3277 = vadd.f32 %v3031, %v3276
    %v3278 = vpop.f32.mrb[0].mxu0
    %v3279 = vadd.f32 %v3035, %v3278
    %3280 = vdwg.mxu0
    %3281 = vmatprep.subr.bf16.mxu0 %v3147
    %3282 = vmatpush1.bf16.msra.mxu0 %v3146
    %3283 = vmatprep.subr.bf16.mxu0 %v3151
    %3284 = vmatpush1.bf16.msra.mxu0 %v3150
    %3285 = vmatprep.subr.bf16.mxu0 %v3155
    %3286 = vmatpush1.bf16.msra.mxu0 %v3154
    %3287 = vmatprep.subr.bf16.mxu0 %v3159
    %3288 = vmatpush1.bf16.msra.mxu0 %v3158
    %3289 = vmatprep.subr.bf16.mxu0 %v3163
    %3290 = vmatpush1.bf16.msra.mxu0 %v3162
    %3291 = vmatprep.subr.bf16.mxu0 %v3167
    %3292 = vmatpush1.bf16.msra.mxu0 %v3166
    %3293 = vmatprep.subr.bf16.mxu0 %v3171
    %3294 = vmatpush1.bf16.msra.mxu0 %v3170
    %3295 = vmatprep.subr.bf16.mxu0 %v3175
    %3296 = vmatpush1.bf16.msra.mxu0 %v3174
    %3297 = vmatprep.subr.bf16.mxu0 0
    %3298 = vmatpush1.bf16.msra.mxu0 0
    %3299 = vmatprep.subr.bf16.mxu0 0
    %3300 = vmatpush1.bf16.msra.mxu0 0
    %3301 = vmatprep.subr.bf16.mxu0 0
    %3302 = vmatpush1.bf16.msra.mxu0 0
    %3303 = vmatprep.subr.bf16.mxu0 0
    %3304 = vmatpush1.bf16.msra.mxu0 0
    %3305 = vmatprep.subr.bf16.mxu0 0
    %3306 = vmatpush1.bf16.msra.mxu0 0
    %3307 = vmatprep.subr.bf16.mxu0 0
    %3308 = vmatpush1.bf16.msra.mxu0 0
    %3309 = vmatprep.subr.bf16.mxu0 0
    %3310 = vmatpush1.bf16.msra.mxu0 0
    %3311 = vmatprep.subr.bf16.mxu0 0
    %3312 = vmatpush1.bf16.msra.mxu0 0
    %3313 = vmatprep.mubr.bf16.mxu0 0
    %3314 = vmatmul.mubr.bf16.gmra.mrb[0].mxu0 %v2990
    %v3315 = vpop.f32.mrb[0].mxu0
    %v3316 = vadd.f32 %v3039, %v3315
    %v3317 = vpop.f32.mrb[0].mxu0
    %v3318 = vadd.f32 %v3043, %v3317
    %v3319 = vpop.f32.mrb[0].mxu0
    %v3320 = vadd.f32 %v3039, %v3319
    %v3321 = vpop.f32.mrb[0].mxu0
    %v3322 = vadd.f32 %v3043, %v3321
    %3323 = vmatprep.mubr.bf16.mxu0 0
    %3324 = vmatmul.mubr.bf16.gmra.mrb[0].mxu0 %v2991
    %v3325 = vpop.f32.mrb[0].mxu0
    %v3326 = vadd.f32 %v3039, %v3325
    %v3327 = vpop.f32.mrb[0].mxu0
    %v3328 = vadd.f32 %v3043, %v3327
    %v3329 = vpop.f32.mrb[0].mxu0
    %v3330 = vadd.f32 %v3039, %v3329
    %v3331 = vpop.f32.mrb[0].mxu0
    %v3332 = vadd.f32 %v3043, %v3331
    %3333 = vmatprep.mubr.bf16.mxu0 0
    %3334 = vmatmul.mubr.bf16.gmra.mrb[0].mxu0 %v2992
    %v3335 = vpop.f32.mrb[0].mxu0
    %v3336 = vadd.f32 %v3039, %v3335
    %v3337 = vpop.f32.mrb[0].mxu0
    %v3338 = vadd.f32 %v3043, %v3337
    %v3339 = vpop.f32.mrb[0].mxu0
    %v3340 = vadd.f32 %v3039, %v3339
    %v3341 = vpop.f32.mrb[0].mxu0
    %v3342 = vadd.f32 %v3043, %v3341
    %3343 = vmatprep.mubr.bf16.mxu0 0
    %3344 = vmatmul.mubr.bf16.gmra.mrb[0].mxu0 %v2993
    %v3345 = vpop.f32.mrb[0].mxu0
    %v3346 = vadd.f32 %v3039, %v3345
    %v3347 = vpop.f32.mrb[0].mxu0
    %v3348 = vadd.f32 %v3043, %v3347
    %v3349 = vpop.f32.mrb[0].mxu0
    %v3350 = vadd.f32 %v3039, %v3349
    %v3351 = vpop.f32.mrb[0].mxu0
    %v3352 = vadd.f32 %v3043, %v3351
    %3353 = vdwg.mxu0
    %3354 = vst [vmem:[#allocation2] sm:$0xff] %v3243
    %3355 = vst [vmem:[#allocation2 + $0x8] sm:$0xff] %v3245
    %3356 = vst [vmem:[#allocation2 + $0x10] sm:$0xff] %v3316
    %3357 = vst [vmem:[#allocation2 + $0x18] sm:$0xff] %v3318
    %3358 = vst [vmem:[#allocation2 + $0x20] sm:$0xff] %v3247
    %3359 = vst [vmem:[#allocation2 + $0x28] sm:$0xff] %v3249
    %3360 = vst [vmem:[#allocation2 + $0x30] sm:$0xff] %v3320
    %3361 = vst [vmem:[#allocation2 + $0x38] sm:$0xff] %v3322
    %3362 = vst [vmem:[#allocation2 + $0x40] sm:$0xff] %v3253
    %3363 = vst [vmem:[#allocation2 + $0x48] sm:$0xff] %v3255
    %3364 = vst [vmem:[#allocation2 + $0x50] sm:$0xff] %v3326
    %3365 = vst [vmem:[#allocation2 + $0x58] sm:$0xff] %v3328
    %3366 = vst [vmem:[#allocation2 + $0x60] sm:$0xff] %v3257
    %3367 = vst [vmem:[#allocation2 + $0x68] sm:$0xff] %v3259
    %3368 = vst [vmem:[#allocation2 + $0x70] sm:$0xff] %v3330
    %3369 = vst [vmem:[#allocation2 + $0x78] sm:$0xff] %v3332
    %3370 = vst [vmem:[#allocation2 + $0x80] sm:$0xff] %v3263
    %3371 = vst [vmem:[#allocation2 + $0x88] sm:$0xff] %v3265
    %3372 = vst [vmem:[#allocation2 + $0x90] sm:$0xff] %v3336
    %3373 = vst [vmem:[#allocation2 + $0x98] sm:$0xff] %v3338
    %3374 = vst [vmem:[#allocation2 + $0xa0] sm:$0xff] %v3267
    %3375 = vst [vmem:[#allocation2 + $0xa8] sm:$0xff] %v3269
    %3376 = vst [vmem:[#allocation2 + $0xb0] sm:$0xff] %v3340
    %3377 = vst [vmem:[#allocation2 + $0xb8] sm:$0xff] %v3342
    %3378 = vst [vmem:[#allocation2 + $0xc0] sm:$0xff] %v3273
    %3379 = vst [vmem:[#allocation2 + $0xc8] sm:$0xff] %v3275
    %3380 = vst [vmem:[#allocation2 + $0xd0] sm:$0xff] %v3346
    %3381 = vst [vmem:[#allocation2 + $0xd8] sm:$0xff] %v3348
    %3382 = vst [vmem:[#allocation2 + $0xe0] sm:$0xff] %v3277
    %3383 = vst [vmem:[#allocation2 + $0xe8] sm:$0xff] %v3279
    %3384 = vst [vmem:[#allocation2 + $0xf0] sm:$0xff] %v3350
    %3385 = vst [vmem:[#allocation2 + $0xf8] sm:$0xff] %v3352
    %v3386 = vld [vmem:[#allocation2] sm:$0xff]
    %v3387 = vld [vmem:[#allocation2 + $0x8] sm:$0xff]
    %v3388 = vld [vmem:[#allocation2 + $0x10] sm:$0xff]
    %v3389 = vld [vmem:[#allocation2 + $0x18] sm:$0xff]
    %v3390 = vld [vmem:[#allocation9] sm:$0xff]
    %v3391 = vld [vmem:[#allocation9 + $0x8] sm:$0xff]
    %v3392 = vld [vmem:[#allocation9 + $0x10] sm:$0xff]
    %v3393 = vld [vmem:[#allocation9 + $0x18] sm:$0xff]
    %v3394 = vld [vmem:[#allocation9 + $0x20] sm:$0xff]
    %v3395 = vld [vmem:[#allocation9 + $0x28] sm:$0xff]
    %v3396 = vld [vmem:[#allocation9 + $0x30] sm:$0xff]
    %v3397 = vld [vmem:[#allocation9 + $0x38] sm:$0xff]
    %v3398 = vld [vmem:[#allocation9 + $0x40] sm:$0xff]
    %v3399 = vld [vmem:[#allocation9 + $0x48] sm:$0xff]
    %v3400 = vld [vmem:[#allocation9 + $0x50] sm:$0xff]
    %v3401 = vld [vmem:[#allocation9 + $0x58] sm:$0xff]
    %v3402 = vld [vmem:[#allocation9 + $0x60] sm:$0xff]
    %v3403 = vld [vmem:[#allocation9 + $0x68] sm:$0xff]
    %v3404 = vld [vmem:[#allocation9 + $0x70] sm:$0xff]
    %v3405 = vld [vmem:[#allocation9 + $0x78] sm:$0xff]
    %v3406 = vld [vmem:[#allocation9 + $0x80] sm:$0xff]
    %v3407 = vld [vmem:[#allocation9 + $0x88] sm:$0xff]
    %v3408 = vld [vmem:[#allocation9 + $0x90] sm:$0xff]
    %v3409 = vld [vmem:[#allocation9 + $0x98] sm:$0xff]
    %v3410 = vld [vmem:[#allocation9 + $0xa0] sm:$0xff]
    %v3411 = vld [vmem:[#allocation9 + $0xa8] sm:$0xff]
    %v3412 = vld [vmem:[#allocation9 + $0xb0] sm:$0xff]
    %v3413 = vld [vmem:[#allocation9 + $0xb8] sm:$0xff]
    %v3414 = vld [vmem:[#allocation9 + $0xc0] sm:$0xff]
    %v3415 = vld [vmem:[#allocation9 + $0xc8] sm:$0xff]
    %v3416 = vld [vmem:[#allocation9 + $0xd0] sm:$0xff]
    %v3417 = vld [vmem:[#allocation9 + $0xd8] sm:$0xff]
    %v3418 = vld [vmem:[#allocation9 + $0xe0] sm:$0xff]
    %v3419 = vld [vmem:[#allocation9 + $0xe8] sm:$0xff]
    %v3420 = vld [vmem:[#allocation9 + $0xf0] sm:$0xff]
    %v3421 = vld [vmem:[#allocation9 + $0xf8] sm:$0xff]
    %v3454 = vunpack.c.l.b16 %v3390
    %v3455 = vunpack.c.h.b16 %v3390
    %v3456 = vunpack.c.l.b16 %v3391
    %v3457 = vunpack.c.h.b16 %v3391
    %v3458 = vunpack.c.l.b16 %v3392
    %v3459 = vunpack.c.h.b16 %v3392
    %v3460 = vunpack.c.l.b16 %v3393
    %v3461 = vunpack.c.h.b16 %v3393
    %v3462 = vunpack.c.l.b16 %v3394
    %v3463 = vunpack.c.h.b16 %v3394
    %v3464 = vunpack.c.l.b16 %v3395
    %v3465 = vunpack.c.h.b16 %v3395
    %v3466 = vunpack.c.l.b16 %v3396
    %v3467 = vunpack.c.h.b16 %v3396
    %v3468 = vunpack.c.l.b16 %v3397
    %v3469 = vunpack.c.h.b16 %v3397
    %v3470 = vunpack.c.l.b16 %v3398
    %v3471 = vunpack.c.h.b16 %v3398
    %v3472 = vunpack.c.l.b16 %v3399
    %v3473 = vunpack.c.h.b16 %v3399
    %v3474 = vunpack.c.l.b16 %v3400
    %v3475 = vunpack.c.h.b16 %v3400
    %v3476 = vunpack.c.l.b16 %v3401
    %v3477 = vunpack.c.h.b16 %v3401
    %v3478 = vunpack.c.l.b16 %v3402
    %v3479 = vunpack.c.h.b16 %v3402
    %v3480 = vunpack.c.l.b16 %v3403
    %v3481 = vunpack.c.h.b16 %v3403
    %v3482 = vunpack.c.l.b16 %v3404
    %v3483 = vunpack.c.h.b16 %v3404
    %v3484 = vunpack.c.l.b16 %v3405
    %v3485 = vunpack.c.h.b16 %v3405
    %v3486 = vunpack.c.l.b16 %v3406
    %v3487 = vunpack.c.h.b16 %v3406
    %v3488 = vunpack.c.l.b16 %v3407
    %v3489 = vunpack.c.h.b16 %v3407
    %v3490 = vunpack.c.l.b16 %v3408
    %v3491 = vunpack.c.h.b16 %v3408
    %v3492 = vunpack.c.l.b16 %v3409
    %v3493 = vunpack.c.h.b16 %v3409
    %v3494 = vunpack.c.l.b16 %v3410
    %v3495 = vunpack.c.h.b16 %v3410
    %v3496 = vunpack.c.l.b16 %v3411
    %v3497 = vunpack.c.h.b16 %v3411
    %v3498 = vunpack.c.l.b16 %v3412
    %v3499 = vunpack.c.h.b16 %v3412
    %v3500 = vunpack.c.l.b16 %v3413
    %v3501 = vunpack.c.h.b16 %v3413
    %v3502 = vunpack.c.l.b16 %v3414
    %v3503 = vunpack.c.h.b16 %v3414
    %v3504 = vunpack.c.l.b16 %v3415
    %v3505 = vunpack.c.h.b16 %v3415
    %v3506 = vunpack.c.l.b16 %v3416
    %v3507 = vunpack.c.h.b16 %v3416
    %v3508 = vunpack.c.l.b16 %v3417
    %v3509 = vunpack.c.h.b16 %v3417
    %v3510 = vunpack.c.l.b16 %v3418
    %v3511 = vunpack.c.h.b16 %v3418
    %v3512 = vunpack.c.l.b16 %v3419
    %v3513 = vunpack.c.h.b16 %v3419
    %v3514 = vunpack.c.l.b16 %v3420
    %v3515 = vunpack.c.h.b16 %v3420
    %v3516 = vunpack.c.l.b16 %v3421
    %v3517 = vunpack.c.h.b16 %v3421
    %v3518 = vpack.c.b16 %v3458, %v3454
    %v3519 = vpack.c.b16 %v3459, %v3455
    %v3520 = vpack.c.b16 %v3460, %v3456
    %v3521 = vpack.c.b16 %v3461, %v3457
    %v3522 = vpack.c.b16 %v3466, %v3462
    %v3523 = vpack.c.b16 %v3467, %v3463
    %v3524 = vpack.c.b16 %v3468, %v3464
    %v3525 = vpack.c.b16 %v3469, %v3465
    %v3526 = vpack.c.b16 %v3474, %v3470
    %v3527 = vpack.c.b16 %v3475, %v3471
    %v3528 = vpack.c.b16 %v3476, %v3472
    %v3529 = vpack.c.b16 %v3477, %v3473
    %v3530 = vpack.c.b16 %v3482, %v3478
    %v3531 = vpack.c.b16 %v3483, %v3479
    %v3532 = vpack.c.b16 %v3484, %v3480
    %v3533 = vpack.c.b16 %v3485, %v3481
    %v3534 = vpack.c.b16 %v3490, %v3486
    %v3535 = vpack.c.b16 %v3491, %v3487
    %v3536 = vpack.c.b16 %v3492, %v3488
    %v3537 = vpack.c.b16 %v3493, %v3489
    %v3538 = vpack.c.b16 %v3498, %v3494
    %v3539 = vpack.c.b16 %v3499, %v3495
    %v3540 = vpack.c.b16 %v3500, %v3496
    %v3541 = vpack.c.b16 %v3501, %v3497
    %v3542 = vpack.c.b16 %v3506, %v3502
    %v3543 = vpack.c.b16 %v3507, %v3503
    %v3544 = vpack.c.b16 %v3508, %v3504
    %v3545 = vpack.c.b16 %v3509, %v3505
    %v3546 = vpack.c.b16 %v3514, %v3510
    %v3547 = vpack.c.b16 %v3515, %v3511
    %v3548 = vpack.c.b16 %v3516, %v3512
    %v3549 = vpack.c.b16 %v3517, %v3513
    %3582 = vmatprep.subr.bf16.mxu0 %v3519
    %3583 = vmatpush1.bf16.msra.mxu0 %v3518
    %3584 = vmatprep.subr.bf16.mxu0 %v3523
    %3585 = vmatpush1.bf16.msra.mxu0 %v3522
    %3586 = vmatprep.subr.bf16.mxu0 %v3527
    %3587 = vmatpush1.bf16.msra.mxu0 %v3526
    %3588 = vmatprep.subr.bf16.mxu0 %v3531
    %3589 = vmatpush1.bf16.msra.mxu0 %v3530
    %3590 = vmatprep.subr.bf16.mxu0 %v3535
    %3591 = vmatpush1.bf16.msra.mxu0 %v3534
    %3592 = vmatprep.subr.bf16.mxu0 %v3539
    %3593 = vmatpush1.bf16.msra.mxu0 %v3538
    %3594 = vmatprep.subr.bf16.mxu0 %v3543
    %3595 = vmatpush1.bf16.msra.mxu0 %v3542
    %3596 = vmatprep.subr.bf16.mxu0 %v3547
    %3597 = vmatpush1.bf16.msra.mxu0 %v3546
    %3598 = vmatprep.subr.bf16.mxu0 0
    %3599 = vmatpush1.bf16.msra.mxu0 0
    %3600 = vmatprep.subr.bf16.mxu0 0
    %3601 = vmatpush1.bf16.msra.mxu0 0
    %3602 = vmatprep.subr.bf16.mxu0 0
    %3603 = vmatpush1.bf16.msra.mxu0 0
    %3604 = vmatprep.subr.bf16.mxu0 0
    %3605 = vmatpush1.bf16.msra.mxu0 0
    %3606 = vmatprep.subr.bf16.mxu0 0
    %3607 = vmatpush1.bf16.msra.mxu0 0
    %3608 = vmatprep.subr.bf16.mxu0 0
    %3609 = vmatpush1.bf16.msra.mxu0 0
    %3610 = vmatprep.subr.bf16.mxu0 0
    %3611 = vmatpush1.bf16.msra.mxu0 0
    %3612 = vmatprep.subr.bf16.mxu0 0
    %3613 = vmatpush1.bf16.msra.mxu0 0
    %3614 = vmatprep.mubr.bf16.mxu0 0
    %3615 = vmatmul.mubr.bf16.gmra.mrb[0].mxu0 0
    %v3616 = vpop.f32.mrb[0].mxu0
    %v3617 = vadd.f32 0.0, %v3616
    %v3618 = vpop.f32.mrb[0].mxu0
    %v3619 = vadd.f32 0.0, %v3618
    %v3620 = vpop.f32.mrb[0].mxu0
    %v3621 = vpop.f32.mrb[0].mxu0
    %3622 = vdwg.mxu0
    %3623 = vmatprep.subr.bf16.mxu0 %v3521
    %3624 = vmatpush1.bf16.msra.mxu0 %v3520
    %3625 = vmatprep.subr.bf16.mxu0 %v3525
    %3626 = vmatpush1.bf16.msra.mxu0 %v3524
    %3627 = vmatprep.subr.bf16.mxu0 %v3529
    %3628 = vmatpush1.bf16.msra.mxu0 %v3528
    %3629 = vmatprep.subr.bf16.mxu0 %v3533
    %3630 = vmatpush1.bf16.msra.mxu0 %v3532
    %3631 = vmatprep.subr.bf16.mxu0 %v3537
    %3632 = vmatpush1.bf16.msra.mxu0 %v3536
    %3633 = vmatprep.subr.bf16.mxu0 %v3541
    %3634 = vmatpush1.bf16.msra.mxu0 %v3540
    %3635 = vmatprep.subr.bf16.mxu0 %v3545
    %3636 = vmatpush1.bf16.msra.mxu0 %v3544
    %3637 = vmatprep.subr.bf16.mxu0 %v3549
    %3638 = vmatpush1.bf16.msra.mxu0 %v3548
    %3639 = vmatprep.subr.bf16.mxu0 0
    %3640 = vmatpush1.bf16.msra.mxu0 0
    %3641 = vmatprep.subr.bf16.mxu0 0
    %3642 = vmatpush1.bf16.msra.mxu0 0
    %3643 = vmatprep.subr.bf16.mxu0 0
    %3644 = vmatpush1.bf16.msra.mxu0 0
    %3645 = vmatprep.subr.bf16.mxu0 0
    %3646 = vmatpush1.bf16.msra.mxu0 0
    %3647 = vmatprep.subr.bf16.mxu0 0
    %3648 = vmatpush1.bf16.msra.mxu0 0
    %3649 = vmatprep.subr.bf16.mxu0 0
    %3650 = vmatpush1.bf16.msra.mxu0 0
    %3651 = vmatprep.subr.bf16.mxu0 0
    %3652 = vmatpush1.bf16.msra.mxu0 0
    %3653 = vmatprep.subr.bf16.mxu0 0
    %3654 = vmatpush1.bf16.msra.mxu0 0
    %3655 = vmatprep.mubr.bf16.mxu0 0
    %3656 = vmatmul.mubr.bf16.gmra.mrb[0].mxu0 0
    %v3657 = vpop.f32.mrb[0].mxu0
    %v3658 = vadd.f32 0.0, %v3657
    %v3659 = vpop.f32.mrb[0].mxu0
    %v3660 = vadd.f32 0.0, %v3659
    %v3661 = vpop.f32.mrb[0].mxu0
    %v3662 = vpop.f32.mrb[0].mxu0
    %3663 = vdwg.mxu0
    %v3664 = vadd.f32 %v3386, %v3617
    %v3665 = vadd.f32 %v3387, %v3619
    %v3666 = vadd.f32 %v3388, %v3658
    %v3667 = vadd.f32 %v3389, %v3660
    %v3668 = vxor.u32 %v3664, 2147483648
    %v3669 = vmul.f32 %v3668, 1.442695
    %v3670 = vpow.pop %v3669
    %v3671 = vadd.f32 %v3670, 1.0
    %v3672 = vrcp.pop %v3671
    %v3673 = vmul.f32 1.0, %v3672
    %v3674 = vxor.u32 %v3665, 2147483648
    %v3675 = vmul.f32 %v3674, 1.442695
    %v3676 = vpow.pop %v3675
    %v3677 = vadd.f32 %v3676, 1.0
    %v3678 = vrcp.pop %v3677
    %v3679 = vmul.f32 1.0, %v3678
    %v3680 = vtanh.pop %v3666
    %v3681 = vxor.u32 %v3667, 2147483648
    %v3682 = vmul.f32 %v3681, 1.442695
    %v3683 = vpow.pop %v3682
    %v3684 = vadd.f32 %v3683, 1.0
    %v3685 = vrcp.pop %v3684
    %v3686 = vmul.f32 1.0, %v3685
    %v3687 = vmul.f32 %v3679, 0.0
    %v3688 = vmul.f32 %v3673, %v3680
    %v3689 = vadd.f32 %v3687, %v3688
    %v3690 = vtanh.pop %v3689
    %v3691 = vmul.f32 %v3686, %v3690
    %v3692 = vld [vmem:[%s812] sm:$0xff]
    %v3693 = vld [vmem:[%s812 + $0x8] sm:$0xff]
    %v3694 = vld [vmem:[%s812 + $0x10] sm:$0xff]
    %v3695 = vld [vmem:[%s812 + $0x18] sm:$0xff]
    %v3696 = vpack.c.bf16 %v3691, %v3691
    %3697 = vmatprep.subr.bf16.mxu0 %v3519
    %3698 = vmatpush1.bf16.msra.mxu0 %v3518
    %3699 = vmatprep.subr.bf16.mxu0 %v3523
    %3700 = vmatpush1.bf16.msra.mxu0 %v3522
    %3701 = vmatprep.subr.bf16.mxu0 %v3527
    %3702 = vmatpush1.bf16.msra.mxu0 %v3526
    %3703 = vmatprep.subr.bf16.mxu0 %v3531
    %3704 = vmatpush1.bf16.msra.mxu0 %v3530
    %3705 = vmatprep.subr.bf16.mxu0 %v3535
    %3706 = vmatpush1.bf16.msra.mxu0 %v3534
    %3707 = vmatprep.subr.bf16.mxu0 %v3539
    %3708 = vmatpush1.bf16.msra.mxu0 %v3538
    %3709 = vmatprep.subr.bf16.mxu0 %v3543
    %3710 = vmatpush1.bf16.msra.mxu0 %v3542
    %3711 = vmatprep.subr.bf16.mxu0 %v3547
    %3712 = vmatpush1.bf16.msra.mxu0 %v3546
    %3713 = vmatprep.subr.bf16.mxu0 0
    %3714 = vmatpush1.bf16.msra.mxu0 0
    %3715 = vmatprep.subr.bf16.mxu0 0
    %3716 = vmatpush1.bf16.msra.mxu0 0
    %3717 = vmatprep.subr.bf16.mxu0 0
    %3718 = vmatpush1.bf16.msra.mxu0 0
    %3719 = vmatprep.subr.bf16.mxu0 0
    %3720 = vmatpush1.bf16.msra.mxu0 0
    %3721 = vmatprep.subr.bf16.mxu0 0
    %3722 = vmatpush1.bf16.msra.mxu0 0
    %3723 = vmatprep.subr.bf16.mxu0 0
    %3724 = vmatpush1.bf16.msra.mxu0 0
    %3725 = vmatprep.subr.bf16.mxu0 0
    %3726 = vmatpush1.bf16.msra.mxu0 0
    %3727 = vmatprep.subr.bf16.mxu0 0
    %3728 = vmatpush1.bf16.msra.mxu0 0
    %3729 = vmatprep.mubr.bf16.mxu0 0
    %3730 = vmatmul.mubr.bf16.gmra.mrb[0].mxu0 %v3696
    %v3731 = vpop.f32.mrb[0].mxu0
    %v3732 = vadd.f32 0.0, %v3731
    %v3733 = vpop.f32.mrb[0].mxu0
    %v3734 = vadd.f32 0.0, %v3733
    %v3735 = vpop.f32.mrb[0].mxu0
    %v3736 = vpop.f32.mrb[0].mxu0
    %3737 = vdwg.mxu0
    %3738 = vmatprep.subr.bf16.mxu0 %v3521
    %3739 = vmatpush1.bf16.msra.mxu0 %v3520
    %3740 = vmatprep.subr.bf16.mxu0 %v3525
    %3741 = vmatpush1.bf16.msra.mxu0 %v3524
    %3742 = vmatprep.subr.bf16.mxu0 %v3529
    %3743 = vmatpush1.bf16.msra.mxu0 %v3528
    %3744 = vmatprep.subr.bf16.mxu0 %v3533
    %3745 = vmatpush1.bf16.msra.mxu0 %v3532
    %3746 = vmatprep.subr.bf16.mxu0 %v3537
    %3747 = vmatpush1.bf16.msra.mxu0 %v3536
    %3748 = vmatprep.subr.bf16.mxu0 %v3541
    %3749 = vmatpush1.bf16.msra.mxu0 %v3540
    %3750 = vmatprep.subr.bf16.mxu0 %v3545
    %3751 = vmatpush1.bf16.msra.mxu0 %v3544
    %3752 = vmatprep.subr.bf16.mxu0 %v3549
    %3753 = vmatpush1.bf16.msra.mxu0 %v3548
    %3754 = vmatprep.subr.bf16.mxu0 0
    %3755 = vmatpush1.bf16.msra.mxu0 0
    %3756 = vmatprep.subr.bf16.mxu0 0
    %3757 = vmatpush1.bf16.msra.mxu0 0
    %3758 = vmatprep.subr.bf16.mxu0 0
    %3759 = vmatpush1.bf16.msra.mxu0 0
    %3760 = vmatprep.subr.bf16.mxu0 0
    %3761 = vmatpush1.bf16.msra.mxu0 0
    %3762 = vmatprep.subr.bf16.mxu0 0
    %3763 = vmatpush1.bf16.msra.mxu0 0
    %3764 = vmatprep.subr.bf16.mxu0 0
    %3765 = vmatpush1.bf16.msra.mxu0 0
    %3766 = vmatprep.subr.bf16.mxu0 0
    %3767 = vmatpush1.bf16.msra.mxu0 0
    %3768 = vmatprep.subr.bf16.mxu0 0
    %3769 = vmatpush1.bf16.msra.mxu0 0
    %3770 = vmatprep.mubr.bf16.mxu0 0
    %3771 = vmatmul.mubr.bf16.gmra.mrb[0].mxu0 %v3696
    %v3772 = vpop.f32.mrb[0].mxu0
    %v3773 = vadd.f32 0.0, %v3772
    %v3774 = vpop.f32.mrb[0].mxu0
    %v3775 = vadd.f32 0.0, %v3774
    %v3776 = vpop.f32.mrb[0].mxu0
    %v3777 = vpop.f32.mrb[0].mxu0
    %3778 = vdwg.mxu0
    %v3779 = vadd.f32 %v3692, %v3732
    %v3780 = vadd.f32 %v3693, %v3734
    %v3781 = vadd.f32 %v3694, %v3773
    %v3782 = vadd.f32 %v3695, %v3775
    %v3783 = vxor.u32 %v3779, 2147483648
    %v3784 = vmul.f32 %v3783, 1.442695
    %v3785 = vpow.pop %v3784
    %v3786 = vadd.f32 %v3785, 1.0
    %v3787 = vrcp.pop %v3786
    %v3788 = vmul.f32 1.0, %v3787
    %v3789 = vxor.u32 %v3780, 2147483648
    %v3790 = vmul.f32 %v3789, 1.442695
    %v3791 = vpow.pop %v3790
    %v3792 = vadd.f32 %v3791, 1.0
    %v3793 = vrcp.pop %v3792
    %v3794 = vmul.f32 1.0, %v3793
    %v3795 = vtanh.pop %v3781
    %v3796 = vxor.u32 %v3782, 2147483648
    %v3797 = vmul.f32 %v3796, 1.442695
    %v3798 = vpow.pop %v3797
    %v3799 = vadd.f32 %v3798, 1.0
    %v3800 = vrcp.pop %v3799
    %v3801 = vmul.f32 1.0, %v3800
    %v3802 = vmul.f32 %v3794, %v3689
    %v3803 = vmul.f32 %v3788, %v3795
    %v3804 = vadd.f32 %v3802, %v3803
    %v3805 = vtanh.pop %v3804
    %v3806 = vmul.f32 %v3801, %v3805
    %v3807 = vld [vmem:[%s1122] sm:$0xff]
    %v3808 = vld [vmem:[%s1122 + $0x8] sm:$0xff]
    %v3809 = vld [vmem:[%s1122 + $0x10] sm:$0xff]
    %v3810 = vld [vmem:[%s1122 + $0x18] sm:$0xff]
    %v3811 = vpack.c.bf16 %v3806, %v3806
    %3812 = vmatprep.subr.bf16.mxu0 %v3519
    %3813 = vmatpush1.bf16.msra.mxu0 %v3518
    %3814 = vmatprep.subr.bf16.mxu0 %v3523
    %3815 = vmatpush1.bf16.msra.mxu0 %v3522
    %3816 = vmatprep.subr.bf16.mxu0 %v3527
    %3817 = vmatpush1.bf16.msra.mxu0 %v3526
    %3818 = vmatprep.subr.bf16.mxu0 %v3531
    %3819 = vmatpush1.bf16.msra.mxu0 %v3530
    %3820 = vmatprep.subr.bf16.mxu0 %v3535
    %3821 = vmatpush1.bf16.msra.mxu0 %v3534
    %3822 = vmatprep.subr.bf16.mxu0 %v3539
    %3823 = vmatpush1.bf16.msra.mxu0 %v3538
    %3824 = vmatprep.subr.bf16.mxu0 %v3543
    %3825 = vmatpush1.bf16.msra.mxu0 %v3542
    %3826 = vmatprep.subr.bf16.mxu0 %v3547
    %3827 = vmatpush1.bf16.msra.mxu0 %v3546
    %3828 = vmatprep.subr.bf16.mxu0 0
    %3829 = vmatpush1.bf16.msra.mxu0 0
    %3830 = vmatprep.subr.bf16.mxu0 0
    %3831 = vmatpush1.bf16.msra.mxu0 0
    %3832 = vmatprep.subr.bf16.mxu0 0
    %3833 = vmatpush1.bf16.msra.mxu0 0
    %3834 = vmatprep.subr.bf16.mxu0 0
    %3835 = vmatpush1.bf16.msra.mxu0 0
    %3836 = vmatprep.subr.bf16.mxu0 0
    %3837 = vmatpush1.bf16.msra.mxu0 0
    %3838 = vmatprep.subr.bf16.mxu0 0
    %3839 = vmatpush1.bf16.msra.mxu0 0
    %3840 = vmatprep.subr.bf16.mxu0 0
    %3841 = vmatpush1.bf16.msra.mxu0 0
    %3842 = vmatprep.subr.bf16.mxu0 0
    %3843 = vmatpush1.bf16.msra.mxu0 0
    %3844 = vmatprep.mubr.bf16.mxu0 0
    %3845 = vmatmul.mubr.bf16.gmra.mrb[0].mxu0 %v3811
    %v3846 = vpop.f32.mrb[0].mxu0
    %v3847 = vadd.f32 0.0, %v3846
    %v3848 = vpop.f32.mrb[0].mxu0
    %v3849 = vadd.f32 0.0, %v3848
    %v3850 = vpop.f32.mrb[0].mxu0
    %v3851 = vpop.f32.mrb[0].mxu0
    %3852 = vdwg.mxu0
    %3853 = vmatprep.subr.bf16.mxu0 %v3521
    %3854 = vmatpush1.bf16.msra.mxu0 %v3520
    %3855 = vmatprep.subr.bf16.mxu0 %v3525
    %3856 = vmatpush1.bf16.msra.mxu0 %v3524
    %3857 = vmatprep.subr.bf16.mxu0 %v3529
    %3858 = vmatpush1.bf16.msra.mxu0 %v3528
    %3859 = vmatprep.subr.bf16.mxu0 %v3533
    %3860 = vmatpush1.bf16.msra.mxu0 %v3532
    %3861 = vmatprep.subr.bf16.mxu0 %v3537
    %3862 = vmatpush1.bf16.msra.mxu0 %v3536
    %3863 = vmatprep.subr.bf16.mxu0 %v3541
    %3864 = vmatpush1.bf16.msra.mxu0 %v3540
    %3865 = vmatprep.subr.bf16.mxu0 %v3545
    %3866 = vmatpush1.bf16.msra.mxu0 %v3544
    %3867 = vmatprep.subr.bf16.mxu0 %v3549
    %3868 = vmatpush1.bf16.msra.mxu0 %v3548
    %3869 = vmatprep.subr.bf16.mxu0 0
    %3870 = vmatpush1.bf16.msra.mxu0 0
    %3871 = vmatprep.subr.bf16.mxu0 0
    %3872 = vmatpush1.bf16.msra.mxu0 0
    %3873 = vmatprep.subr.bf16.mxu0 0
    %3874 = vmatpush1.bf16.msra.mxu0 0
    %3875 = vmatprep.subr.bf16.mxu0 0
    %3876 = vmatpush1.bf16.msra.mxu0 0
    %3877 = vmatprep.subr.bf16.mxu0 0
    %3878 = vmatpush1.bf16.msra.mxu0 0
    %3879 = vmatprep.subr.bf16.mxu0 0
    %3880 = vmatpush1.bf16.msra.mxu0 0
    %3881 = vmatprep.subr.bf16.mxu0 0
    %3882 = vmatpush1.bf16.msra.mxu0 0
    %3883 = vmatprep.subr.bf16.mxu0 0
    %3884 = vmatpush1.bf16.msra.mxu0 0
    %3885 = vmatprep.mubr.bf16.mxu0 0
    %3886 = vmatmul.mubr.bf16.gmra.mrb[0].mxu0 %v3811
    %v3887 = vpop.f32.mrb[0].mxu0
    %v3888 = vadd.f32 0.0, %v3887
    %v3889 = vpop.f32.mrb[0].mxu0
    %v3890 = vadd.f32 0.0, %v3889
    %v3891 = vpop.f32.mrb[0].mxu0
    %v3892 = vpop.f32.mrb[0].mxu0
    %3893 = vdwg.mxu0
    %v3894 = vadd.f32 %v3807, %v3847
    %v3895 = vadd.f32 %v3808, %v3849
    %v3896 = vadd.f32 %v3809, %v3888
    %v3897 = vadd.f32 %v3810, %v3890
    %v3898 = vxor.u32 %v3894, 2147483648
    %v3899 = vmul.f32 %v3898, 1.442695
    %v3900 = vpow.pop %v3899
    %v3901 = vadd.f32 %v3900, 1.0
    %v3902 = vrcp.pop %v3901
    %v3903 = vmul.f32 1.0, %v3902
    %v3904 = vxor.u32 %v3895, 2147483648
    %v3905 = vmul.f32 %v3904, 1.442695
    %v3906 = vpow.pop %v3905
    %v3907 = vadd.f32 %v3906, 1.0
    %v3908 = vrcp.pop %v3907
    %v3909 = vmul.f32 1.0, %v3908
    %v3910 = vtanh.pop %v3896
    %v3911 = vxor.u32 %v3897, 2147483648
    %v3912 = vmul.f32 %v3911, 1.442695
    %v3913 = vpow.pop %v3912
    %v3914 = vadd.f32 %v3913, 1.0
    %v3915 = vrcp.pop %v3914
    %v3916 = vmul.f32 1.0, %v3915
    %v3917 = vmul.f32 %v3909, %v3804
    %v3918 = vmul.f32 %v3903, %v3910
    %v3919 = vadd.f32 %v3917, %v3918
    %v3920 = vtanh.pop %v3919
    %v3921 = vmul.f32 %v3916, %v3920
    %v3922 = vld [vmem:[%s1432] sm:$0xff]
    %v3923 = vld [vmem:[%s1432 + $0x8] sm:$0xff]
    %v3924 = vld [vmem:[%s1432 + $0x10] sm:$0xff]
    %v3925 = vld [vmem:[%s1432 + $0x18] sm:$0xff]
    %v3926 = vpack.c.bf16 %v3921, %v3921
    %3927 = vmatprep.subr.bf16.mxu0 %v3519
    %3928 = vmatpush1.bf16.msra.mxu0 %v3518
    %3929 = vmatprep.subr.bf16.mxu0 %v3523
    %3930 = vmatpush1.bf16.msra.mxu0 %v3522
    %3931 = vmatprep.subr.bf16.mxu0 %v3527
    %3932 = vmatpush1.bf16.msra.mxu0 %v3526
    %3933 = vmatprep.subr.bf16.mxu0 %v3531
    %3934 = vmatpush1.bf16.msra.mxu0 %v3530
    %3935 = vmatprep.subr.bf16.mxu0 %v3535
    %3936 = vmatpush1.bf16.msra.mxu0 %v3534
    %3937 = vmatprep.subr.bf16.mxu0 %v3539
    %3938 = vmatpush1.bf16.msra.mxu0 %v3538
    %3939 = vmatprep.subr.bf16.mxu0 %v3543
    %3940 = vmatpush1.bf16.msra.mxu0 %v3542
    %3941 = vmatprep.subr.bf16.mxu0 %v3547
    %3942 = vmatpush1.bf16.msra.mxu0 %v3546
    %3943 = vmatprep.subr.bf16.mxu0 0
    %3944 = vmatpush1.bf16.msra.mxu0 0
    %3945 = vmatprep.subr.bf16.mxu0 0
    %3946 = vmatpush1.bf16.msra.mxu0 0
    %3947 = vmatprep.subr.bf16.mxu0 0
    %3948 = vmatpush1.bf16.msra.mxu0 0
    %3949 = vmatprep.subr.bf16.mxu0 0
    %3950 = vmatpush1.bf16.msra.mxu0 0
    %3951 = vmatprep.subr.bf16.mxu0 0
    %3952 = vmatpush1.bf16.msra.mxu0 0
    %3953 = vmatprep.subr.bf16.mxu0 0
    %3954 = vmatpush1.bf16.msra.mxu0 0
    %3955 = vmatprep.subr.bf16.mxu0 0
    %3956 = vmatpush1.bf16.msra.mxu0 0
    %3957 = vmatprep.subr.bf16.mxu0 0
    %3958 = vmatpush1.bf16.msra.mxu0 0
    %3959 = vmatprep.mubr.bf16.mxu0 0
    %3960 = vmatmul.mubr.bf16.gmra.mrb[0].mxu0 %v3926
    %v3961 = vpop.f32.mrb[0].mxu0
    %v3962 = vadd.f32 0.0, %v3961
    %v3963 = vpop.f32.mrb[0].mxu0
    %v3964 = vadd.f32 0.0, %v3963
    %v3965 = vpop.f32.mrb[0].mxu0
    %v3966 = vpop.f32.mrb[0].mxu0
    %3967 = vdwg.mxu0
    %3968 = vmatprep.subr.bf16.mxu0 %v3521
    %3969 = vmatpush1.bf16.msra.mxu0 %v3520
    %3970 = vmatprep.subr.bf16.mxu0 %v3525
    %3971 = vmatpush1.bf16.msra.mxu0 %v3524
    %3972 = vmatprep.subr.bf16.mxu0 %v3529
    %3973 = vmatpush1.bf16.msra.mxu0 %v3528
    %3974 = vmatprep.subr.bf16.mxu0 %v3533
    %3975 = vmatpush1.bf16.msra.mxu0 %v3532
    %3976 = vmatprep.subr.bf16.mxu0 %v3537
    %3977 = vmatpush1.bf16.msra.mxu0 %v3536
    %3978 = vmatprep.subr.bf16.mxu0 %v3541
    %3979 = vmatpush1.bf16.msra.mxu0 %v3540
    %3980 = vmatprep.subr.bf16.mxu0 %v3545
    %3981 = vmatpush1.bf16.msra.mxu0 %v3544
    %3982 = vmatprep.subr.bf16.mxu0 %v3549
    %3983 = vmatpush1.bf16.msra.mxu0 %v3548
    %3984 = vmatprep.subr.bf16.mxu0 0
    %3985 = vmatpush1.bf16.msra.mxu0 0
    %3986 = vmatprep.subr.bf16.mxu0 0
    %3987 = vmatpush1.bf16.msra.mxu0 0
    %3988 = vmatprep.subr.bf16.mxu0 0
    %3989 = vmatpush1.bf16.msra.mxu0 0
    %3990 = vmatprep.subr.bf16.mxu0 0
    %3991 = vmatpush1.bf16.msra.mxu0 0
    %3992 = vmatprep.subr.bf16.mxu0 0
    %3993 = vmatpush1.bf16.msra.mxu0 0
    %3994 = vmatprep.subr.bf16.mxu0 0
    %3995 = vmatpush1.bf16.msra.mxu0 0
    %3996 = vmatprep.subr.bf16.mxu0 0
    %3997 = vmatpush1.bf16.msra.mxu0 0
    %3998 = vmatprep.subr.bf16.mxu0 0
    %3999 = vmatpush1.bf16.msra.mxu0 0
    %4000 = vmatprep.mubr.bf16.mxu0 0
    %4001 = vmatmul.mubr.bf16.gmra.mrb[0].mxu0 %v3926
    %v4002 = vpop.f32.mrb[0].mxu0
    %v4003 = vadd.f32 0.0, %v4002
    %v4004 = vpop.f32.mrb[0].mxu0
    %v4005 = vadd.f32 0.0, %v4004
    %v4006 = vpop.f32.mrb[0].mxu0
    %v4007 = vpop.f32.mrb[0].mxu0
    %4008 = vdwg.mxu0
    %v4009 = vadd.f32 %v3922, %v3962
    %v4010 = vadd.f32 %v3923, %v3964
    %v4011 = vadd.f32 %v3924, %v4003
    %v4012 = vadd.f32 %v3925, %v4005
    %v4013 = vxor.u32 %v4009, 2147483648
    %v4014 = vmul.f32 %v4013, 1.442695
    %v4015 = vpow.pop %v4014
    %v4016 = vadd.f32 %v4015, 1.0
    %v4017 = vrcp.pop %v4016
    %v4018 = vmul.f32 1.0, %v4017
    %v4019 = vxor.u32 %v4010, 2147483648
    %v4020 = vmul.f32 %v4019, 1.442695
    %v4021 = vpow.pop %v4020
    %v4022 = vadd.f32 %v4021, 1.0
    %v4023 = vrcp.pop %v4022
    %v4024 = vmul.f32 1.0, %v4023
    %v4025 = vtanh.pop %v4011
    %v4026 = vxor.u32 %v4012, 2147483648
    %v4027 = vmul.f32 %v4026, 1.442695
    %v4028 = vpow.pop %v4027
    %v4029 = vadd.f32 %v4028, 1.0
    %v4030 = vrcp.pop %v4029
    %v4031 = vmul.f32 1.0, %v4030
    %v4032 = vmul.f32 %v4024, %v3919
    %v4033 = vmul.f32 %v4018, %v4025
    %v4034 = vadd.f32 %v4032, %v4033
    %v4035 = vtanh.pop %v4034
    %v4036 = vmul.f32 %v4031, %v4035
    %v4037 = vld [vmem:[%s1742] sm:$0xff]
    %v4038 = vld [vmem:[%s1742 + $0x8] sm:$0xff]
    %v4039 = vld [vmem:[%s1742 + $0x10] sm:$0xff]
    %v4040 = vld [vmem:[%s1742 + $0x18] sm:$0xff]
    %v4041 = vpack.c.bf16 %v4036, %v4036
    %4042 = vmatprep.subr.bf16.mxu0 %v3519
    %4043 = vmatpush1.bf16.msra.mxu0 %v3518
    %4044 = vmatprep.subr.bf16.mxu0 %v3523
    %4045 = vmatpush1.bf16.msra.mxu0 %v3522
    %4046 = vmatprep.subr.bf16.mxu0 %v3527
    %4047 = vmatpush1.bf16.msra.mxu0 %v3526
    %4048 = vmatprep.subr.bf16.mxu0 %v3531
    %4049 = vmatpush1.bf16.msra.mxu0 %v3530
    %4050 = vmatprep.subr.bf16.mxu0 %v3535
    %4051 = vmatpush1.bf16.msra.mxu0 %v3534
    %4052 = vmatprep.subr.bf16.mxu0 %v3539
    %4053 = vmatpush1.bf16.msra.mxu0 %v3538
    %4054 = vmatprep.subr.bf16.mxu0 %v3543
    %4055 = vmatpush1.bf16.msra.mxu0 %v3542
    %4056 = vmatprep.subr.bf16.mxu0 %v3547
    %4057 = vmatpush1.bf16.msra.mxu0 %v3546
    %4058 = vmatprep.subr.bf16.mxu0 0
    %4059 = vmatpush1.bf16.msra.mxu0 0
    %4060 = vmatprep.subr.bf16.mxu0 0
    %4061 = vmatpush1.bf16.msra.mxu0 0
    %4062 = vmatprep.subr.bf16.mxu0 0
    %4063 = vmatpush1.bf16.msra.mxu0 0
    %4064 = vmatprep.subr.bf16.mxu0 0
    %4065 = vmatpush1.bf16.msra.mxu0 0
    %4066 = vmatprep.subr.bf16.mxu0 0
    %4067 = vmatpush1.bf16.msra.mxu0 0
    %4068 = vmatprep.subr.bf16.mxu0 0
    %4069 = vmatpush1.bf16.msra.mxu0 0
    %4070 = vmatprep.subr.bf16.mxu0 0
    %4071 = vmatpush1.bf16.msra.mxu0 0
    %4072 = vmatprep.subr.bf16.mxu0 0
    %4073 = vmatpush1.bf16.msra.mxu0 0
    %4074 = vmatprep.mubr.bf16.mxu0 0
    %4075 = vmatmul.mubr.bf16.gmra.mrb[0].mxu0 %v4041
    %v4076 = vpop.f32.mrb[0].mxu0
    %v4077 = vadd.f32 0.0, %v4076
    %v4078 = vpop.f32.mrb[0].mxu0
    %v4079 = vadd.f32 0.0, %v4078
    %v4080 = vpop.f32.mrb[0].mxu0
    %v4081 = vpop.f32.mrb[0].mxu0
    %4082 = vdwg.mxu0
    %4083 = vmatprep.subr.bf16.mxu0 %v3521
    %4084 = vmatpush1.bf16.msra.mxu0 %v3520
    %4085 = vmatprep.subr.bf16.mxu0 %v3525
    %4086 = vmatpush1.bf16.msra.mxu0 %v3524
    %4087 = vmatprep.subr.bf16.mxu0 %v3529
    %4088 = vmatpush1.bf16.msra.mxu0 %v3528
    %4089 = vmatprep.subr.bf16.mxu0 %v3533
    %4090 = vmatpush1.bf16.msra.mxu0 %v3532
    %4091 = vmatprep.subr.bf16.mxu0 %v3537
    %4092 = vmatpush1.bf16.msra.mxu0 %v3536
    %4093 = vmatprep.subr.bf16.mxu0 %v3541
    %4094 = vmatpush1.bf16.msra.mxu0 %v3540
    %4095 = vmatprep.subr.bf16.mxu0 %v3545
    %4096 = vmatpush1.bf16.msra.mxu0 %v3544
    %4097 = vmatprep.subr.bf16.mxu0 %v3549
    %4098 = vmatpush1.bf16.msra.mxu0 %v3548
    %4099 = vmatprep.subr.bf16.mxu0 0
    %4100 = vmatpush1.bf16.msra.mxu0 0
    %4101 = vmatprep.subr.bf16.mxu0 0
    %4102 = vmatpush1.bf16.msra.mxu0 0
    %4103 = vmatprep.subr.bf16.mxu0 0
    %4104 = vmatpush1.bf16.msra.mxu0 0
    %4105 = vmatprep.subr.bf16.mxu0 0
    %4106 = vmatpush1.bf16.msra.mxu0 0
    %4107 = vmatprep.subr.bf16.mxu0 0
    %4108 = vmatpush1.bf16.msra.mxu0 0
    %4109 = vmatprep.subr.bf16.mxu0 0
    %4110 = vmatpush1.bf16.msra.mxu0 0
    %4111 = vmatprep.subr.bf16.mxu0 0
    %4112 = vmatpush1.bf16.msra.mxu0 0
    %4113 = vmatprep.subr.bf16.mxu0 0
    %4114 = vmatpush1.bf16.msra.mxu0 0
    %4115 = vmatprep.mubr.bf16.mxu0 0
    %4116 = vmatmul.mubr.bf16.gmra.mrb[0].mxu0 %v4041
    %v4117 = vpop.f32.mrb[0].mxu0
    %v4118 = vadd.f32 0.0, %v4117
    %v4119 = vpop.f32.mrb[0].mxu0
    %v4120 = vadd.f32 0.0, %v4119
    %v4121 = vpop.f32.mrb[0].mxu0
    %v4122 = vpop.f32.mrb[0].mxu0
    %4123 = vdwg.mxu0
    %v4124 = vadd.f32 %v4037, %v4077
    %v4125 = vadd.f32 %v4038, %v4079
    %v4126 = vadd.f32 %v4039, %v4118
    %v4127 = vadd.f32 %v4040, %v4120
    %v4128 = vxor.u32 %v4124, 2147483648
    %v4129 = vmul.f32 %v4128, 1.442695
    %v4130 = vpow.pop %v4129
    %v4131 = vadd.f32 %v4130, 1.0
    %v4132 = vrcp.pop %v4131
    %v4133 = vmul.f32 1.0, %v4132
    %v4134 = vxor.u32 %v4125, 2147483648
    %v4135 = vmul.f32 %v4134, 1.442695
    %v4136 = vpow.pop %v4135
    %v4137 = vadd.f32 %v4136, 1.0
    %v4138 = vrcp.pop %v4137
    %v4139 = vmul.f32 1.0, %v4138
    %v4140 = vtanh.pop %v4126
    %v4141 = vxor.u32 %v4127, 2147483648
    %v4142 = vmul.f32 %v4141, 1.442695
    %v4143 = vpow.pop %v4142
    %v4144 = vadd.f32 %v4143, 1.0
    %v4145 = vrcp.pop %v4144
    %v4146 = vmul.f32 1.0, %v4145
    %v4147 = vmul.f32 %v4139, %v4034
    %v4148 = vmul.f32 %v4133, %v4140
    %v4149 = vadd.f32 %v4147, %v4148
    %v4150 = vtanh.pop %v4149
    %v4151 = vmul.f32 %v4146, %v4150
    %v4152 = vld [vmem:[%s2052] sm:$0xff]
    %v4153 = vld [vmem:[%s2052 + $0x8] sm:$0xff]
    %v4154 = vld [vmem:[%s2052 + $0x10] sm:$0xff]
    %v4155 = vld [vmem:[%s2052 + $0x18] sm:$0xff]
    %v4156 = vpack.c.bf16 %v4151, %v4151
    %4157 = vmatprep.subr.bf16.mxu0 %v3519
    %4158 = vmatpush1.bf16.msra.mxu0 %v3518
    %4159 = vmatprep.subr.bf16.mxu0 %v3523
    %4160 = vmatpush1.bf16.msra.mxu0 %v3522
    %4161 = vmatprep.subr.bf16.mxu0 %v3527
    %4162 = vmatpush1.bf16.msra.mxu0 %v3526
    %4163 = vmatprep.subr.bf16.mxu0 %v3531
    %4164 = vmatpush1.bf16.msra.mxu0 %v3530
    %4165 = vmatprep.subr.bf16.mxu0 %v3535
    %4166 = vmatpush1.bf16.msra.mxu0 %v3534
    %4167 = vmatprep.subr.bf16.mxu0 %v3539
    %4168 = vmatpush1.bf16.msra.mxu0 %v3538
    %4169 = vmatprep.subr.bf16.mxu0 %v3543
    %4170 = vmatpush1.bf16.msra.mxu0 %v3542
    %4171 = vmatprep.subr.bf16.mxu0 %v3547
    %4172 = vmatpush1.bf16.msra.mxu0 %v3546
    %4173 = vmatprep.subr.bf16.mxu0 0
    %4174 = vmatpush1.bf16.msra.mxu0 0
    %4175 = vmatprep.subr.bf16.mxu0 0
    %4176 = vmatpush1.bf16.msra.mxu0 0
    %4177 = vmatprep.subr.bf16.mxu0 0
    %4178 = vmatpush1.bf16.msra.mxu0 0
    %4179 = vmatprep.subr.bf16.mxu0 0
    %4180 = vmatpush1.bf16.msra.mxu0 0
    %4181 = vmatprep.subr.bf16.mxu0 0
    %4182 = vmatpush1.bf16.msra.mxu0 0
    %4183 = vmatprep.subr.bf16.mxu0 0
    %4184 = vmatpush1.bf16.msra.mxu0 0
    %4185 = vmatprep.subr.bf16.mxu0 0
    %4186 = vmatpush1.bf16.msra.mxu0 0
    %4187 = vmatprep.subr.bf16.mxu0 0
    %4188 = vmatpush1.bf16.msra.mxu0 0
    %4189 = vmatprep.mubr.bf16.mxu0 0
    %4190 = vmatmul.mubr.bf16.gmra.mrb[0].mxu0 %v4156
    %v4191 = vpop.f32.mrb[0].mxu0
    %v4192 = vadd.f32 0.0, %v4191
    %v4193 = vpop.f32.mrb[0].mxu0
    %v4194 = vadd.f32 0.0, %v4193
    %v4195 = vpop.f32.mrb[0].mxu0
    %v4196 = vpop.f32.mrb[0].mxu0
    %4197 = vdwg.mxu0
    %4198 = vmatprep.subr.bf16.mxu0 %v3521
    %4199 = vmatpush1.bf16.msra.mxu0 %v3520
    %4200 = vmatprep.subr.bf16.mxu0 %v3525
    %4201 = vmatpush1.bf16.msra.mxu0 %v3524
    %4202 = vmatprep.subr.bf16.mxu0 %v3529
    %4203 = vmatpush1.bf16.msra.mxu0 %v3528
    %4204 = vmatprep.subr.bf16.mxu0 %v3533
    %4205 = vmatpush1.bf16.msra.mxu0 %v3532
    %4206 = vmatprep.subr.bf16.mxu0 %v3537
    %4207 = vmatpush1.bf16.msra.mxu0 %v3536
    %4208 = vmatprep.subr.bf16.mxu0 %v3541
    %4209 = vmatpush1.bf16.msra.mxu0 %v3540
    %4210 = vmatprep.subr.bf16.mxu0 %v3545
    %4211 = vmatpush1.bf16.msra.mxu0 %v3544
    %4212 = vmatprep.subr.bf16.mxu0 %v3549
    %4213 = vmatpush1.bf16.msra.mxu0 %v3548
    %4214 = vmatprep.subr.bf16.mxu0 0
    %4215 = vmatpush1.bf16.msra.mxu0 0
    %4216 = vmatprep.subr.bf16.mxu0 0
    %4217 = vmatpush1.bf16.msra.mxu0 0
    %4218 = vmatprep.subr.bf16.mxu0 0
    %4219 = vmatpush1.bf16.msra.mxu0 0
    %4220 = vmatprep.subr.bf16.mxu0 0
    %4221 = vmatpush1.bf16.msra.mxu0 0
    %4222 = vmatprep.subr.bf16.mxu0 0
    %4223 = vmatpush1.bf16.msra.mxu0 0
    %4224 = vmatprep.subr.bf16.mxu0 0
    %4225 = vmatpush1.bf16.msra.mxu0 0
    %4226 = vmatprep.subr.bf16.mxu0 0
    %4227 = vmatpush1.bf16.msra.mxu0 0
    %4228 = vmatprep.subr.bf16.mxu0 0
    %4229 = vmatpush1.bf16.msra.mxu0 0
    %4230 = vmatprep.mubr.bf16.mxu0 0
    %4231 = vmatmul.mubr.bf16.gmra.mrb[0].mxu0 %v4156
    %v4232 = vpop.f32.mrb[0].mxu0
    %v4233 = vadd.f32 0.0, %v4232
    %v4234 = vpop.f32.mrb[0].mxu0
    %v4235 = vadd.f32 0.0, %v4234
    %v4236 = vpop.f32.mrb[0].mxu0
    %v4237 = vpop.f32.mrb[0].mxu0
    %4238 = vdwg.mxu0
    %v4239 = vadd.f32 %v4152, %v4192
    %v4240 = vadd.f32 %v4153, %v4194
    %v4241 = vadd.f32 %v4154, %v4233
    %v4242 = vadd.f32 %v4155, %v4235
    %v4243 = vxor.u32 %v4239, 2147483648
    %v4244 = vmul.f32 %v4243, 1.442695
    %v4245 = vpow.pop %v4244
    %v4246 = vadd.f32 %v4245, 1.0
    %v4247 = vrcp.pop %v4246
    %v4248 = vmul.f32 1.0, %v4247
    %v4249 = vxor.u32 %v4240, 2147483648
    %v4250 = vmul.f32 %v4249, 1.442695
    %v4251 = vpow.pop %v4250
    %v4252 = vadd.f32 %v4251, 1.0
    %v4253 = vrcp.pop %v4252
    %v4254 = vmul.f32 1.0, %v4253
    %v4255 = vtanh.pop %v4241
    %v4256 = vxor.u32 %v4242, 2147483648
    %v4257 = vmul.f32 %v4256, 1.442695
    %v4258 = vpow.pop %v4257
    %v4259 = vadd.f32 %v4258, 1.0
    %v4260 = vrcp.pop %v4259
    %v4261 = vmul.f32 1.0, %v4260
    %v4262 = vmul.f32 %v4254, %v4149
    %v4263 = vmul.f32 %v4248, %v4255
    %v4264 = vadd.f32 %v4262, %v4263
    %v4265 = vtanh.pop %v4264
    %v4266 = vmul.f32 %v4261, %v4265
    %v4267 = vld [vmem:[%s2362] sm:$0xff]
    %v4268 = vld [vmem:[%s2362 + $0x8] sm:$0xff]
    %v4269 = vld [vmem:[%s2362 + $0x10] sm:$0xff]
    %v4270 = vld [vmem:[%s2362 + $0x18] sm:$0xff]
    %v4271 = vpack.c.bf16 %v4266, %v4266
    %4272 = vmatprep.subr.bf16.mxu0 %v3519
    %4273 = vmatpush1.bf16.msra.mxu0 %v3518
    %4274 = vmatprep.subr.bf16.mxu0 %v3523
    %4275 = vmatpush1.bf16.msra.mxu0 %v3522
    %4276 = vmatprep.subr.bf16.mxu0 %v3527
    %4277 = vmatpush1.bf16.msra.mxu0 %v3526
    %4278 = vmatprep.subr.bf16.mxu0 %v3531
    %4279 = vmatpush1.bf16.msra.mxu0 %v3530
    %4280 = vmatprep.subr.bf16.mxu0 %v3535
    %4281 = vmatpush1.bf16.msra.mxu0 %v3534
    %4282 = vmatprep.subr.bf16.mxu0 %v3539
    %4283 = vmatpush1.bf16.msra.mxu0 %v3538
    %4284 = vmatprep.subr.bf16.mxu0 %v3543
    %4285 = vmatpush1.bf16.msra.mxu0 %v3542
    %4286 = vmatprep.subr.bf16.mxu0 %v3547
    %4287 = vmatpush1.bf16.msra.mxu0 %v3546
    %4288 = vmatprep.subr.bf16.mxu0 0
    %4289 = vmatpush1.bf16.msra.mxu0 0
    %4290 = vmatprep.subr.bf16.mxu0 0
    %4291 = vmatpush1.bf16.msra.mxu0 0
    %4292 = vmatprep.subr.bf16.mxu0 0
    %4293 = vmatpush1.bf16.msra.mxu0 0
    %4294 = vmatprep.subr.bf16.mxu0 0
    %4295 = vmatpush1.bf16.msra.mxu0 0
    %4296 = vmatprep.subr.bf16.mxu0 0
    %4297 = vmatpush1.bf16.msra.mxu0 0
    %4298 = vmatprep.subr.bf16.mxu0 0
    %4299 = vmatpush1.bf16.msra.mxu0 0
    %4300 = vmatprep.subr.bf16.mxu0 0
    %4301 = vmatpush1.bf16.msra.mxu0 0
    %4302 = vmatprep.subr.bf16.mxu0 0
    %4303 = vmatpush1.bf16.msra.mxu0 0
    %4304 = vmatprep.mubr.bf16.mxu0 0
    %4305 = vmatmul.mubr.bf16.gmra.mrb[0].mxu0 %v4271
    %v4306 = vpop.f32.mrb[0].mxu0
    %v4307 = vadd.f32 0.0, %v4306
    %v4308 = vpop.f32.mrb[0].mxu0
    %v4309 = vadd.f32 0.0, %v4308
    %v4310 = vpop.f32.mrb[0].mxu0
    %v4311 = vpop.f32.mrb[0].mxu0
    %4312 = vdwg.mxu0
    %4313 = vmatprep.subr.bf16.mxu0 %v3521
    %4314 = vmatpush1.bf16.msra.mxu0 %v3520
    %4315 = vmatprep.subr.bf16.mxu0 %v3525
    %4316 = vmatpush1.bf16.msra.mxu0 %v3524
    %4317 = vmatprep.subr.bf16.mxu0 %v3529
    %4318 = vmatpush1.bf16.msra.mxu0 %v3528
    %4319 = vmatprep.subr.bf16.mxu0 %v3533
    %4320 = vmatpush1.bf16.msra.mxu0 %v3532
    %4321 = vmatprep.subr.bf16.mxu0 %v3537
    %4322 = vmatpush1.bf16.msra.mxu0 %v3536
    %4323 = vmatprep.subr.bf16.mxu0 %v3541
    %4324 = vmatpush1.bf16.msra.mxu0 %v3540
    %4325 = vmatprep.subr.bf16.mxu0 %v3545
    %4326 = vmatpush1.bf16.msra.mxu0 %v3544
    %4327 = vmatprep.subr.bf16.mxu0 %v3549
    %4328 = vmatpush1.bf16.msra.mxu0 %v3548
    %4329 = vmatprep.subr.bf16.mxu0 0
    %4330 = vmatpush1.bf16.msra.mxu0 0
    %4331 = vmatprep.subr.bf16.mxu0 0
    %4332 = vmatpush1.bf16.msra.mxu0 0
    %4333 = vmatprep.subr.bf16.mxu0 0
    %4334 = vmatpush1.bf16.msra.mxu0 0
    %4335 = vmatprep.subr.bf16.mxu0 0
    %4336 = vmatpush1.bf16.msra.mxu0 0
    %4337 = vmatprep.subr.bf16.mxu0 0
    %4338 = vmatpush1.bf16.msra.mxu0 0
    %4339 = vmatprep.subr.bf16.mxu0 0
    %4340 = vmatpush1.bf16.msra.mxu0 0
    %4341 = vmatprep.subr.bf16.mxu0 0
    %4342 = vmatpush1.bf16.msra.mxu0 0
    %4343 = vmatprep.subr.bf16.mxu0 0
    %4344 = vmatpush1.bf16.msra.mxu0 0
    %4345 = vmatprep.mubr.bf16.mxu0 0
    %4346 = vmatmul.mubr.bf16.gmra.mrb[0].mxu0 %v4271
    %v4347 = vpop.f32.mrb[0].mxu0
    %v4348 = vadd.f32 0.0, %v4347
    %v4349 = vpop.f32.mrb[0].mxu0
    %v4350 = vadd.f32 0.0, %v4349
    %v4351 = vpop.f32.mrb[0].mxu0
    %v4352 = vpop.f32.mrb[0].mxu0
    %4353 = vdwg.mxu0
    %v4354 = vadd.f32 %v4267, %v4307
    %v4355 = vadd.f32 %v4268, %v4309
    %v4356 = vadd.f32 %v4269, %v4348
    %v4357 = vadd.f32 %v4270, %v4350
    %v4358 = vxor.u32 %v4354, 2147483648
    %v4359 = vmul.f32 %v4358, 1.442695
    %v4360 = vpow.pop %v4359
    %v4361 = vadd.f32 %v4360, 1.0
    %v4362 = vrcp.pop %v4361
    %v4363 = vmul.f32 1.0, %v4362
    %v4364 = vxor.u32 %v4355, 2147483648
    %v4365 = vmul.f32 %v4364, 1.442695
    %v4366 = vpow.pop %v4365
    %v4367 = vadd.f32 %v4366, 1.0
    %v4368 = vrcp.pop %v4367
    %v4369 = vmul.f32 1.0, %v4368
    %v4370 = vtanh.pop %v4356
    %v4371 = vxor.u32 %v4357, 2147483648
    %v4372 = vmul.f32 %v4371, 1.442695
    %v4373 = vpow.pop %v4372
    %v4374 = vadd.f32 %v4373, 1.0
    %v4375 = vrcp.pop %v4374
    %v4376 = vmul.f32 1.0, %v4375
    %v4377 = vmul.f32 %v4369, %v4264
    %v4378 = vmul.f32 %v4363, %v4370
    %v4379 = vadd.f32 %v4377, %v4378
    %v4380 = vtanh.pop %v4379
    %v4381 = vmul.f32 %v4376, %v4380
    %v4382 = vld [vmem:[%s2672] sm:$0xff]
    %v4383 = vld [vmem:[%s2672 + $0x8] sm:$0xff]
    %v4384 = vld [vmem:[%s2672 + $0x10] sm:$0xff]
    %v4385 = vld [vmem:[%s2672 + $0x18] sm:$0xff]
    %v4386 = vpack.c.bf16 %v4381, %v4381
    %4387 = vmatprep.subr.bf16.mxu0 %v3519
    %4388 = vmatpush1.bf16.msra.mxu0 %v3518
    %4389 = vmatprep.subr.bf16.mxu0 %v3523
    %4390 = vmatpush1.bf16.msra.mxu0 %v3522
    %4391 = vmatprep.subr.bf16.mxu0 %v3527
    %4392 = vmatpush1.bf16.msra.mxu0 %v3526
    %4393 = vmatprep.subr.bf16.mxu0 %v3531
    %4394 = vmatpush1.bf16.msra.mxu0 %v3530
    %4395 = vmatprep.subr.bf16.mxu0 %v3535
    %4396 = vmatpush1.bf16.msra.mxu0 %v3534
    %4397 = vmatprep.subr.bf16.mxu0 %v3539
    %4398 = vmatpush1.bf16.msra.mxu0 %v3538
    %4399 = vmatprep.subr.bf16.mxu0 %v3543
    %4400 = vmatpush1.bf16.msra.mxu0 %v3542
    %4401 = vmatprep.subr.bf16.mxu0 %v3547
    %4402 = vmatpush1.bf16.msra.mxu0 %v3546
    %4403 = vmatprep.subr.bf16.mxu0 0
    %4404 = vmatpush1.bf16.msra.mxu0 0
    %4405 = vmatprep.subr.bf16.mxu0 0
    %4406 = vmatpush1.bf16.msra.mxu0 0
    %4407 = vmatprep.subr.bf16.mxu0 0
    %4408 = vmatpush1.bf16.msra.mxu0 0
    %4409 = vmatprep.subr.bf16.mxu0 0
    %4410 = vmatpush1.bf16.msra.mxu0 0
    %4411 = vmatprep.subr.bf16.mxu0 0
    %4412 = vmatpush1.bf16.msra.mxu0 0
    %4413 = vmatprep.subr.bf16.mxu0 0
    %4414 = vmatpush1.bf16.msra.mxu0 0
    %4415 = vmatprep.subr.bf16.mxu0 0
    %4416 = vmatpush1.bf16.msra.mxu0 0
    %4417 = vmatprep.subr.bf16.mxu0 0
    %4418 = vmatpush1.bf16.msra.mxu0 0
    %4419 = vmatprep.mubr.bf16.mxu0 0
    %4420 = vmatmul.mubr.bf16.gmra.mrb[0].mxu0 %v4386
    %v4421 = vpop.f32.mrb[0].mxu0
    %v4422 = vadd.f32 0.0, %v4421
    %v4423 = vpop.f32.mrb[0].mxu0
    %v4424 = vadd.f32 0.0, %v4423
    %v4425 = vpop.f32.mrb[0].mxu0
    %v4426 = vpop.f32.mrb[0].mxu0
    %4427 = vdwg.mxu0
    %4428 = vmatprep.subr.bf16.mxu0 %v3521
    %4429 = vmatpush1.bf16.msra.mxu0 %v3520
    %4430 = vmatprep.subr.bf16.mxu0 %v3525
    %4431 = vmatpush1.bf16.msra.mxu0 %v3524
    %4432 = vmatprep.subr.bf16.mxu0 %v3529
    %4433 = vmatpush1.bf16.msra.mxu0 %v3528
    %4434 = vmatprep.subr.bf16.mxu0 %v3533
    %4435 = vmatpush1.bf16.msra.mxu0 %v3532
    %4436 = vmatprep.subr.bf16.mxu0 %v3537
    %4437 = vmatpush1.bf16.msra.mxu0 %v3536
    %4438 = vmatprep.subr.bf16.mxu0 %v3541
    %4439 = vmatpush1.bf16.msra.mxu0 %v3540
    %4440 = vmatprep.subr.bf16.mxu0 %v3545
    %4441 = vmatpush1.bf16.msra.mxu0 %v3544
    %4442 = vmatprep.subr.bf16.mxu0 %v3549
    %4443 = vmatpush1.bf16.msra.mxu0 %v3548
    %4444 = vmatprep.subr.bf16.mxu0 0
    %4445 = vmatpush1.bf16.msra.mxu0 0
    %4446 = vmatprep.subr.bf16.mxu0 0
    %4447 = vmatpush1.bf16.msra.mxu0 0
    %4448 = vmatprep.subr.bf16.mxu0 0
    %4449 = vmatpush1.bf16.msra.mxu0 0
    %4450 = vmatprep.subr.bf16.mxu0 0
    %4451 = vmatpush1.bf16.msra.mxu0 0
    %4452 = vmatprep.subr.bf16.mxu0 0
    %4453 = vmatpush1.bf16.msra.mxu0 0
    %4454 = vmatprep.subr.bf16.mxu0 0
    %4455 = vmatpush1.bf16.msra.mxu0 0
    %4456 = vmatprep.subr.bf16.mxu0 0
    %4457 = vmatpush1.bf16.msra.mxu0 0
    %4458 = vmatprep.subr.bf16.mxu0 0
    %4459 = vmatpush1.bf16.msra.mxu0 0
    %4460 = vmatprep.mubr.bf16.mxu0 0
    %4461 = vmatmul.mubr.bf16.gmra.mrb[0].mxu0 %v4386
    %v4462 = vpop.f32.mrb[0].mxu0
    %v4463 = vadd.f32 0.0, %v4462
    %v4464 = vpop.f32.mrb[0].mxu0
    %v4465 = vadd.f32 0.0, %v4464
    %v4466 = vpop.f32.mrb[0].mxu0
    %v4467 = vpop.f32.mrb[0].mxu0
    %4468 = vdwg.mxu0
    %v4469 = vadd.f32 %v4382, %v4422
    %v4470 = vadd.f32 %v4383, %v4424
    %v4471 = vadd.f32 %v4384, %v4463
    %v4472 = vadd.f32 %v4385, %v4465
    %v4473 = vxor.u32 %v4469, 2147483648
    %v4474 = vmul.f32 %v4473, 1.442695
    %v4475 = vpow.pop %v4474
    %v4476 = vadd.f32 %v4475, 1.0
    %v4477 = vrcp.pop %v4476
    %v4478 = vmul.f32 1.0, %v4477
    %v4479 = vxor.u32 %v4470, 2147483648
    %v4480 = vmul.f32 %v4479, 1.442695
    %v4481 = vpow.pop %v4480
    %v4482 = vadd.f32 %v4481, 1.0
    %v4483 = vrcp.pop %v4482
    %v4484 = vmul.f32 1.0, %v4483
    %v4485 = vtanh.pop %v4471
    %v4486 = vxor.u32 %v4472, 2147483648
    %v4487 = vmul.f32 %v4486, 1.442695
    %v4488 = vpow.pop %v4487
    %v4489 = vadd.f32 %v4488, 1.0
    %v4490 = vrcp.pop %v4489
    %v4491 = vmul.f32 1.0, %v4490
    %v4492 = vmul.f32 %v4484, %v4379
    %v4493 = vmul.f32 %v4478, %v4485
    %v4494 = vadd.f32 %v4492, %v4493
    %v4495 = vtanh.pop %v4494
    %v4496 = vmul.f32 %v4491, %v4495
    %v4497 = vld [vmem:[#allocation11] sm:$0xff]
    %v4498 = vld [vmem:[#allocation11 + $0x8] sm:$0xff]
    %v4499 = vld [vmem:[#allocation11 + $0x10] sm:$0xff]
    %v4500 = vld [vmem:[#allocation11 + $0x18] sm:$0xff]
    %v4501 = vld [vmem:[#allocation11 + $0x20] sm:$0xff]
    %v4502 = vld [vmem:[#allocation11 + $0x28] sm:$0xff]
    %v4503 = vld [vmem:[#allocation11 + $0x30] sm:$0xff]
    %v4504 = vld [vmem:[#allocation11 + $0x38] sm:$0xff]
    %v4505 = vld [vmem:[#allocation11 + $0x40] sm:$0xff]
    %v4506 = vld [vmem:[#allocation11 + $0x48] sm:$0xff]
    %v4507 = vld [vmem:[#allocation11 + $0x50] sm:$0xff]
    %v4508 = vld [vmem:[#allocation11 + $0x58] sm:$0xff]
    %v4509 = vld [vmem:[#allocation11 + $0x60] sm:$0xff]
    %v4510 = vld [vmem:[#allocation11 + $0x68] sm:$0xff]
    %v4511 = vld [vmem:[#allocation11 + $0x70] sm:$0xff]
    %v4512 = vld [vmem:[#allocation11 + $0x78] sm:$0xff]
    %v4513 = vld [vmem:[%s8] sm:$0x1]
    %v4515 = vlaneseq
    %v4516 = vshrl.u32 %v4515, 7
    %v4517 = vsub.s32 0, %v4516
    %v4518 = vrot.slane %v4513, %v4517
    %4520 = vmatprep.subr.mxu0 0.0
    %4521 = vmatpush1.msra.mxu0 %v4497
    %4522 = vmatprep.subr.mxu0 0.0
    %4523 = vmatpush1.msra.mxu0 %v4498
    %4524 = vmatprep.subr.mxu0 0.0
    %4525 = vmatpush1.msra.mxu0 %v4499
    %4526 = vmatprep.subr.mxu0 0.0
    %4527 = vmatpush1.msra.mxu0 %v4500
    %4528 = vmatprep.subr.mxu0 0.0
    %4529 = vmatpush1.msra.mxu0 %v4501
    %4530 = vmatprep.subr.mxu0 0.0
    %4531 = vmatpush1.msra.mxu0 %v4502
    %4532 = vmatprep.subr.mxu0 0.0
    %4533 = vmatpush1.msra.mxu0 %v4503
    %4534 = vmatprep.subr.mxu0 0.0
    %4535 = vmatpush1.msra.mxu0 %v4504
    %4536 = vmatprep.subr.mxu0 0.0
    %4537 = vmatpush1.msra.mxu0 %v4505
    %4538 = vmatprep.subr.mxu0 0.0
    %4539 = vmatpush1.msra.mxu0 %v4506
    %4540 = vmatprep.subr.mxu0 0.0
    %4541 = vmatpush1.msra.mxu0 %v4507
    %4542 = vmatprep.subr.mxu0 0.0
    %4543 = vmatpush1.msra.mxu0 %v4508
    %4544 = vmatprep.subr.mxu0 0.0
    %4545 = vmatpush1.msra.mxu0 %v4509
    %4546 = vmatprep.subr.mxu0 0.0
    %4547 = vmatpush1.msra.mxu0 %v4510
    %4548 = vmatprep.subr.mxu0 0.0
    %4549 = vmatpush1.msra.mxu0 %v4511
    %4550 = vmatprep.subr.mxu0 0.0
    %4551 = vmatpush1.msra.mxu0 %v4512
    %4552 = vmatprep.subr.mxu0 0.0
    %4553 = vmatpush1.msra.mxu0 0.0
    %4554 = vmatprep.subr.mxu0 0.0
    %4555 = vmatpush1.msra.mxu0 0.0
    %4556 = vmatprep.subr.mxu0 0.0
    %4557 = vmatpush1.msra.mxu0 0.0
    %4558 = vmatprep.subr.mxu0 0.0
    %4559 = vmatpush1.msra.mxu0 0.0
    %4560 = vmatprep.subr.mxu0 0.0
    %4561 = vmatpush1.msra.mxu0 0.0
    %4562 = vmatprep.subr.mxu0 0.0
    %4563 = vmatpush1.msra.mxu0 0.0
    %4564 = vmatprep.subr.mxu0 0.0
    %4565 = vmatpush1.msra.mxu0 0.0
    %4566 = vmatprep.subr.mxu0 0.0
    %4567 = vmatpush1.msra.mxu0 0.0
    %4568 = vmatprep.subr.mxu0 0.0
    %4569 = vmatpush1.msra.mxu0 0.0
    %4570 = vmatprep.subr.mxu0 0.0
    %4571 = vmatpush1.msra.mxu0 0.0
    %4572 = vmatprep.subr.mxu0 0.0
    %4573 = vmatpush1.msra.mxu0 0.0
    %4574 = vmatprep.subr.mxu0 0.0
    %4575 = vmatpush1.msra.mxu0 0.0
    %4576 = vmatprep.subr.mxu0 0.0
    %4577 = vmatpush1.msra.mxu0 0.0
    %4578 = vmatprep.subr.mxu0 0.0
    %4579 = vmatpush1.msra.mxu0 0.0
    %4580 = vmatprep.subr.mxu0 0.0
    %4581 = vmatpush1.msra.mxu0 0.0
    %4582 = vmatprep.subr.mxu0 0.0
    %4583 = vmatpush1.msra.mxu0 0.0
    %4584 = vmatprep.mubr.f32.mxu0 0.0
    %4585 = vmatmul.mubr.f32.gmra.mrb[0].mxu0 %v4496
    %v4586 = vpop.f32.mrb[0].mxu0
    %v4587 = vadd.f32 %v4518, %v4586
    %v4588 = vpop.f32.mrb[0].mxu0
    %4589 = vdwg.mxu0
    %4590 = vst [vmem:[%s9] sm:$0xff] %v4587
    // Predicated region
    $region58: #{lstm_model_forward.1} parent=1 // pred_check
      _
    $region59: #{lstm_model_forward.1} parent=1 // pred_check_branch
      %4592 = sbr.rel (0) target = $region61
    $region60: #{lstm_model_forward.1} parent=1 // pred_region
      _
    $region61: #{lstm_model_forward.1} parent=1 // pred_fallthru
      _
    // Predicated region
    $region62: #{lstm_model_forward.1} parent=1 // pred_check
      _
    $region63: #{lstm_model_forward.1} parent=1 // pred_check_branch
      %4594 = sbr.rel (0) target = $region65
    $region64: #{lstm_model_forward.1} parent=1 // pred_region
      _
    $region65: #{lstm_model_forward.1} parent=1 // pred_fallthru
      _
    %4595 = vsyncpa [#allocation5], 1
    %4596 = vsyncpa [#allocation7], 1
    %4597 = vsyncpa [#allocation10], 1

</llo_original>
